<compile_context>
chip_gen: v7x
topology: tpu7x:2x2x1
jax: 0.10.0
libtpu: 0.0.40
codegen_flags: <defaults>
</compile_context>

<pallas_src>
import math
import functools

import jax
import jax.numpy as jnp
import numpy as np
from jax import lax
from jax.experimental import pallas as pl
from jax.experimental.pallas import tpu as pltpu

EPS = 1e-5  # torch.nn.GroupNorm default eps


# ----------------------------------------------------------------------------
# Lane-group all-reduce (VPU/XLU only, no MXU)
# ----------------------------------------------------------------------------
def _lane_shift(v, shift):
    """result[..., i] = v[..., (i + shift) % L] with a static shift."""
    if shift == 0:
        return v
    return jnp.concatenate([v[..., shift:], v[..., :shift]], axis=-1)


def _group_allsum(v, cs):
    """Sum lanes within groups of `cs` consecutive lanes; every lane ends up
    holding its group's sum.  Butterfly; requires cs to be a power of two."""
    if cs == 1:
        return v
    n = v.shape[-1]
    lane = lax.broadcasted_iota(jnp.int32, v.shape, v.ndim - 1)
    step = 1
    while step < cs:
        fwd = _lane_shift(v, step)       # value from lane + step
        bwd = _lane_shift(v, n - step)   # value from lane - step
        take_fwd = (lane % (2 * step)) < step
        v = v + jnp.where(take_fwd, fwd, bwd)
        step *= 2
    return v


# ----------------------------------------------------------------------------
# Fused Pallas kernel: grid = (batch_blocks, num_conv + 1)
# ----------------------------------------------------------------------------
def _fcos_head_kernel(x_ref, wl_ref, bt_ref, gt_ref, bet_ref, scale_ref,
                      o_ref, abuf,
                      *, H, W, C, NC, NOUT, num_conv, cs, MB):
    C2 = 2 * C
    HW = H * W
    M = MB * HW
    j = pl.program_id(1)                       # layer index (last = head)

    # --- layer 0: zero the 1-px halo border, stage the duplicated [x|x] input
    @pl.when(j == 0)
    def _():
        zrow = jnp.zeros((MB, 1, W + 2, C2), abuf.dtype)
        abuf[:, 0:1, :, :] = zrow
        abuf[:, H + 1:H + 2, :, :] = zrow
        zcol = jnp.zeros((MB, H + 2, 1, C2), abuf.dtype)
        abuf[:, :, 0:1, :] = zcol
        abuf[:, :, W + 1:W + 2, :] = zcol
        x = x_ref[...]                                        # (MB, H, W, C) bf16
        abuf[:, 1:H + 1, 1:W + 1, :] = jnp.concatenate([x, x], axis=-1)

    # --- 3x3 conv: 9 accumulated MXU dots straight from the bf16 scratch -----
    acc = jnp.zeros((M, C2), jnp.float32)
    for dy in range(3):
        for dx in range(3):
            t = dy * 3 + dx
            tap = abuf[:, dy:dy + H, dx:dx + W, :].reshape(M, C2)
            acc = acc + jnp.dot(tap, wl_ref[t],
                                preferred_element_type=jnp.float32)
    acc = acc + bt_ref[...]                                   # (1, C2) bias

    # --- tower layers: GroupNorm (two-pass f32 stats, no MXU) + ReLU ---------
    @pl.when(j < num_conv)
    def _():
        acc3 = acc.reshape(MB, HW, C2)
        cnt = float(HW * cs)
        s1 = jnp.sum(acc3, axis=1)                            # (MB, C2)
        mean_c = _group_allsum(s1, cs) / cnt                  # group mean per channel
        cen = acc3 - mean_c[:, None, :]
        s2 = jnp.sum(cen * cen, axis=1)
        var_c = _group_allsum(s2, cs) / cnt
        scale_c = lax.rsqrt(var_c + EPS) * gt_ref[...]        # (MB, C2)
        y = jnp.maximum(cen * scale_c[:, None, :] + bet_ref[...], 0.0)
        abuf[:, 1:H + 1, 1:W + 1, :] = y.reshape(MB, H, W, C2).astype(abuf.dtype)

    # --- head layer: [cls | reg | ctn]; Scale + ReLU on reg columns only -----
    @pl.when(j == num_conv)
    def _():
        h = acc[:, :NOUT]                                     # (M, NOUT)
        cols = lax.broadcasted_iota(jnp.int32, h.shape, 1)
        is_reg = jnp.logical_and(cols >= NC, cols < NC + 4)
        h = jnp.where(is_reg, jnp.maximum(h * scale_ref[0], 0.0), h)
        h3 = h.reshape(MB, HW, NOUT)
        for b in range(MB):                                   # torch (C, H*W) layout
            o_ref[b] = jnp.transpose(h3[b])


# ----------------------------------------------------------------------------
# Wrapper: one pallas_call for the whole head.
# ----------------------------------------------------------------------------
def _pick_batch_block(B, HW, target_m=256, cap_m=4096):
    mb = 1
    for d in range(1, B + 1):
        if B % d == 0 and d * HW <= cap_m:
            mb = d
            if d * HW >= target_m:
                break
    return mb


def fcos_head_v3_forward(x_nchw, packed, *, num_classes, groups=32,
                         batch_block=None):
    # NCHW -> NHWC layout change + bf16 cast kept outside the kernel.
    # TODO(synk): if the producer already emits NHWC bf16, feed it in directly.
    x = jnp.transpose(x_nchw, (0, 2, 3, 1)).astype(jnp.bfloat16)
    B, H, W, C = x.shape
    C2 = 2 * C
    HW = H * W
    L = packed["wl"].shape[0]                 # num_conv + 1 (last = head)
    num_conv = L - 1
    NC = num_classes
    NOUT = NC + 5
    cs = C // groups
    assert C % groups == 0 and (cs & (cs - 1)) == 0, \
        "channels-per-group must be a power of two"

    MB = batch_block if batch_block is not None else _pick_batch_block(B, HW)
    assert B % MB == 0

    kern = functools.partial(_fcos_head_kernel, H=H, W=W, C=C, NC=NC,
                             NOUT=NOUT, num_conv=num_conv, cs=cs, MB=MB)

    return pl.pallas_call(
        kern,
        out_shape=jax.ShapeDtypeStruct((B, NOUT, HW), jnp.float32),
        grid=(B // MB, num_conv + 1),
        in_specs=[
            pl.BlockSpec((MB, H, W, C), lambda n, j: (n, 0, 0, 0)),      # x (bf16)
            pl.BlockSpec((None, 9, C2, C2), lambda n, j: (j, 0, 0, 0)),  # per-layer W
            pl.BlockSpec((None, 1, C2), lambda n, j: (j, 0, 0)),         # bias
            pl.BlockSpec((None, 1, C2), lambda n, j: (j, 0, 0)),         # GN gamma
            pl.BlockSpec((None, 1, C2), lambda n, j: (j, 0, 0)),         # GN beta
            pl.BlockSpec(memory_space=pltpu.MemorySpace.SMEM),           # scale
        ],
        out_specs=pl.BlockSpec((MB, NOUT, HW), lambda n, j: (n, 0, 0)),
        scratch_shapes=[
            pltpu.VMEM((MB, H + 2, W + 2, C2), jnp.bfloat16),  # padded activations
        ],
        compiler_params=pltpu.CompilerParams(
            dimension_semantics=("parallel", "arbitrary")),
    )(x, packed["wl"], packed["bt"], packed["gt"], packed["bet"],
      packed["scale"])


# ----------------------------------------------------------------------------
# Parameter construction (mirrors FcosHead_v3.__init__ / initweight)
# ----------------------------------------------------------------------------
def init_params(key, in_channel, num_classes, num_conv=4, groups=32,
                prior_prob=0.01):
    keys = jax.random.split(key, 2 * num_conv + 3)
    C = in_channel

    def conv_w(k, cin, cout):
        # torch.nn.init.normal_(weight, std=0.01), stored HWIO (3,3,Cin,Cout)
        return 0.01 * jax.random.normal(k, (3, 3, cin, cout), jnp.float32)

    params = {"cls": [], "reg": []}
    for j in range(num_conv):
        for name, k in (("cls", keys[2 * j]), ("reg", keys[2 * j + 1])):
            params[name].append(dict(
                w=conv_w(k, C, C),
                b=jnp.zeros((1, C), jnp.float32),
                gamma=jnp.ones((1, C), jnp.float32),
                beta=jnp.zeros((1, C), jnp.float32),
            ))
    params["cls_w"] = conv_w(keys[2 * num_conv], C, num_classes)
    params["cls_b"] = jnp.full((1, num_classes),
                               -math.log((1 - prior_prob) / prior_prob),
                               jnp.float32)
    params["reg_w"] = conv_w(keys[2 * num_conv + 1], C, 4)
    params["reg_b"] = jnp.zeros((1, 4), jnp.float32)
    params["ctn_w"] = conv_w(keys[2 * num_conv + 2], C, 1)
    params["ctn_b"] = jnp.zeros((1, 1), jnp.float32)
    params["scale"] = jnp.float32(1.0)                        # Scale(init_value=1.0)
    return params


def pack_params(params, in_channel, num_classes, num_conv=4, groups=32):
    """One-time repacking for the fused kernel (block-diag cls|reg, per-layer
    per-tap weights, head appended as a zero-padded extra layer)."""
    C = in_channel
    C2 = 2 * C
    NC = num_classes
    assert C % groups == 0
    cs = C // groups
    assert (cs & (cs - 1)) == 0
    # TODO(synk): non-power-of-two GN group sizes would need a one-hot-matmul
    #             fallback for the in-kernel group reduction.

    wl, bt, gt, bet = [], [], [], []
    for j in range(num_conv):
        pc, pr = params["cls"][j], params["reg"][j]
        w = jnp.zeros((3, 3, C2, C2), jnp.float32)
        w = w.at[:, :, :C, :C].set(pc["w"])
        w = w.at[:, :, C:, C:].set(pr["w"])
        wl.append(w.reshape(9, C2, C2))                       # tap-major
        bt.append(jnp.concatenate([pc["b"], pr["b"]], axis=1))
        gt.append(jnp.concatenate([pc["gamma"], pr["gamma"]], axis=1))
        bet.append(jnp.concatenate([pc["beta"], pr["beta"]], axis=1))

    # Head "layer": [cls(NC) | reg(4) | ctn(1)] output columns, zero-padded to C2.
    wh = jnp.zeros((3, 3, C2, C2), jnp.float32)
    wh = wh.at[:, :, :C, :NC].set(params["cls_w"])            # cls reads tcls half
    wh = wh.at[:, :, C:, NC:NC + 4].set(params["reg_w"])      # reg reads treg half
    wh = wh.at[:, :, C:, NC + 4:NC + 5].set(params["ctn_w"])  # ctn reads treg half
    wl.append(wh.reshape(9, C2, C2))
    bh = jnp.zeros((1, C2), jnp.float32)
    bh = bh.at[:, :NC].set(params["cls_b"])
    bh = bh.at[:, NC:NC + 4].set(params["reg_b"])
    bh = bh.at[:, NC + 4:NC + 5].set(params["ctn_b"])
    bt.append(bh)
    gt.append(jnp.ones((1, C2), jnp.float32))                 # dummy (no GN on head)
    bet.append(jnp.zeros((1, C2), jnp.float32))

    return dict(
        wl=jnp.stack(wl).astype(jnp.bfloat16),                # (num_conv+1, 9, C2, C2)
        bt=jnp.stack(bt),                                     # (num_conv+1, 1, C2)
        gt=jnp.stack(gt),
        bet=jnp.stack(bet),
        scale=jnp.reshape(params["scale"], (1,)).astype(jnp.float32),
    )


# ----------------------------------------------------------------------------
# Pure-JAX reference (for correctness check)
# ----------------------------------------------------------------------------
def _ref_conv(x, w, b):
    y = lax.conv_general_dilated(
        x, w, window_strides=(1, 1), padding="SAME",
        dimension_numbers=("NHWC", "HWIO", "NHWC"),
        precision=lax.Precision.HIGHEST)
    return y + b


def _ref_gn(y, gamma, beta, groups):
    B, H, W, C = y.shape
    yg = y.reshape(B, H, W, groups, C // groups)
    mean = yg.mean(axis=(1, 2, 4), keepdims=True)
    var = yg.var(axis=(1, 2, 4), keepdims=True)
    yn = ((yg - mean) / jnp.sqrt(var + EPS)).reshape(B, H, W, C)
    return yn * gamma + beta


def fcos_head_v3_reference(x_nchw, params, num_conv=4, groups=32):
    x = jnp.transpose(x_nchw, (0, 2, 3, 1)).astype(jnp.float32)
    tcls = x
    treg = x
    for j in range(num_conv):
        pc = params["cls"][j]
        pr = params["reg"][j]
        tcls = jnp.maximum(_ref_gn(_ref_conv(tcls, pc["w"], pc["b"]),
                                   pc["gamma"], pc["beta"], groups), 0.0)
        treg = jnp.maximum(_ref_gn(_ref_conv(treg, pr["w"], pr["b"]),
                                   pr["gamma"], pr["beta"], groups), 0.0)
    B, H, W, _ = tcls.shape
    ctn = _ref_conv(treg, params["ctn_w"], params["ctn_b"])
    cls = _ref_conv(tcls, params["cls_w"], params["cls_b"])
    reg = jnp.maximum(_ref_conv(treg, params["reg_w"], params["reg_b"])
                      * params["scale"], 0.0)
    res_cls = jnp.transpose(cls, (0, 3, 1, 2)).reshape(B, -1, H * W)
    res_reg = jnp.transpose(reg, (0, 3, 1, 2)).reshape(B, -1, H * W)
    res_ctn = jnp.transpose(ctn, (0, 3, 1, 2)).reshape(B, 1, H * W)
    return jnp.concatenate([res_cls, res_reg, res_ctn], axis=1)


# ----------------------------------------------------------------------------
if __name__ == "__main__":
    # Small, GN-compatible shapes: batch=2, in_channel=64 (32 GN groups), 8x8 map.
    B, C, H, W = 2, 64, 8, 8
    NUM_CLASSES = 4
    GROUPS = 32
    NUM_CONV = 4

    key = jax.random.PRNGKey(0)
    kx, kp = jax.random.split(key)
    x = jax.random.normal(kx, (B, C, H, W), jnp.float32)      # NCHW like PyTorch
    params = init_params(kp, C, NUM_CLASSES, num_conv=NUM_CONV, groups=GROUPS)
    packed = pack_params(params, C, NUM_CLASSES, num_conv=NUM_CONV, groups=GROUPS)

    out = jax.block_until_ready(
        fcos_head_v3_forward(x, packed, num_classes=NUM_CLASSES, groups=GROUPS))
    ref = jax.block_until_ready(
        fcos_head_v3_reference(x, params, num_conv=NUM_CONV, groups=GROUPS))

    assert out.shape == (B, NUM_CLASSES + 4 + 1, H * W), out.shape
    np.testing.assert_allclose(np.asarray(out), np.asarray(ref),
                               rtol=2e-2, atol=2e-2)
    print("KERNEL_OK")
</pallas_src>

<mosaic_0001>
module attributes {stable_mosaic.version = 11 : i64} {
  func.func @_fcos_head_kernel(%arg0: i32, %arg1: i32, %arg2: memref<2x8x8x64xbf16, #tpu.memory_space<vmem>>, %arg3: memref<1x9x128x128xbf16, #tpu.memory_space<vmem>>, %arg4: memref<1x1x128xf32, #tpu.memory_space<vmem>>, %arg5: memref<1x1x128xf32, #tpu.memory_space<vmem>>, %arg6: memref<1x1x128xf32, #tpu.memory_space<vmem>>, %arg7: memref<1xf32, #tpu.memory_space<smem>>, %arg8: memref<2x9x64xf32, #tpu.memory_space<vmem>>, %arg9: memref<2x10x10x128xbf16, #tpu.memory_space<vmem>>) attributes {dimension_semantics = [#tpu.dimension_semantics<parallel>, #tpu.dimension_semantics<arbitrary>], iteration_bounds = array<i64: 1, 5>, scalar_prefetch = 0 : i64, scratch_operands = 1 : i64, tpu.core_type = #tpu.core_type<tc>, window_params = [{transform_indices = @transform_0, window_bounds = array<i64: 2, 8, 8, 64>}, {transform_indices = @transform_1, window_bounds = array<i64: 1, 9, 128, 128>}, {transform_indices = @transform_2, window_bounds = array<i64: 1, 1, 128>}, {transform_indices = @transform_3, window_bounds = array<i64: 1, 1, 128>}, {transform_indices = @transform_4, window_bounds = array<i64: 1, 1, 128>}, {transform_indices = @transform_5, window_bounds = array<i64: 1>}, {transform_indices = @transform_6, window_bounds = array<i64: 2, 9, 64>}]} {
    %c0_i32 = arith.constant 0 : i32
    %0 = arith.cmpi eq, %arg1, %c0_i32 : i32
    %1 = arith.extui %0 : i1 to i32
    %c0_i32_0 = arith.constant 0 : i32
    %2 = arith.cmpi ne, %1, %c0_i32_0 : i32
    scf.if %2 {
      %cst_79 = arith.constant 0.000000e+00 : bf16
      %68 = vector.broadcast %cst_79 : bf16 to vector<2x1x10x128xbf16>
      %c0_80 = arith.constant 0 : index
      %c0_81 = arith.constant 0 : index
      %c0_82 = arith.constant 0 : index
      %c0_83 = arith.constant 0 : index
      %69 = vector.load %arg9[%c0_80, %c0_81, %c0_82, %c0_83] : memref<2x10x10x128xbf16, #tpu.memory_space<vmem>>, vector<2x1x10x128xbf16>
      tpu.vector_store %arg9[%c0_80, %c0_81, %c0_82, %c0_83], %68 {strides = array<i32>} : memref<2x10x10x128xbf16, #tpu.memory_space<vmem>>, vector<2x1x10x128xbf16>,
      %c0_84 = arith.constant 0 : index
      %c9 = arith.constant 9 : index
      %c0_85 = arith.constant 0 : index
      %c0_86 = arith.constant 0 : index
      %70 = vector.load %arg9[%c0_84, %c9, %c0_85, %c0_86] : memref<2x10x10x128xbf16, #tpu.memory_space<vmem>>, vector<2x1x10x128xbf16>
      tpu.vector_store %arg9[%c0_84, %c9, %c0_85, %c0_86], %68 {strides = array<i32>} : memref<2x10x10x128xbf16, #tpu.memory_space<vmem>>, vector<2x1x10x128xbf16>,
      %cst_87 = arith.constant 0.000000e+00 : bf16
      %71 = vector.broadcast %cst_87 : bf16 to vector<2x10x1x128xbf16>
      %c0_88 = arith.constant 0 : index
      %c0_89 = arith.constant 0 : index
      %c0_90 = arith.constant 0 : index
      %c0_91 = arith.constant 0 : index
      %72 = vector.load %arg9[%c0_88, %c0_89, %c0_90, %c0_91] : memref<2x10x10x128xbf16, #tpu.memory_space<vmem>>, vector<2x10x1x128xbf16>
      tpu.vector_store %arg9[%c0_88, %c0_89, %c0_90, %c0_91], %71 {strides = array<i32>} : memref<2x10x10x128xbf16, #tpu.memory_space<vmem>>, vector<2x10x1x128xbf16>,
      %c0_92 = arith.constant 0 : index
      %c0_93 = arith.constant 0 : index
      %c9_94 = arith.constant 9 : index
      %c0_95 = arith.constant 0 : index
      %73 = vector.load %arg9[%c0_92, %c0_93, %c9_94, %c0_95] : memref<2x10x10x128xbf16, #tpu.memory_space<vmem>>, vector<2x10x1x128xbf16>
      tpu.vector_store %arg9[%c0_92, %c0_93, %c9_94, %c0_95], %71 {strides = array<i32>} : memref<2x10x10x128xbf16, #tpu.memory_space<vmem>>, vector<2x10x1x128xbf16>,
      %c0_96 = arith.constant 0 : index
      %c0_97 = arith.constant 0 : index
      %c0_98 = arith.constant 0 : index
      %c0_99 = arith.constant 0 : index
      %74 = vector.load %arg2[%c0_96, %c0_97, %c0_98, %c0_99] : memref<2x8x8x64xbf16, #tpu.memory_space<vmem>>, vector<2x8x8x64xbf16>
      %75 = tpu.concatenate %74, %74 in 3 : vector<2x8x8x64xbf16>, vector<2x8x8x64xbf16> -> vector<2x8x8x128xbf16>
      %c0_100 = arith.constant 0 : index
      %c1_101 = arith.constant 1 : index
      %c1_102 = arith.constant 1 : index
      %c0_103 = arith.constant 0 : index
      %76 = vector.load %arg9[%c0_100, %c1_101, %c1_102, %c0_103] : memref<2x10x10x128xbf16, #tpu.memory_space<vmem>>, vector<2x8x8x128xbf16>
      tpu.vector_store %arg9[%c0_100, %c1_101, %c1_102, %c0_103], %75 {strides = array<i32>} : memref<2x10x10x128xbf16, #tpu.memory_space<vmem>>, vector<2x8x8x128xbf16>,
    } else {
    }
    %cst = arith.constant 0.000000e+00 : f32
    %3 = vector.broadcast %cst : f32 to vector<128x128xf32>
    %c0 = arith.constant 0 : index
    %c0_1 = arith.constant 0 : index
    %c0_2 = arith.constant 0 : index
    %c0_3 = arith.constant 0 : index
    %4 = vector.load %arg9[%c0, %c0_1, %c0_2, %c0_3] : memref<2x10x10x128xbf16, #tpu.memory_space<vmem>>, vector<2x8x8x128xbf16>
    %5 = vector.shape_cast %4 : vector<2x8x8x128xbf16> to vector<128x128xbf16>
    %c0_4 = arith.constant 0 : index
    %c0_5 = arith.constant 0 : index
    %c0_6 = arith.constant 0 : index
    %c0_7 = arith.constant 0 : index
    %6 = vector.load %arg3[%c0_4, %c0_5, %c0_6, %c0_7] : memref<1x9x128x128xbf16, #tpu.memory_space<vmem>>, vector<1x1x128x128xbf16>
    %7 = vector.shape_cast %6 : vector<1x1x128x128xbf16> to vector<128x128xbf16>
    %cst_8 = arith.constant dense<0.000000e+00> : vector<128x128xf32>
    %8 = tpu.matmul %5, %7, %cst_8 {dimension_numbers = #tpu.dot_dimension_numbers<[1], [0], [0], [1], [0, 0, 1, 1], [], []>} : vector<128x128xbf16>, vector<128x128xbf16>, vector<128x128xf32> -> vector<128x128xf32>
    %9 = arith.addf %3, %8 : vector<128x128xf32>
    %c0_9 = arith.constant 0 : index
    %c0_10 = arith.constant 0 : index
    %c1 = arith.constant 1 : index
    %c0_11 = arith.constant 0 : index
    %10 = vector.load %arg9[%c0_9, %c0_10, %c1, %c0_11] : memref<2x10x10x128xbf16, #tpu.memory_space<vmem>>, vector<2x8x8x128xbf16>
    %11 = vector.shape_cast %10 : vector<2x8x8x128xbf16> to vector<128x128xbf16>
    %c0_12 = arith.constant 0 : index
    %c1_13 = arith.constant 1 : index
    %c0_14 = arith.constant 0 : index
    %c0_15 = arith.constant 0 : index
    %12 = vector.load %arg3[%c0_12, %c1_13, %c0_14, %c0_15] : memref<1x9x128x128xbf16, #tpu.memory_space<vmem>>, vector<1x1x128x128xbf16>
    %13 = vector.shape_cast %12 : vector<1x1x128x128xbf16> to vector<128x128xbf16>
    %cst_16 = arith.constant dense<0.000000e+00> : vector<128x128xf32>
    %14 = tpu.matmul %11, %13, %cst_16 {dimension_numbers = #tpu.dot_dimension_numbers<[1], [0], [0], [1], [0, 0, 1, 1], [], []>} : vector<128x128xbf16>, vector<128x128xbf16>, vector<128x128xf32> -> vector<128x128xf32>
    %15 = arith.addf %9, %14 : vector<128x128xf32>
    %c0_17 = arith.constant 0 : index
    %c0_18 = arith.constant 0 : index
    %c2 = arith.constant 2 : index
    %c0_19 = arith.constant 0 : index
    %16 = vector.load %arg9[%c0_17, %c0_18, %c2, %c0_19] : memref<2x10x10x128xbf16, #tpu.memory_space<vmem>>, vector<2x8x8x128xbf16>
    %17 = vector.shape_cast %16 : vector<2x8x8x128xbf16> to vector<128x128xbf16>
    %c0_20 = arith.constant 0 : index
    %c2_21 = arith.constant 2 : index
    %c0_22 = arith.constant 0 : index
    %c0_23 = arith.constant 0 : index
    %18 = vector.load %arg3[%c0_20, %c2_21, %c0_22, %c0_23] : memref<1x9x128x128xbf16, #tpu.memory_space<vmem>>, vector<1x1x128x128xbf16>
    %19 = vector.shape_cast %18 : vector<1x1x128x128xbf16> to vector<128x128xbf16>
    %cst_24 = arith.constant dense<0.000000e+00> : vector<128x128xf32>
    %20 = tpu.matmul %17, %19, %cst_24 {dimension_numbers = #tpu.dot_dimension_numbers<[1], [0], [0], [1], [0, 0, 1, 1], [], []>} : vector<128x128xbf16>, vector<128x128xbf16>, vector<128x128xf32> -> vector<128x128xf32>
    %21 = arith.addf %15, %20 : vector<128x128xf32>
    %c0_25 = arith.constant 0 : index
    %c1_26 = arith.constant 1 : index
    %c0_27 = arith.constant 0 : index
    %c0_28 = arith.constant 0 : index
    %22 = vector.load %arg9[%c0_25, %c1_26, %c0_27, %c0_28] : memref<2x10x10x128xbf16, #tpu.memory_space<vmem>>, vector<2x8x8x128xbf16>
    %23 = vector.shape_cast %22 : vector<2x8x8x128xbf16> to vector<128x128xbf16>
    %c0_29 = arith.constant 0 : index
    %c3 = arith.constant 3 : index
    %c0_30 = arith.constant 0 : index
    %c0_31 = arith.constant 0 : index
    %24 = vector.load %arg3[%c0_29, %c3, %c0_30, %c0_31] : memref<1x9x128x128xbf16, #tpu.memory_space<vmem>>, vector<1x1x128x128xbf16>
    %25 = vector.shape_cast %24 : vector<1x1x128x128xbf16> to vector<128x128xbf16>
    %cst_32 = arith.constant dense<0.000000e+00> : vector<128x128xf32>
    %26 = tpu.matmul %23, %25, %cst_32 {dimension_numbers = #tpu.dot_dimension_numbers<[1], [0], [0], [1], [0, 0, 1, 1], [], []>} : vector<128x128xbf16>, vector<128x128xbf16>, vector<128x128xf32> -> vector<128x128xf32>
    %27 = arith.addf %21, %26 : vector<128x128xf32>
    %c0_33 = arith.constant 0 : index
    %c1_34 = arith.constant 1 : index
    %c1_35 = arith.constant 1 : index
    %c0_36 = arith.constant 0 : index
    %28 = vector.load %arg9[%c0_33, %c1_34, %c1_35, %c0_36] : memref<2x10x10x128xbf16, #tpu.memory_space<vmem>>, vector<2x8x8x128xbf16>
    %29 = vector.shape_cast %28 : vector<2x8x8x128xbf16> to vector<128x128xbf16>
    %c0_37 = arith.constant 0 : index
    %c4 = arith.constant 4 : index
    %c0_38 = arith.constant 0 : index
    %c0_39 = arith.constant 0 : index
    %30 = vector.load %arg3[%c0_37, %c4, %c0_38, %c0_39] : memref<1x9x128x128xbf16, #tpu.memory_space<vmem>>, vector<1x1x128x128xbf16>
    %31 = vector.shape_cast %30 : vector<1x1x128x128xbf16> to vector<128x128xbf16>
    %cst_40 = arith.constant dense<0.000000e+00> : vector<128x128xf32>
    %32 = tpu.matmul %29, %31, %cst_40 {dimension_numbers = #tpu.dot_dimension_numbers<[1], [0], [0], [1], [0, 0, 1, 1], [], []>} : vector<128x128xbf16>, vector<128x128xbf16>, vector<128x128xf32> -> vector<128x128xf32>
    %33 = arith.addf %27, %32 : vector<128x128xf32>
    %c0_41 = arith.constant 0 : index
    %c1_42 = arith.constant 1 : index
    %c2_43 = arith.constant 2 : index
    %c0_44 = arith.constant 0 : index
    %34 = vector.load %arg9[%c0_41, %c1_42, %c2_43, %c0_44] : memref<2x10x10x128xbf16, #tpu.memory_space<vmem>>, vector<2x8x8x128xbf16>
    %35 = vector.shape_cast %34 : vector<2x8x8x128xbf16> to vector<128x128xbf16>
    %c0_45 = arith.constant 0 : index
    %c5 = arith.constant 5 : index
    %c0_46 = arith.constant 0 : index
    %c0_47 = arith.constant 0 : index
    %36 = vector.load %arg3[%c0_45, %c5, %c0_46, %c0_47] : memref<1x9x128x128xbf16, #tpu.memory_space<vmem>>, vector<1x1x128x128xbf16>
    %37 = vector.shape_cast %36 : vector<1x1x128x128xbf16> to vector<128x128xbf16>
    %cst_48 = arith.constant dense<0.000000e+00> : vector<128x128xf32>
    %38 = tpu.matmul %35, %37, %cst_48 {dimension_numbers = #tpu.dot_dimension_numbers<[1], [0], [0], [1], [0, 0, 1, 1], [], []>} : vector<128x128xbf16>, vector<128x128xbf16>, vector<128x128xf32> -> vector<128x128xf32>
    %39 = arith.addf %33, %38 : vector<128x128xf32>
    %c0_49 = arith.constant 0 : index
    %c2_50 = arith.constant 2 : index
    %c0_51 = arith.constant 0 : index
    %c0_52 = arith.constant 0 : index
    %40 = vector.load %arg9[%c0_49, %c2_50, %c0_51, %c0_52] : memref<2x10x10x128xbf16, #tpu.memory_space<vmem>>, vector<2x8x8x128xbf16>
    %41 = vector.shape_cast %40 : vector<2x8x8x128xbf16> to vector<128x128xbf16>
    %c0_53 = arith.constant 0 : index
    %c6 = arith.constant 6 : index
    %c0_54 = arith.constant 0 : index
    %c0_55 = arith.constant 0 : index
    %42 = vector.load %arg3[%c0_53, %c6, %c0_54, %c0_55] : memref<1x9x128x128xbf16, #tpu.memory_space<vmem>>, vector<1x1x128x128xbf16>
    %43 = vector.shape_cast %42 : vector<1x1x128x128xbf16> to vector<128x128xbf16>
    %cst_56 = arith.constant dense<0.000000e+00> : vector<128x128xf32>
    %44 = tpu.matmul %41, %43, %cst_56 {dimension_numbers = #tpu.dot_dimension_numbers<[1], [0], [0], [1], [0, 0, 1, 1], [], []>} : vector<128x128xbf16>, vector<128x128xbf16>, vector<128x128xf32> -> vector<128x128xf32>
    %45 = arith.addf %39, %44 : vector<128x128xf32>
    %c0_57 = arith.constant 0 : index
    %c2_58 = arith.constant 2 : index
    %c1_59 = arith.constant 1 : index
    %c0_60 = arith.constant 0 : index
    %46 = vector.load %arg9[%c0_57, %c2_58, %c1_59, %c0_60] : memref<2x10x10x128xbf16, #tpu.memory_space<vmem>>, vector<2x8x8x128xbf16>
    %47 = vector.shape_cast %46 : vector<2x8x8x128xbf16> to vector<128x128xbf16>
    %c0_61 = arith.constant 0 : index
    %c7 = arith.constant 7 : index
    %c0_62 = arith.constant 0 : index
    %c0_63 = arith.constant 0 : index
    %48 = vector.load %arg3[%c0_61, %c7, %c0_62, %c0_63] : memref<1x9x128x128xbf16, #tpu.memory_space<vmem>>, vector<1x1x128x128xbf16>
    %49 = vector.shape_cast %48 : vector<1x1x128x128xbf16> to vector<128x128xbf16>
    %cst_64 = arith.constant dense<0.000000e+00> : vector<128x128xf32>
    %50 = tpu.matmul %47, %49, %cst_64 {dimension_numbers = #tpu.dot_dimension_numbers<[1], [0], [0], [1], [0, 0, 1, 1], [], []>} : vector<128x128xbf16>, vector<128x128xbf16>, vector<128x128xf32> -> vector<128x128xf32>
    %51 = arith.addf %45, %50 : vector<128x128xf32>
    %c0_65 = arith.constant 0 : index
    %c2_66 = arith.constant 2 : index
    %c2_67 = arith.constant 2 : index
    %c0_68 = arith.constant 0 : index
    %52 = vector.load %arg9[%c0_65, %c2_66, %c2_67, %c0_68] : memref<2x10x10x128xbf16, #tpu.memory_space<vmem>>, vector<2x8x8x128xbf16>
    %53 = vector.shape_cast %52 : vector<2x8x8x128xbf16> to vector<128x128xbf16>
    %c0_69 = arith.constant 0 : index
    %c8 = arith.constant 8 : index
    %c0_70 = arith.constant 0 : index
    %c0_71 = arith.constant 0 : index
    %54 = vector.load %arg3[%c0_69, %c8, %c0_70, %c0_71] : memref<1x9x128x128xbf16, #tpu.memory_space<vmem>>, vector<1x1x128x128xbf16>
    %55 = vector.shape_cast %54 : vector<1x1x128x128xbf16> to vector<128x128xbf16>
    %cst_72 = arith.constant dense<0.000000e+00> : vector<128x128xf32>
    %56 = tpu.matmul %53, %55, %cst_72 {dimension_numbers = #tpu.dot_dimension_numbers<[1], [0], [0], [1], [0, 0, 1, 1], [], []>} : vector<128x128xbf16>, vector<128x128xbf16>, vector<128x128xf32> -> vector<128x128xf32>
    %57 = arith.addf %51, %56 : vector<128x128xf32>
    %c0_73 = arith.constant 0 : index
    %c0_74 = arith.constant 0 : index
    %c0_75 = arith.constant 0 : index
    %58 = vector.load %arg4[%c0_73, %c0_74, %c0_75] : memref<1x1x128xf32, #tpu.memory_space<vmem>>, vector<1x1x128xf32>
    %59 = vector.shape_cast %58 : vector<1x1x128xf32> to vector<1x128xf32>
    %60 = vector.broadcast %59 : vector<1x128xf32> to vector<128x128xf32>
    %61 = arith.addf %57, %60 : vector<128x128xf32>
    %c4_i32 = arith.constant 4 : i32
    %62 = arith.cmpi slt, %arg1, %c4_i32 : i32
    %63 = arith.extui %62 : i1 to i32
    %c0_i32_76 = arith.constant 0 : i32
    %64 = arith.cmpi ne, %63, %c0_i32_76 : i32
    scf.if %64 {
      %68 = vector.shape_cast %61 : vector<128x128xf32> to vector<2x64x128xf32>
      %cst_79 = arith.constant dense<0.000000e+00> : vector<2x128xf32>
      %69 = vector.multi_reduction <add>, %68, %cst_79 [1] : vector<2x64x128xf32> to vector<2x128xf32>
      %70 = tpu.iota {dimensions = array<i32: 1>} : vector<2x128xi32>
      %71 = vector.extract_strided_slice %69 {offsets = [0, 1], sizes = [2, 127], strides = [1, 1]} : vector<2x128xf32> to vector<2x127xf32>
      %72 = vector.extract_strided_slice %69 {offsets = [0, 0], sizes = [2, 1], strides = [1, 1]} : vector<2x128xf32> to vector<2x1xf32>
      %73 = tpu.concatenate %71, %72 in 1 : vector<2x127xf32>, vector<2x1xf32> -> vector<2x128xf32>
      %74 = vector.extract_strided_slice %69 {offsets = [0, 127], sizes = [2, 1], strides = [1, 1]} : vector<2x128xf32> to vector<2x1xf32>
      %75 = vector.extract_strided_slice %69 {offsets = [0, 0], sizes = [2, 127], strides = [1, 1]} : vector<2x128xf32> to vector<2x127xf32>
      %76 = tpu.concatenate %74, %75 in 1 : vector<2x1xf32>, vector<2x127xf32> -> vector<2x128xf32>
      %c2_i32 = arith.constant 2 : i32
      %c0_i32_80 = arith.constant 0 : i32
      %77 = arith.cmpi eq, %c2_i32, %c0_i32_80 : i32
      %c1_i32 = arith.constant 1 : i32
      %78 = arith.select %77, %c1_i32, %c2_i32 : i32
      %79 = vector.broadcast %78 : i32 to vector<2x128xi32>
      %80 = arith.remsi %70, %79 : vector<2x128xi32>
      %c0_i32_81 = arith.constant 0 : i32
      %81 = vector.broadcast %c0_i32_81 : i32 to vector<2x128xi32>
      %82 = arith.cmpi ne, %80, %81 : vector<2x128xi32>
      %c0_i32_82 = arith.constant 0 : i32
      %83 = vector.broadcast %c0_i32_82 : i32 to vector<2x128xi32>
      %84 = arith.cmpi slt, %80, %83 : vector<2x128xi32>
      %c0_i32_83 = arith.constant 0 : i32
      %85 = arith.cmpi slt, %78, %c0_i32_83 : i32
      %86 = vector.broadcast %85 : i1 to vector<2x128xi1>
      %87 = vector.broadcast %86 : vector<2x128xi1> to vector<2x128xi1>
      %88 = arith.xori %84, %87 : vector<2x128xi1>
      %89 = arith.andi %88, %82 : vector<2x128xi1>
      %90 = vector.broadcast %78 : i32 to vector<2x128xi32>
      %91 = arith.addi %80, %90 : vector<2x128xi32>
      %92 = arith.select %89, %91, %80 : vector<2x128xi1>, vector<2x128xi32>
      %c1_i32_84 = arith.constant 1 : i32
      %93 = vector.broadcast %c1_i32_84 : i32 to vector<2x128xi32>
      %94 = arith.cmpi slt, %92, %93 : vector<2x128xi32>
      %95 = arith.select %94, %73, %76 : vector<2x128xi1>, vector<2x128xf32>
      %96 = arith.addf %69, %95 : vector<2x128xf32>
      %cst_85 = arith.constant 1.280000e+02 : f32
      %97 = vector.broadcast %cst_85 : f32 to vector<2x128xf32>
      %98 = arith.divf %96, %97 : vector<2x128xf32>
      %99 = vector.shape_cast %98 : vector<2x128xf32> to vector<2x1x128xf32>
      %100 = vector.broadcast %99 : vector<2x1x128xf32> to vector<2x64x128xf32>
      %101 = arith.subf %68, %100 : vector<2x64x128xf32>
      %102 = arith.mulf %101, %101 : vector<2x64x128xf32>
      %cst_86 = arith.constant dense<0.000000e+00> : vector<2x128xf32>
      %103 = vector.multi_reduction <add>, %102, %cst_86 [1] : vector<2x64x128xf32> to vector<2x128xf32>
      %104 = tpu.iota {dimensions = array<i32: 1>} : vector<2x128xi32>
      %105 = vector.extract_strided_slice %103 {offsets = [0, 1], sizes = [2, 127], strides = [1, 1]} : vector<2x128xf32> to vector<2x127xf32>
      %106 = vector.extract_strided_slice %103 {offsets = [0, 0], sizes = [2, 1], strides = [1, 1]} : vector<2x128xf32> to vector<2x1xf32>
      %107 = tpu.concatenate %105, %106 in 1 : vector<2x127xf32>, vector<2x1xf32> -> vector<2x128xf32>
      %108 = vector.extract_strided_slice %103 {offsets = [0, 127], sizes = [2, 1], strides = [1, 1]} : vector<2x128xf32> to vector<2x1xf32>
      %109 = vector.extract_strided_slice %103 {offsets = [0, 0], sizes = [2, 127], strides = [1, 1]} : vector<2x128xf32> to vector<2x127xf32>
      %110 = tpu.concatenate %108, %109 in 1 : vector<2x1xf32>, vector<2x127xf32> -> vector<2x128xf32>
      %c2_i32_87 = arith.constant 2 : i32
      %c0_i32_88 = arith.constant 0 : i32
      %111 = arith.cmpi eq, %c2_i32_87, %c0_i32_88 : i32
      %c1_i32_89 = arith.constant 1 : i32
      %112 = arith.select %111, %c1_i32_89, %c2_i32_87 : i32
      %113 = vector.broadcast %112 : i32 to vector<2x128xi32>
      %114 = arith.remsi %104, %113 : vector<2x128xi32>
      %c0_i32_90 = arith.constant 0 : i32
      %115 = vector.broadcast %c0_i32_90 : i32 to vector<2x128xi32>
      %116 = arith.cmpi ne, %114, %115 : vector<2x128xi32>
      %c0_i32_91 = arith.constant 0 : i32
      %117 = vector.broadcast %c0_i32_91 : i32 to vector<2x128xi32>
      %118 = arith.cmpi slt, %114, %117 : vector<2x128xi32>
      %c0_i32_92 = arith.constant 0 : i32
      %119 = arith.cmpi slt, %112, %c0_i32_92 : i32
      %120 = vector.broadcast %119 : i1 to vector<2x128xi1>
      %121 = vector.broadcast %120 : vector<2x128xi1> to vector<2x128xi1>
      %122 = arith.xori %118, %121 : vector<2x128xi1>
      %123 = arith.andi %122, %116 : vector<2x128xi1>
      %124 = vector.broadcast %112 : i32 to vector<2x128xi32>
      %125 = arith.addi %114, %124 : vector<2x128xi32>
      %126 = arith.select %123, %125, %114 : vector<2x128xi1>, vector<2x128xi32>
      %c1_i32_93 = arith.constant 1 : i32
      %127 = vector.broadcast %c1_i32_93 : i32 to vector<2x128xi32>
      %128 = arith.cmpi slt, %126, %127 : vector<2x128xi32>
      %129 = arith.select %128, %107, %110 : vector<2x128xi1>, vector<2x128xf32>
      %130 = arith.addf %103, %129 : vector<2x128xf32>
      %cst_94 = arith.constant 1.280000e+02 : f32
      %131 = vector.broadcast %cst_94 : f32 to vector<2x128xf32>
      %132 = arith.divf %130, %131 : vector<2x128xf32>
      %cst_95 = arith.constant 9.99999974E-6 : f32
      %133 = vector.broadcast %cst_95 : f32 to vector<2x128xf32>
      %134 = arith.addf %132, %133 : vector<2x128xf32>
      %135 = math.rsqrt %134 : vector<2x128xf32>
      %c0_96 = arith.constant 0 : index
      %c0_97 = arith.constant 0 : index
      %c0_98 = arith.constant 0 : index
      %136 = vector.load %arg5[%c0_96, %c0_97, %c0_98] : memref<1x1x128xf32, #tpu.memory_space<vmem>>, vector<1x1x128xf32>
      %137 = vector.shape_cast %136 : vector<1x1x128xf32> to vector<1x128xf32>
      %138 = vector.broadcast %137 : vector<1x128xf32> to vector<2x128xf32>
      %139 = arith.mulf %135, %138 : vector<2x128xf32>
      %140 = vector.shape_cast %139 : vector<2x128xf32> to vector<2x1x128xf32>
      %141 = vector.broadcast %140 : vector<2x1x128xf32> to vector<2x64x128xf32>
      %142 = arith.mulf %101, %141 : vector<2x64x128xf32>
      %c0_99 = arith.constant 0 : index
      %c0_100 = arith.constant 0 : index
      %c0_101 = arith.constant 0 : index
      %143 = vector.load %arg6[%c0_99, %c0_100, %c0_101] : memref<1x1x128xf32, #tpu.memory_space<vmem>>, vector<1x1x128xf32>
      %144 = vector.shape_cast %143 : vector<1x1x128xf32> to vector<1x128xf32>
      %145 = vector.shape_cast %144 : vector<1x128xf32> to vector<1x1x128xf32>
      %146 = vector.broadcast %145 : vector<1x1x128xf32> to vector<2x64x128xf32>
      %147 = arith.addf %142, %146 : vector<2x64x128xf32>
      %cst_102 = arith.constant 0.000000e+00 : f32
      %148 = vector.broadcast %cst_102 : f32 to vector<2x64x128xf32>
      %149 = arith.maximumf %147, %148 : vector<2x64x128xf32>
      %150 = vector.shape_cast %149 : vector<2x64x128xf32> to vector<2x8x8x128xf32>
      %151 = arith.truncf %150 : vector<2x8x8x128xf32> to vector<2x8x8x128xbf16>
      %c0_103 = arith.constant 0 : index
      %c1_104 = arith.constant 1 : index
      %c1_105 = arith.constant 1 : index
      %c0_106 = arith.constant 0 : index
      %152 = vector.load %arg9[%c0_103, %c1_104, %c1_105, %c0_106] : memref<2x10x10x128xbf16, #tpu.memory_space<vmem>>, vector<2x8x8x128xbf16>
      tpu.vector_store %arg9[%c0_103, %c1_104, %c1_105, %c0_106], %151 {strides = array<i32>} : memref<2x10x10x128xbf16, #tpu.memory_space<vmem>>, vector<2x8x8x128xbf16>,
    } else {
    }
    %c4_i32_77 = arith.constant 4 : i32
    %65 = arith.cmpi eq, %arg1, %c4_i32_77 : i32
    %66 = arith.extui %65 : i1 to i32
    %c0_i32_78 = arith.constant 0 : i32
    %67 = arith.cmpi ne, %66, %c0_i32_78 : i32
    scf.if %67 {
      %68 = vector.extract_strided_slice %61 {offsets = [0, 0], sizes = [128, 9], strides = [1, 1]} : vector<128x128xf32> to vector<128x9xf32>
      %69 = tpu.iota {dimensions = array<i32: 1>} : vector<128x9xi32>
      %c4_i32_79 = arith.constant 4 : i32
      %70 = vector.broadcast %c4_i32_79 : i32 to vector<128x9xi32>
      %71 = arith.cmpi sge, %69, %70 : vector<128x9xi32>
      %c8_i32 = arith.constant 8 : i32
      %72 = vector.broadcast %c8_i32 : i32 to vector<128x9xi32>
      %73 = arith.cmpi slt, %69, %72 : vector<128x9xi32>
      %74 = arith.andi %71, %73 : vector<128x9xi1>
      %c0_80 = arith.constant 0 : index
      %75 = memref.load %arg7[%c0_80] : memref<1xf32, #tpu.memory_space<smem>>
      %76 = vector.broadcast %75 : f32 to vector<128x9xf32>
      %77 = arith.mulf %68, %76 : vector<128x9xf32>
      %cst_81 = arith.constant 0.000000e+00 : f32
      %78 = vector.broadcast %cst_81 : f32 to vector<128x9xf32>
      %79 = arith.maximumf %77, %78 : vector<128x9xf32>
      %80 = arith.select %74, %79, %68 : vector<128x9xi1>, vector<128x9xf32>
      %81 = vector.shape_cast %80 : vector<128x9xf32> to vector<2x64x9xf32>
      %82 = vector.extract_strided_slice %81 {offsets = [0, 0, 0], sizes = [1, 64, 9], strides = [1, 1, 1]} : vector<2x64x9xf32> to vector<1x64x9xf32>
      %83 = vector.shape_cast %82 : vector<1x64x9xf32> to vector<64x9xf32>
      %84 = tpu.transpose %83, [1, 0] : vector<64x9xf32> -> vector<9x64xf32>
      %c0_82 = arith.constant 0 : index
      %c0_83 = arith.constant 0 : index
      %c0_84 = arith.constant 0 : index
      %85 = vector.load %arg8[%c0_82, %c0_83, %c0_84] : memref<2x9x64xf32, #tpu.memory_space<vmem>>, vector<1x9x64xf32>
      %86 = vector.shape_cast %85 : vector<1x9x64xf32> to vector<9x64xf32>
      %87 = vector.shape_cast %84 : vector<9x64xf32> to vector<1x9x64xf32>
      tpu.vector_store %arg8[%c0_82, %c0_83, %c0_84], %87 {strides = array<i32>} : memref<2x9x64xf32, #tpu.memory_space<vmem>>, vector<1x9x64xf32>,
      %88 = vector.extract_strided_slice %81 {offsets = [1, 0, 0], sizes = [1, 64, 9], strides = [1, 1, 1]} : vector<2x64x9xf32> to vector<1x64x9xf32>
      %89 = vector.shape_cast %88 : vector<1x64x9xf32> to vector<64x9xf32>
      %90 = tpu.transpose %89, [1, 0] : vector<64x9xf32> -> vector<9x64xf32>
      %c1_85 = arith.constant 1 : index
      %c0_86 = arith.constant 0 : index
      %c0_87 = arith.constant 0 : index
      %91 = vector.load %arg8[%c1_85, %c0_86, %c0_87] : memref<2x9x64xf32, #tpu.memory_space<vmem>>, vector<1x9x64xf32>
      %92 = vector.shape_cast %91 : vector<1x9x64xf32> to vector<9x64xf32>
      %93 = vector.shape_cast %90 : vector<9x64xf32> to vector<1x9x64xf32>
      tpu.vector_store %arg8[%c1_85, %c0_86, %c0_87], %93 {strides = array<i32>} : memref<2x9x64xf32, #tpu.memory_space<vmem>>, vector<1x9x64xf32>,
    } else {
    }
    return
  }
  func.func @transform_0(%arg0: i32, %arg1: i32) -> (i32, i32, i32, i32) {
    %c0_i32 = arith.constant 0 : i32
    %c0_i32_0 = arith.constant 0 : i32
    %c0_i32_1 = arith.constant 0 : i32
    %c0_i32_2 = arith.constant 0 : i32
    return %arg0, %c0_i32, %c0_i32_0, %c0_i32_1 : i32, i32, i32, i32
  }
  func.func @transform_1(%arg0: i32, %arg1: i32) -> (i32, i32, i32, i32) {
    %c0_i32 = arith.constant 0 : i32
    %c0_i32_0 = arith.constant 0 : i32
    %c0_i32_1 = arith.constant 0 : i32
    %c0_i32_2 = arith.constant 0 : i32
    return %arg1, %c0_i32, %c0_i32_0, %c0_i32_1 : i32, i32, i32, i32
  }
  func.func @transform_2(%arg0: i32, %arg1: i32) -> (i32, i32, i32) {
    %c0_i32 = arith.constant 0 : i32
    %c0_i32_0 = arith.constant 0 : i32
    %c0_i32_1 = arith.constant 0 : i32
    return %arg1, %c0_i32, %c0_i32_0 : i32, i32, i32
  }
  func.func @transform_3(%arg0: i32, %arg1: i32) -> (i32, i32, i32) {
    %c0_i32 = arith.constant 0 : i32
    %c0_i32_0 = arith.constant 0 : i32
    %c0_i32_1 = arith.constant 0 : i32
    return %arg1, %c0_i32, %c0_i32_0 : i32, i32, i32
  }
  func.func @transform_4(%arg0: i32, %arg1: i32) -> (i32, i32, i32) {
    %c0_i32 = arith.constant 0 : i32
    %c0_i32_0 = arith.constant 0 : i32
    %c0_i32_1 = arith.constant 0 : i32
    return %arg1, %c0_i32, %c0_i32_0 : i32, i32, i32
  }
  func.func @transform_5(%arg0: i32, %arg1: i32) -> i32 {
    %c0_i32 = arith.constant 0 : i32
    %c0_i32_0 = arith.constant 0 : i32
    return %c0_i32 : i32
  }
  func.func @transform_6(%arg0: i32, %arg1: i32) -> (i32, i32, i32) {
    %c0_i32 = arith.constant 0 : i32
    %c0_i32_0 = arith.constant 0 : i32
    %c0_i32_1 = arith.constant 0 : i32
    return %arg0, %c0_i32, %c0_i32_0 : i32, i32, i32
  }
}

</mosaic_0001>

<llo_original>
// kernel: tpu_custom_call.1
$region0: #{tpu_custom_call.1}
  #allocation0 [shape = 'u32[]', space=smem, size = 0x4, offset = 0x4, fixed_abs, tag = 'smem constant byte address 0x4 - core index']
  #allocation1 [shape = 'u32[144,128]{1,0:T(1,128)}', space=vmem, size = 0x12000, scoped, tag = 'internal scratch']
  #allocation2 [shape = 'bf16[2,10,10,128]{3,2,1,0:T(8,128)(2,1)}', space=vmem, size = 0x14000, scoped, tag = 'scratch operand']
  #allocation3 [shape = 'f32[1]{0:T(128)S(6)}', space=smem, size = 0x200, scoped, tag = 'scoped memory for tpu_custom_call.1']
  %s0 = inlined_call_operand.hbm [shape: bf16[2,8,8,64], index: 0, kind: input, shape index: {}]
  %s1 = inlined_call_operand.hbm [shape: bf16[5,9,128,128], index: 1, kind: input, shape index: {}]
  %s2 = inlined_call_operand.hbm [shape: f32[5,1,128], index: 2, kind: input, shape index: {}]
  %s3 = inlined_call_operand.hbm [shape: f32[5,1,128], index: 3, kind: input, shape index: {}]
  %s4 = inlined_call_operand.hbm [shape: f32[5,1,128], index: 4, kind: input, shape index: {}]
  %s5 = inlined_call_operand.<no memory space> [shape: f32[1], index: 5, kind: input, shape index: {}]
  %s6 = inlined_call_operand.vmem [shape: f32[2,9,64], index: 6, kind: output, shape index: {}]
  %s7 = sld [smem:[#allocation0]]
  $region89: #{tpu_custom_call.1} parent=0
    _
  %s9 = ssub.s32 1, %s7
  %s10 = scalar_select 0, %s9, %s7
  %11 = sst [smem:[#allocation3]] %s5
  $region1: #{tpu_custom_call.1} parent=0
    #allocation4 [shape = 'u8[32768]{0}', space=vmem, size = 0x8000, scoped, tag = 'input window, operand 0, single buffered']
    #allocation5 [shape = 's32[2]{0}', space=sflag, size = 0x8, scoped, tag = 'scoped memory for tpu_custom_call.1']
    #allocation6 [shape = 'u8[589824]{0}', space=vmem, size = 0x90000, scoped, tag = 'input window, operand 1']
    #allocation7 [shape = 's32[2]{0}', space=sflag, size = 0x8, scoped, tag = 'scoped memory for tpu_custom_call.1']
    #allocation8 [shape = 'u8[1024]{0}', space=vmem, size = 0x400, scoped, tag = 'input window, operand 2']
    #allocation9 [shape = 'u8[1024]{0}', space=vmem, size = 0x400, scoped, tag = 'input window, operand 3']
    #allocation10 [shape = 's32[2]{0}', space=sflag, size = 0x8, scoped, tag = 'scoped memory for tpu_custom_call.1']
    #allocation11 [shape = 'u8[1024]{0}', space=vmem, size = 0x400, scoped, tag = 'input window, operand 4']
    %12 = vsyncpa [#allocation5], 0
    %13 = vsyncpa [#allocation7], 0
    %s14 = scalar_lea.sflag [#allocation7], 1
    %15 = vsyncpa %s14, 0
    %16 = vsyncpa [#allocation10], 0
    %s17 = scalar_lea.sflag [#allocation10], 1
    %18 = vsyncpa %s17, 0
    loop: start=0, step=1, limit=7
    $region2: #{tpu_custom_call.1} parent=1 // loop_pre_header
      _
    $region3: #{tpu_custom_call.1} parent=1 // loop_header
      %s20 = sphi 0, %s24
      %p21 = scmp.ge.s32.totalorder %s20, 7
      %s27 = sphi 0, %s39
      %s28 = sphi 0, %s35
      %s29 = sphi 0, %s27
      %s30 = sphi 0, %s28
      %s31 = sphi 0, %s29
      %s32 = sphi 0, %s30
      %s42 = sphi 0, %s44
      %s45 = sphi 0, %s42
      %s46 = sphi 0, %s45
      %s62 = sphi 0, %s46
      %s68 = sphi 0, %s70
      %s71 = sphi 0, %s68
      %s72 = sphi 0, %s71
      %s88 = sphi 0, %s72
      %s94 = sphi 0, %s96
      %s97 = sphi 0, %s94
      %s98 = sphi 0, %s97
      %s114 = sphi 0, %s98
      %s120 = sphi 0, %s122
      %s123 = sphi 0, %s120
      %s124 = sphi 0, %s123
      %s140 = sphi 0, %s124
      %s146 = sphi 0, %s148
      %s149 = sphi 0, %s146
      %s150 = sphi 0, %s149
      %s166 = sphi 0, %s150
      %s170 = sphi 0, %s170
      %s172 = sphi 0, %s170
      %s173 = sphi 0, %s172
      %s187 = sphi 0, %s173
      %s193 = sphi 0, %s195
      %s196 = sphi 0, %s193
      %s197 = sphi 0, %s196
      %s213 = sphi 0, %s197
    $region4: #{tpu_custom_call.1} parent=1 // loop_header_branch
      %23 = sbr.rel (%p21) target = $region8
    $region5: #{tpu_custom_call.1} parent=1 // loop_body
      %s25 = ssub.s32 %s20, 1
      %s26 = ssub.s32 %s20, 2
      %s33 = sadd.s32 1, %s28
      %p34 = scmp.ge.s32.totalorder %s33, 5
      %s35 = scalar_select %p34, 0, %s33
      %s36 = sadd.s32 1, %s27
      %s37 = scalar_select %p34, %s36, %s27
      %p38 = scmp.ge.s32.totalorder %s37, 1
      %s39 = scalar_select %p38, 0, %s37
      %s40 = ssub.s32 %s27, %s39
      %p41 = scmp.eq.s32.totalorder %s40, 0
      %s43 = sadd.s32 %s42, 1
      %s44 = scalar_select %p41, %s42, %s43
      %p47 = pneg %p41
      %p48 = scmp.eq.s32.totalorder %s20, 4
      %p49 = por %p47, %p48
      %p50 = scmp.ne.s32.totalorder %s42, %s45
      %p51 = scmp.eq.s32.totalorder %s20, 0
      %p52 = por %p50, %p51
      %p53 = scmp.ne.s32.totalorder %s42, %s45
      %p54 = scmp.eq.s32.totalorder %s25, 4
      %p55 = por %p53, %p54
      %p56 = scmp.ne.s32.totalorder %s45, %s46
      %p57 = scmp.eq.s32.totalorder %s25, 0
      %p58 = por %p56, %p57
      %p59 = scmp.ne.s32.totalorder %s45, %s46
      %p60 = scmp.eq.s32.totalorder %s26, 4
      %p61 = por %p59, %p60
      %p63 = scmp.ne.s32.totalorder %s46, %s62
      %p64 = scmp.eq.s32.totalorder %s26, 0
      %p65 = por %p63, %p64
      %s66 = ssub.s32 %s28, %s35
      %p67 = scmp.eq.s32.totalorder %s66, 0
      %s69 = sadd.s32 %s68, 1
      %s70 = scalar_select %p67, %s68, %s69
      %p73 = pneg %p67
      %p74 = scmp.eq.s32.totalorder %s20, 4
      %p75 = por %p73, %p74
      %p76 = scmp.ne.s32.totalorder %s68, %s71
      %p77 = scmp.eq.s32.totalorder %s20, 0
      %p78 = por %p76, %p77
      %p79 = scmp.ne.s32.totalorder %s68, %s71
      %p80 = scmp.eq.s32.totalorder %s25, 4
      %p81 = por %p79, %p80
      %p82 = scmp.ne.s32.totalorder %s71, %s72
      %p83 = scmp.eq.s32.totalorder %s25, 0
      %p84 = por %p82, %p83
      %p85 = scmp.ne.s32.totalorder %s71, %s72
      %p86 = scmp.eq.s32.totalorder %s26, 4
      %p87 = por %p85, %p86
      %p89 = scmp.ne.s32.totalorder %s72, %s88
      %p90 = scmp.eq.s32.totalorder %s26, 0
      %p91 = por %p89, %p90
      %s92 = ssub.s32 %s28, %s35
      %p93 = scmp.eq.s32.totalorder %s92, 0
      %s95 = sadd.s32 %s94, 1
      %s96 = scalar_select %p93, %s94, %s95
      %p99 = pneg %p93
      %p100 = scmp.eq.s32.totalorder %s20, 4
      %p101 = por %p99, %p100
      %p102 = scmp.ne.s32.totalorder %s94, %s97
      %p103 = scmp.eq.s32.totalorder %s20, 0
      %p104 = por %p102, %p103
      %p105 = scmp.ne.s32.totalorder %s94, %s97
      %p106 = scmp.eq.s32.totalorder %s25, 4
      %p107 = por %p105, %p106
      %p108 = scmp.ne.s32.totalorder %s97, %s98
      %p109 = scmp.eq.s32.totalorder %s25, 0
      %p110 = por %p108, %p109
      %p111 = scmp.ne.s32.totalorder %s97, %s98
      %p112 = scmp.eq.s32.totalorder %s26, 4
      %p113 = por %p111, %p112
      %p115 = scmp.ne.s32.totalorder %s98, %s114
      %p116 = scmp.eq.s32.totalorder %s26, 0
      %p117 = por %p115, %p116
      %s118 = ssub.s32 %s28, %s35
      %p119 = scmp.eq.s32.totalorder %s118, 0
      %s121 = sadd.s32 %s120, 1
      %s122 = scalar_select %p119, %s120, %s121
      %p125 = pneg %p119
      %p126 = scmp.eq.s32.totalorder %s20, 4
      %p127 = por %p125, %p126
      %p128 = scmp.ne.s32.totalorder %s120, %s123
      %p129 = scmp.eq.s32.totalorder %s20, 0
      %p130 = por %p128, %p129
      %p131 = scmp.ne.s32.totalorder %s120, %s123
      %p132 = scmp.eq.s32.totalorder %s25, 4
      %p133 = por %p131, %p132
      %p134 = scmp.ne.s32.totalorder %s123, %s124
      %p135 = scmp.eq.s32.totalorder %s25, 0
      %p136 = por %p134, %p135
      %p137 = scmp.ne.s32.totalorder %s123, %s124
      %p138 = scmp.eq.s32.totalorder %s26, 4
      %p139 = por %p137, %p138
      %p141 = scmp.ne.s32.totalorder %s124, %s140
      %p142 = scmp.eq.s32.totalorder %s26, 0
      %p143 = por %p141, %p142
      %s144 = ssub.s32 %s28, %s35
      %p145 = scmp.eq.s32.totalorder %s144, 0
      %s147 = sadd.s32 %s146, 1
      %s148 = scalar_select %p145, %s146, %s147
      %p151 = pneg %p145
      %p152 = scmp.eq.s32.totalorder %s20, 4
      %p153 = por %p151, %p152
      %p154 = scmp.ne.s32.totalorder %s146, %s149
      %p155 = scmp.eq.s32.totalorder %s20, 0
      %p156 = por %p154, %p155
      %p157 = scmp.ne.s32.totalorder %s146, %s149
      %p158 = scmp.eq.s32.totalorder %s25, 4
      %p159 = por %p157, %p158
      %p160 = scmp.ne.s32.totalorder %s149, %s150
      %p161 = scmp.eq.s32.totalorder %s25, 0
      %p162 = por %p160, %p161
      %p163 = scmp.ne.s32.totalorder %s149, %s150
      %p164 = scmp.eq.s32.totalorder %s26, 4
      %p165 = por %p163, %p164
      %p167 = scmp.ne.s32.totalorder %s150, %s166
      %p168 = scmp.eq.s32.totalorder %s26, 0
      %p169 = por %p167, %p168
      %s171 = sadd.s32 %s170, 1
      %p174 = scmp.eq.s32.totalorder %s20, 4
      %p175 = scmp.ne.s32.totalorder %s170, %s172
      %p176 = scmp.eq.s32.totalorder %s20, 0
      %p177 = por %p175, %p176
      %p178 = scmp.ne.s32.totalorder %s170, %s172
      %p179 = scmp.eq.s32.totalorder %s25, 4
      %p180 = por %p178, %p179
      %p181 = scmp.ne.s32.totalorder %s172, %s173
      %p182 = scmp.eq.s32.totalorder %s25, 0
      %p183 = por %p181, %p182
      %p184 = scmp.ne.s32.totalorder %s172, %s173
      %p185 = scmp.eq.s32.totalorder %s26, 4
      %p186 = por %p184, %p185
      %p188 = scmp.ne.s32.totalorder %s173, %s187
      %p189 = scmp.eq.s32.totalorder %s26, 0
      %p190 = por %p188, %p189
      %s191 = ssub.s32 %s27, %s39
      %p192 = scmp.eq.s32.totalorder %s191, 0
      %s194 = sadd.s32 %s193, 1
      %s195 = scalar_select %p192, %s193, %s194
      %p198 = pneg %p192
      %p199 = scmp.eq.s32.totalorder %s20, 4
      %p200 = por %p198, %p199
      %p201 = scmp.ne.s32.totalorder %s193, %s196
      %p202 = scmp.eq.s32.totalorder %s20, 0
      %p203 = por %p201, %p202
      %p204 = scmp.ne.s32.totalorder %s193, %s196
      %p205 = scmp.eq.s32.totalorder %s25, 4
      %p206 = por %p204, %p205
      %p207 = scmp.ne.s32.totalorder %s196, %s197
      %p208 = scmp.eq.s32.totalorder %s25, 0
      %p209 = por %p207, %p208
      %p210 = scmp.ne.s32.totalorder %s196, %s197
      %p211 = scmp.eq.s32.totalorder %s26, 4
      %p212 = por %p210, %p211
      %p214 = scmp.ne.s32.totalorder %s197, %s213
      %p215 = scmp.eq.s32.totalorder %s26, 0
      %p216 = por %p214, %p215
      %p217 = scmp.le.s32.totalorder 1, %s20
      %p218 = scmp.lt.s32.totalorder %s20, 6
      %p219 = pnand %p217, %p218
      %p220 = pneg %p219
      // Predicated region
      $region9: #{tpu_custom_call.1} parent=5 // pred_check
        _
      $region10: #{tpu_custom_call.1} parent=5 // pred_check_branch
        %222 = sbr.rel (%p219) target = $region12
      $region11: #{tpu_custom_call.1} parent=5 // pred_region
        %s223 = ssub.s32 %s20, 1
        // Predicated region
        $region13: #{tpu_custom_call.1} parent=11 // pred_check
          %p224 = pneg %p58
        $region14: #{tpu_custom_call.1} parent=11 // pred_check_branch
          %226 = sbr.rel (%p224) target = $region16
        $region15: #{tpu_custom_call.1} parent=11 // pred_region
          %s227 = smul.u32 2, %s29
          %s229 = ssub.s32 1024, 1024
          %230 = vsyncadd [#allocation5], %s229
          %s231 = smul.addr %s227, 8
          %s232 = smul.addr %s231, 64
          %s233 = scalar_lea.hbm %s0, %s232
          %s234 = sshll.u32 [#allocation4], 4
          %s235 = int_to_ptr.vmem [resolvable:$true] %s234
          %240 = dma.hbm_to_vmem [thread:$0]  %s233, 1024, %s235, [#allocation5], 64, 64, 4
        $region16: #{tpu_custom_call.1} parent=11 // pred_fallthru
          _
        // Predicated region
        $region17: #{tpu_custom_call.1} parent=11 // pred_check
          %p241 = pneg %p183
        $region18: #{tpu_custom_call.1} parent=11 // pred_check_branch
          %243 = sbr.rel (%p241) target = $region20
        $region19: #{tpu_custom_call.1} parent=11 // pred_region
          _
        $region20: #{tpu_custom_call.1} parent=11 // pred_fallthru
          _
      $region12: #{tpu_custom_call.1} parent=5 // pred_fallthru
        _
      %p244 = scmp.lt.s32.totalorder %s20, 5
      // Predicated region
      $region21: #{tpu_custom_call.1} parent=5 // pred_check
        %p245 = pneg %p244
      $region22: #{tpu_custom_call.1} parent=5 // pred_check_branch
        %247 = sbr.rel (%p245) target = $region24
      $region23: #{tpu_custom_call.1} parent=5 // pred_region
        // Predicated region
        $region25: #{tpu_custom_call.1} parent=23 // pred_check
          %p248 = pneg %p78
        $region26: #{tpu_custom_call.1} parent=23 // pred_check_branch
          %250 = sbr.rel (%p248) target = $region28
        $region27: #{tpu_custom_call.1} parent=23 // pred_region
          %s251 = sand.u32 %s20, 1
          %s252 = scalar_lea.sflag [#allocation7], %s251
          %s253 = sand.u32 %s68, 1
          %s254 = smul.addr %s253, 576
          %s255 = scalar_lea.vmem [#allocation6], %s254
          %s257 = ssub.s32 9216, 9216
          %258 = vsyncadd %s252, %s257
          %s259 = smul.addr %s28, 144
          %s260 = smul.addr %s259, 64
          %s261 = scalar_lea.hbm %s1, %s260
          %s262 = sshll.u32 %s255, 4
          %s263 = int_to_ptr.vmem [resolvable:$true] %s262
          %268 = dma.hbm_to_vmem [thread:$0]  %s261, 9216, %s263, %s252, 64, 64, 4
        $region28: #{tpu_custom_call.1} parent=23 // pred_fallthru
          _
        // Predicated region
        $region29: #{tpu_custom_call.1} parent=23 // pred_check
          %p269 = pneg %p104
        $region30: #{tpu_custom_call.1} parent=23 // pred_check_branch
          %271 = sbr.rel (%p269) target = $region32
        $region31: #{tpu_custom_call.1} parent=23 // pred_region
          %s272 = sand.u32 %s20, 1
          %s273 = scalar_lea.sflag [#allocation7], %s272
          %s274 = sand.u32 %s94, 1
          %s275 = scalar_lea.vmem [#allocation8], %s274
          %s277 = ssub.s32 16, 16
          %278 = vsyncadd %s273, %s277
          %s279 = smul.addr %s28, 16
          %s280 = scalar_lea.hbm %s2, %s279
          %s282 = sshll.u32 %s275, 4
          %s283 = int_to_ptr.vmem [resolvable:$true] %s282
          %285 = dma.hbm_to_vmem [thread:$0]  %s280, 16, %s283, %s273
        $region32: #{tpu_custom_call.1} parent=23 // pred_fallthru
          _
        // Predicated region
        $region33: #{tpu_custom_call.1} parent=23 // pred_check
          %p286 = pneg %p130
        $region34: #{tpu_custom_call.1} parent=23 // pred_check_branch
          %288 = sbr.rel (%p286) target = $region36
        $region35: #{tpu_custom_call.1} parent=23 // pred_region
          %s289 = sand.u32 %s20, 1
          %s290 = scalar_lea.sflag [#allocation10], %s289
          %s291 = sand.u32 %s120, 1
          %s292 = scalar_lea.vmem [#allocation9], %s291
          %s294 = ssub.s32 16, 16
          %295 = vsyncadd %s290, %s294
          %s296 = smul.addr %s28, 16
          %s297 = scalar_lea.hbm %s3, %s296
          %s299 = sshll.u32 %s292, 4
          %s300 = int_to_ptr.vmem [resolvable:$true] %s299
          %302 = dma.hbm_to_vmem [thread:$0]  %s297, 16, %s300, %s290
        $region36: #{tpu_custom_call.1} parent=23 // pred_fallthru
          _
        // Predicated region
        $region37: #{tpu_custom_call.1} parent=23 // pred_check
          %p303 = pneg %p156
        $region38: #{tpu_custom_call.1} parent=23 // pred_check_branch
          %305 = sbr.rel (%p303) target = $region40
        $region39: #{tpu_custom_call.1} parent=23 // pred_region
          %s306 = sand.u32 %s20, 1
          %s307 = scalar_lea.sflag [#allocation10], %s306
          %s308 = sand.u32 %s146, 1
          %s309 = scalar_lea.vmem [#allocation11], %s308
          %s311 = ssub.s32 16, 16
          %312 = vsyncadd %s307, %s311
          %s313 = smul.addr %s28, 16
          %s314 = scalar_lea.hbm %s4, %s313
          %s316 = sshll.u32 %s309, 4
          %s317 = int_to_ptr.vmem [resolvable:$true] %s316
          %319 = dma.hbm_to_vmem [thread:$0]  %s314, 16, %s317, %s307
        $region40: #{tpu_custom_call.1} parent=23 // pred_fallthru
          _
      $region24: #{tpu_custom_call.1} parent=5 // pred_fallthru
        _
      %p320 = scmp.le.s32.totalorder 1, %s20
      %p321 = scmp.lt.s32.totalorder %s20, 6
      %p322 = pnand %p320, %p321
      %p323 = pneg %p322
      // Predicated region
      $region41: #{tpu_custom_call.1} parent=5 // pred_check
        _
      $region42: #{tpu_custom_call.1} parent=5 // pred_check_branch
        %325 = sbr.rel (%p322) target = $region44
      $region43: #{tpu_custom_call.1} parent=5 // pred_region
        %s326 = ssub.s32 %s20, 1
        // Predicated region
        $region45: #{tpu_custom_call.1} parent=43 // pred_check
          %p327 = pneg %p58
        $region46: #{tpu_custom_call.1} parent=43 // pred_check_branch
          %329 = sbr.rel (%p327) target = $region48
        $region47: #{tpu_custom_call.1} parent=43 // pred_region
          %330 = dma.done [#allocation5], 1024
        $region48: #{tpu_custom_call.1} parent=43 // pred_fallthru
          _
        %s331 = sand.u32 %s25, 1
        %s332 = scalar_lea.sflag [#allocation7], %s331
        %s333 = sand.u32 %s71, 1
        %s334 = smul.addr %s333, 576
        %s335 = scalar_lea.vmem [#allocation6], %s334
        // Predicated region
        $region49: #{tpu_custom_call.1} parent=43 // pred_check
          %p336 = pneg %p84
        $region50: #{tpu_custom_call.1} parent=43 // pred_check_branch
          %338 = sbr.rel (%p336) target = $region52
        $region51: #{tpu_custom_call.1} parent=43 // pred_region
          %339 = dma.done %s332, 9216
        $region52: #{tpu_custom_call.1} parent=43 // pred_fallthru
          _
        %s340 = sand.u32 %s25, 1
        %s341 = scalar_lea.sflag [#allocation7], %s340
        %s342 = sand.u32 %s97, 1
        %s343 = scalar_lea.vmem [#allocation8], %s342
        // Predicated region
        $region53: #{tpu_custom_call.1} parent=43 // pred_check
          %p344 = pneg %p110
        $region54: #{tpu_custom_call.1} parent=43 // pred_check_branch
          %346 = sbr.rel (%p344) target = $region56
        $region55: #{tpu_custom_call.1} parent=43 // pred_region
          %347 = dma.done %s341, 16
        $region56: #{tpu_custom_call.1} parent=43 // pred_fallthru
          _
        %s348 = sand.u32 %s25, 1
        %s349 = scalar_lea.sflag [#allocation10], %s348
        %s350 = sand.u32 %s123, 1
        %s351 = scalar_lea.vmem [#allocation9], %s350
        // Predicated region
        $region57: #{tpu_custom_call.1} parent=43 // pred_check
          %p352 = pneg %p136
        $region58: #{tpu_custom_call.1} parent=43 // pred_check_branch
          %354 = sbr.rel (%p352) target = $region60
        $region59: #{tpu_custom_call.1} parent=43 // pred_region
          %355 = dma.done %s349, 16
        $region60: #{tpu_custom_call.1} parent=43 // pred_fallthru
          _
        %s356 = sand.u32 %s25, 1
        %s357 = scalar_lea.sflag [#allocation10], %s356
        %s358 = sand.u32 %s149, 1
        %s359 = scalar_lea.vmem [#allocation11], %s358
        // Predicated region
        $region61: #{tpu_custom_call.1} parent=43 // pred_check
          %p360 = pneg %p162
        $region62: #{tpu_custom_call.1} parent=43 // pred_check_branch
          %362 = sbr.rel (%p360) target = $region64
        $region63: #{tpu_custom_call.1} parent=43 // pred_region
          %363 = dma.done %s357, 16
        $region64: #{tpu_custom_call.1} parent=43 // pred_fallthru
          _
        %p364 = pneg %p58
        %p365 = pneg %p55
        %s366 = sand.u32 %s25, 1
        %s367 = scalar_lea.sflag [#allocation7], %s366
        %s368 = sand.u32 %s71, 1
        %s369 = smul.addr %s368, 576
        %s370 = scalar_lea.vmem [#allocation6], %s369
        %p371 = pneg %p84
        %p372 = pneg %p81
        %s373 = sand.u32 %s25, 1
        %s374 = scalar_lea.sflag [#allocation7], %s373
        %s375 = sand.u32 %s97, 1
        %s376 = scalar_lea.vmem [#allocation8], %s375
        %p377 = pneg %p110
        %p378 = pneg %p107
        %s379 = sand.u32 %s25, 1
        %s380 = scalar_lea.sflag [#allocation10], %s379
        %s381 = sand.u32 %s123, 1
        %s382 = scalar_lea.vmem [#allocation9], %s381
        %p383 = pneg %p136
        %p384 = pneg %p133
        %s385 = sand.u32 %s25, 1
        %s386 = scalar_lea.sflag [#allocation10], %s385
        %s387 = sand.u32 %s149, 1
        %s388 = scalar_lea.vmem [#allocation11], %s387
        %p389 = pneg %p162
        %p390 = pneg %p159
        %p391 = pneg %p183
        %p392 = pneg %p180
        %p393 = pneg %p209
        %p394 = pneg %p206
        %s395 = smul.u32 2, %s29
        %p396 = scmp.lt.s32.totalorder %s395, 1
        %s397 = scalar_select %p396, %s395, 1
        %s398 = smul.addr %s397, 2
        %s399 = smul.addr %s398, 8
        %s400 = scalar_lea.vmem %s6, %s399
        %s401 = smul.u32 2, %s29
        %s402 = smul.u32 2, %s29
        %p403 = scmp.lt.s32.totalorder %s402, 1
        %s404 = scalar_select %p403, %s402, 1
        %s405 = smul.addr %s404, 2
        %s406 = smul.addr %s405, 8
        %s407 = scalar_lea.vmem %s6, %s406
        %s408 = smul.u32 2, %s29
        %p410 = scmp.eq.s32.totalorder %s30, 0
        // Predicated region
        $region65: #{tpu_custom_call.1} parent=43 // pred_check
          %p411 = pneg %p410
        $region66: #{tpu_custom_call.1} parent=43 // pred_check_branch
          %413 = sbr.rel (%p411) target = $region68
        $region67: #{tpu_custom_call.1} parent=43 // pred_region
          %414 = vst [vmem:[#allocation2] sm:$0xf] 0
          %415 = vst [vmem:[#allocation2 + $0x4] sm:$0x1] 0
          %416 = vst [vmem:[#allocation2 + $0x50] sm:$0xf] 0
          %417 = vst [vmem:[#allocation2 + $0x54] sm:$0x1] 0
          %s418 = scalar_lea.vmem [#allocation2], 72
          %419 = vst [vmem:[%s418] sm:$0xf] 0
          %420 = vst [vmem:[%s418 + $0x4] sm:$0x1] 0
          %421 = vst [vmem:[%s418 + $0x50] sm:$0xf] 0
          %422 = vst [vmem:[%s418 + $0x54] sm:$0x1] 0
          %vm423 = vcmask 1040384
          %vm424 = vsmask.f32 256
          %vm425 = vmand %vm423, %vm424
          %v426 = vld [vmem:[#allocation2] sm:$0x1]
          %v427 = vsel %vm425, 0, %v426
          %428 = vst [vmem:[#allocation2] sm:$0x1] %v427
          %v429 = vld [vmem:[#allocation2 + $0x8] sm:$0x1]
          %v430 = vsel %vm425, 0, %v429
          %431 = vst [vmem:[#allocation2 + $0x8] sm:$0x1] %v430
          %v432 = vld [vmem:[#allocation2 + $0x10] sm:$0x1]
          %v433 = vsel %vm425, 0, %v432
          %434 = vst [vmem:[#allocation2 + $0x10] sm:$0x1] %v433
          %v435 = vld [vmem:[#allocation2 + $0x18] sm:$0x1]
          %v436 = vsel %vm425, 0, %v435
          %437 = vst [vmem:[#allocation2 + $0x18] sm:$0x1] %v436
          %v438 = vld [vmem:[#allocation2 + $0x20] sm:$0x1]
          %v439 = vsel %vm425, 0, %v438
          %440 = vst [vmem:[#allocation2 + $0x20] sm:$0x1] %v439
          %v441 = vld [vmem:[#allocation2 + $0x28] sm:$0x1]
          %v442 = vsel %vm425, 0, %v441
          %443 = vst [vmem:[#allocation2 + $0x28] sm:$0x1] %v442
          %v444 = vld [vmem:[#allocation2 + $0x30] sm:$0x1]
          %v445 = vsel %vm425, 0, %v444
          %446 = vst [vmem:[#allocation2 + $0x30] sm:$0x1] %v445
          %v447 = vld [vmem:[#allocation2 + $0x38] sm:$0x1]
          %v448 = vsel %vm425, 0, %v447
          %449 = vst [vmem:[#allocation2 + $0x38] sm:$0x1] %v448
          %v450 = vld [vmem:[#allocation2 + $0x40] sm:$0x1]
          %v451 = vsel %vm425, 0, %v450
          %452 = vst [vmem:[#allocation2 + $0x40] sm:$0x1] %v451
          %v453 = vld [vmem:[#allocation2 + $0x48] sm:$0x1]
          %v454 = vsel %vm425, 0, %v453
          %455 = vst [vmem:[#allocation2 + $0x48] sm:$0x1] %v454
          %v456 = vld [vmem:[#allocation2 + $0x50] sm:$0x1]
          %v457 = vsel %vm425, 0, %v456
          %458 = vst [vmem:[#allocation2 + $0x50] sm:$0x1] %v457
          %v459 = vld [vmem:[#allocation2 + $0x58] sm:$0x1]
          %v460 = vsel %vm425, 0, %v459
          %461 = vst [vmem:[#allocation2 + $0x58] sm:$0x1] %v460
          %v462 = vld [vmem:[#allocation2 + $0x60] sm:$0x1]
          %v463 = vsel %vm425, 0, %v462
          %464 = vst [vmem:[#allocation2 + $0x60] sm:$0x1] %v463
          %v465 = vld [vmem:[#allocation2 + $0x68] sm:$0x1]
          %v466 = vsel %vm425, 0, %v465
          %467 = vst [vmem:[#allocation2 + $0x68] sm:$0x1] %v466
          %v468 = vld [vmem:[#allocation2 + $0x70] sm:$0x1]
          %v469 = vsel %vm425, 0, %v468
          %470 = vst [vmem:[#allocation2 + $0x70] sm:$0x1] %v469
          %v471 = vld [vmem:[#allocation2 + $0x78] sm:$0x1]
          %v472 = vsel %vm425, 0, %v471
          %473 = vst [vmem:[#allocation2 + $0x78] sm:$0x1] %v472
          %v474 = vld [vmem:[#allocation2 + $0x80] sm:$0x1]
          %v475 = vsel %vm425, 0, %v474
          %476 = vst [vmem:[#allocation2 + $0x80] sm:$0x1] %v475
          %v477 = vld [vmem:[#allocation2 + $0x88] sm:$0x1]
          %v478 = vsel %vm425, 0, %v477
          %479 = vst [vmem:[#allocation2 + $0x88] sm:$0x1] %v478
          %v480 = vld [vmem:[#allocation2 + $0x90] sm:$0x1]
          %v481 = vsel %vm425, 0, %v480
          %482 = vst [vmem:[#allocation2 + $0x90] sm:$0x1] %v481
          %v483 = vld [vmem:[#allocation2 + $0x98] sm:$0x1]
          %v484 = vsel %vm425, 0, %v483
          %485 = vst [vmem:[#allocation2 + $0x98] sm:$0x1] %v484
          %vm486 = vsmask.f32 7938
          %vm487 = vmand %vm423, %vm486
          %v488 = vld [vmem:[#allocation2 + $0x4] sm:$0x1]
          %v489 = vsel %vm487, 0, %v488
          %490 = vst [vmem:[#allocation2 + $0x4] sm:$0x1] %v489
          %v491 = vld [vmem:[#allocation2 + $0xc] sm:$0x1]
          %v492 = vsel %vm487, 0, %v491
          %493 = vst [vmem:[#allocation2 + $0xc] sm:$0x1] %v492
          %v494 = vld [vmem:[#allocation2 + $0x14] sm:$0x1]
          %v495 = vsel %vm487, 0, %v494
          %496 = vst [vmem:[#allocation2 + $0x14] sm:$0x1] %v495
          %v497 = vld [vmem:[#allocation2 + $0x1c] sm:$0x1]
          %v498 = vsel %vm487, 0, %v497
          %499 = vst [vmem:[#allocation2 + $0x1c] sm:$0x1] %v498
          %v500 = vld [vmem:[#allocation2 + $0x24] sm:$0x1]
          %v501 = vsel %vm487, 0, %v500
          %502 = vst [vmem:[#allocation2 + $0x24] sm:$0x1] %v501
          %v503 = vld [vmem:[#allocation2 + $0x2c] sm:$0x1]
          %v504 = vsel %vm487, 0, %v503
          %505 = vst [vmem:[#allocation2 + $0x2c] sm:$0x1] %v504
          %v506 = vld [vmem:[#allocation2 + $0x34] sm:$0x1]
          %v507 = vsel %vm487, 0, %v506
          %508 = vst [vmem:[#allocation2 + $0x34] sm:$0x1] %v507
          %v509 = vld [vmem:[#allocation2 + $0x3c] sm:$0x1]
          %v510 = vsel %vm487, 0, %v509
          %511 = vst [vmem:[#allocation2 + $0x3c] sm:$0x1] %v510
          %v512 = vld [vmem:[#allocation2 + $0x44] sm:$0x1]
          %v513 = vsel %vm487, 0, %v512
          %514 = vst [vmem:[#allocation2 + $0x44] sm:$0x1] %v513
          %v515 = vld [vmem:[#allocation2 + $0x4c] sm:$0x1]
          %v516 = vsel %vm487, 0, %v515
          %517 = vst [vmem:[#allocation2 + $0x4c] sm:$0x1] %v516
          %v518 = vld [vmem:[#allocation2 + $0x54] sm:$0x1]
          %v519 = vsel %vm487, 0, %v518
          %520 = vst [vmem:[#allocation2 + $0x54] sm:$0x1] %v519
          %v521 = vld [vmem:[#allocation2 + $0x5c] sm:$0x1]
          %v522 = vsel %vm487, 0, %v521
          %523 = vst [vmem:[#allocation2 + $0x5c] sm:$0x1] %v522
          %v524 = vld [vmem:[#allocation2 + $0x64] sm:$0x1]
          %v525 = vsel %vm487, 0, %v524
          %526 = vst [vmem:[#allocation2 + $0x64] sm:$0x1] %v525
          %v527 = vld [vmem:[#allocation2 + $0x6c] sm:$0x1]
          %v528 = vsel %vm487, 0, %v527
          %529 = vst [vmem:[#allocation2 + $0x6c] sm:$0x1] %v528
          %v530 = vld [vmem:[#allocation2 + $0x74] sm:$0x1]
          %v531 = vsel %vm487, 0, %v530
          %532 = vst [vmem:[#allocation2 + $0x74] sm:$0x1] %v531
          %v533 = vld [vmem:[#allocation2 + $0x7c] sm:$0x1]
          %v534 = vsel %vm487, 0, %v533
          %535 = vst [vmem:[#allocation2 + $0x7c] sm:$0x1] %v534
          %v536 = vld [vmem:[#allocation2 + $0x84] sm:$0x1]
          %v537 = vsel %vm487, 0, %v536
          %538 = vst [vmem:[#allocation2 + $0x84] sm:$0x1] %v537
          %v539 = vld [vmem:[#allocation2 + $0x8c] sm:$0x1]
          %v540 = vsel %vm487, 0, %v539
          %541 = vst [vmem:[#allocation2 + $0x8c] sm:$0x1] %v540
          %v542 = vld [vmem:[#allocation2 + $0x94] sm:$0x1]
          %v543 = vsel %vm487, 0, %v542
          %544 = vst [vmem:[#allocation2 + $0x94] sm:$0x1] %v543
          %v545 = vld [vmem:[#allocation2 + $0x9c] sm:$0x1]
          %v546 = vsel %vm487, 0, %v545
          %547 = vst [vmem:[#allocation2 + $0x9c] sm:$0x1] %v546
          %v548 = vld [vmem:[#allocation4] sm:$0xf]
          %v549 = vld [vmem:[#allocation4 + $0x4] sm:$0xf]
          %v550 = vld [vmem:[#allocation4 + $0x8] sm:$0xf]
          %v551 = vld [vmem:[#allocation4 + $0xc] sm:$0xf]
          %v552 = vld [vmem:[#allocation4 + $0x10] sm:$0xf]
          %v553 = vld [vmem:[#allocation4 + $0x14] sm:$0xf]
          %v554 = vld [vmem:[#allocation4 + $0x18] sm:$0xf]
          %v555 = vld [vmem:[#allocation4 + $0x1c] sm:$0xf]
          %v556 = vld [vmem:[#allocation4 + $0x20] sm:$0xf]
          %v557 = vld [vmem:[#allocation4 + $0x24] sm:$0xf]
          %v558 = vld [vmem:[#allocation4 + $0x28] sm:$0xf]
          %v559 = vld [vmem:[#allocation4 + $0x2c] sm:$0xf]
          %v560 = vld [vmem:[#allocation4 + $0x30] sm:$0xf]
          %v561 = vld [vmem:[#allocation4 + $0x34] sm:$0xf]
          %v562 = vld [vmem:[#allocation4 + $0x38] sm:$0xf]
          %v563 = vld [vmem:[#allocation4 + $0x3c] sm:$0xf]
          %v580 = vunpack.c.l.b16 %v548
          %v581 = vunpack.c.l.b16 %v549
          %v582 = vunpack.c.l.b16 %v550
          %v583 = vunpack.c.l.b16 %v551
          %v584 = vunpack.c.l.b16 %v552
          %v585 = vunpack.c.l.b16 %v553
          %v586 = vunpack.c.l.b16 %v554
          %v587 = vunpack.c.l.b16 %v555
          %v588 = vunpack.c.l.b16 %v556
          %v589 = vunpack.c.l.b16 %v557
          %v590 = vunpack.c.l.b16 %v558
          %v591 = vunpack.c.l.b16 %v559
          %v592 = vunpack.c.l.b16 %v560
          %v593 = vunpack.c.l.b16 %v561
          %v594 = vunpack.c.l.b16 %v562
          %v595 = vunpack.c.l.b16 %v563
          %v596 = vpack.c.b16 %v580, %v580
          %v597 = vpack.c.b16 %v581, %v581
          %v598 = vpack.c.b16 %v582, %v582
          %v599 = vpack.c.b16 %v583, %v583
          %v600 = vpack.c.b16 %v584, %v584
          %v601 = vpack.c.b16 %v585, %v585
          %v602 = vpack.c.b16 %v586, %v586
          %v603 = vpack.c.b16 %v587, %v587
          %v604 = vpack.c.b16 %v588, %v588
          %v605 = vpack.c.b16 %v589, %v589
          %v606 = vpack.c.b16 %v590, %v590
          %v607 = vpack.c.b16 %v591, %v591
          %v608 = vpack.c.b16 %v592, %v592
          %v609 = vpack.c.b16 %v593, %v593
          %v610 = vpack.c.b16 %v594, %v594
          %v611 = vpack.c.b16 %v595, %v595
          %612 = vrot.lane.b32.xlu0 %v596, 64
          %v613 = vpop.permute.xlu0 %612
          %614 = vrot.lane.b32.xlu0 %v597, 64
          %v615 = vpop.permute.xlu0 %614
          %616 = vrot.lane.b32.xlu0 %v598, 64
          %v617 = vpop.permute.xlu0 %616
          %618 = vrot.lane.b32.xlu0 %v599, 64
          %v619 = vpop.permute.xlu0 %618
          %620 = vrot.lane.b32.xlu0 %v600, 64
          %v621 = vpop.permute.xlu0 %620
          %622 = vrot.lane.b32.xlu0 %v601, 64
          %v623 = vpop.permute.xlu0 %622
          %624 = vrot.lane.b32.xlu0 %v602, 64
          %v625 = vpop.permute.xlu0 %624
          %626 = vrot.lane.b32.xlu0 %v603, 64
          %v627 = vpop.permute.xlu0 %626
          %628 = vrot.lane.b32.xlu0 %v604, 64
          %v629 = vpop.permute.xlu0 %628
          %630 = vrot.lane.b32.xlu0 %v605, 64
          %v631 = vpop.permute.xlu0 %630
          %632 = vrot.lane.b32.xlu0 %v606, 64
          %v633 = vpop.permute.xlu0 %632
          %634 = vrot.lane.b32.xlu0 %v607, 64
          %v635 = vpop.permute.xlu0 %634
          %636 = vrot.lane.b32.xlu0 %v608, 64
          %v637 = vpop.permute.xlu0 %636
          %638 = vrot.lane.b32.xlu0 %v609, 64
          %v639 = vpop.permute.xlu0 %638
          %640 = vrot.lane.b32.xlu0 %v610, 64
          %v641 = vpop.permute.xlu0 %640
          %642 = vrot.lane.b32.xlu0 %v611, 64
          %v643 = vpop.permute.xlu0 %642
          %vm644 = vcmask 523264
          %v647 = vsel %vm644, %v548, %v613
          %v650 = vsel %vm644, %v549, %v615
          %v653 = vsel %vm644, %v550, %v617
          %v656 = vsel %vm644, %v551, %v619
          %v659 = vsel %vm644, %v552, %v621
          %v662 = vsel %vm644, %v553, %v623
          %v665 = vsel %vm644, %v554, %v625
          %v668 = vsel %vm644, %v555, %v627
          %v671 = vsel %vm644, %v556, %v629
          %v674 = vsel %vm644, %v557, %v631
          %v677 = vsel %vm644, %v558, %v633
          %v680 = vsel %vm644, %v559, %v635
          %v683 = vsel %vm644, %v560, %v637
          %v686 = vsel %vm644, %v561, %v639
          %v689 = vsel %vm644, %v562, %v641
          %v692 = vsel %vm644, %v563, %v643
          %v709 = vunpack.c.l.b16 %v647
          %v710 = vunpack.c.l.b16 %v650
          %v711 = vunpack.c.l.b16 %v653
          %v712 = vunpack.c.l.b16 %v656
          %v713 = vunpack.c.l.b16 %v659
          %v714 = vunpack.c.l.b16 %v662
          %v715 = vunpack.c.l.b16 %v665
          %v716 = vunpack.c.l.b16 %v668
          %v717 = vunpack.c.l.b16 %v671
          %v718 = vunpack.c.l.b16 %v674
          %v719 = vunpack.c.l.b16 %v677
          %v720 = vunpack.c.l.b16 %v680
          %v721 = vunpack.c.l.b16 %v683
          %v722 = vunpack.c.l.b16 %v686
          %v723 = vunpack.c.l.b16 %v689
          %v724 = vunpack.c.l.b16 %v692
          %v725 = vpack.c.b16 %v709, %v709
          %v726 = vpack.c.b16 %v710, %v710
          %v727 = vpack.c.b16 %v711, %v711
          %v728 = vpack.c.b16 %v712, %v712
          %v729 = vpack.c.b16 %v713, %v713
          %v730 = vpack.c.b16 %v714, %v714
          %v731 = vpack.c.b16 %v715, %v715
          %v732 = vpack.c.b16 %v716, %v716
          %v733 = vpack.c.b16 %v717, %v717
          %v734 = vpack.c.b16 %v718, %v718
          %v735 = vpack.c.b16 %v719, %v719
          %v736 = vpack.c.b16 %v720, %v720
          %v737 = vpack.c.b16 %v721, %v721
          %v738 = vpack.c.b16 %v722, %v722
          %v739 = vpack.c.b16 %v723, %v723
          %v740 = vpack.c.b16 %v724, %v724
          %v742 = vshrl.u32 %v725, 16
          %v744 = vrot.slane %v742, 7
          %v745 = vshll.u32 %v725, 16
          %v747 = vor.u32 %v744, %v745
          %v748 = vrot.slane %v744, 4
          %v750 = vshrl.u32 %v726, 16
          %v752 = vrot.slane %v750, 7
          %v753 = vshll.u32 %v726, 16
          %v755 = vor.u32 %v752, %v753
          %v756 = vrot.slane %v752, 4
          %v758 = vshrl.u32 %v727, 16
          %v760 = vrot.slane %v758, 7
          %v761 = vshll.u32 %v727, 16
          %v763 = vor.u32 %v760, %v761
          %v764 = vrot.slane %v760, 4
          %v766 = vshrl.u32 %v728, 16
          %v768 = vrot.slane %v766, 7
          %v769 = vshll.u32 %v728, 16
          %v771 = vor.u32 %v768, %v769
          %v772 = vrot.slane %v768, 4
          %v774 = vshrl.u32 %v729, 16
          %v776 = vrot.slane %v774, 7
          %v777 = vshll.u32 %v729, 16
          %v779 = vor.u32 %v776, %v777
          %v780 = vrot.slane %v776, 4
          %v782 = vshrl.u32 %v730, 16
          %v784 = vrot.slane %v782, 7
          %v785 = vshll.u32 %v730, 16
          %v787 = vor.u32 %v784, %v785
          %v788 = vrot.slane %v784, 4
          %v790 = vshrl.u32 %v731, 16
          %v792 = vrot.slane %v790, 7
          %v793 = vshll.u32 %v731, 16
          %v795 = vor.u32 %v792, %v793
          %v796 = vrot.slane %v792, 4
          %v798 = vshrl.u32 %v732, 16
          %v800 = vrot.slane %v798, 7
          %v801 = vshll.u32 %v732, 16
          %v803 = vor.u32 %v800, %v801
          %v804 = vrot.slane %v800, 4
          %v806 = vshrl.u32 %v733, 16
          %v808 = vrot.slane %v806, 7
          %v809 = vshll.u32 %v733, 16
          %v811 = vor.u32 %v808, %v809
          %v812 = vrot.slane %v808, 4
          %v814 = vshrl.u32 %v734, 16
          %v816 = vrot.slane %v814, 7
          %v817 = vshll.u32 %v734, 16
          %v819 = vor.u32 %v816, %v817
          %v820 = vrot.slane %v816, 4
          %v822 = vshrl.u32 %v735, 16
          %v824 = vrot.slane %v822, 7
          %v825 = vshll.u32 %v735, 16
          %v827 = vor.u32 %v824, %v825
          %v828 = vrot.slane %v824, 4
          %v830 = vshrl.u32 %v736, 16
          %v832 = vrot.slane %v830, 7
          %v833 = vshll.u32 %v736, 16
          %v835 = vor.u32 %v832, %v833
          %v836 = vrot.slane %v832, 4
          %v838 = vshrl.u32 %v737, 16
          %v840 = vrot.slane %v838, 7
          %v841 = vshll.u32 %v737, 16
          %v843 = vor.u32 %v840, %v841
          %v844 = vrot.slane %v840, 4
          %v846 = vshrl.u32 %v738, 16
          %v848 = vrot.slane %v846, 7
          %v849 = vshll.u32 %v738, 16
          %v851 = vor.u32 %v848, %v849
          %v852 = vrot.slane %v848, 4
          %v854 = vshrl.u32 %v739, 16
          %v856 = vrot.slane %v854, 7
          %v857 = vshll.u32 %v739, 16
          %v859 = vor.u32 %v856, %v857
          %v860 = vrot.slane %v856, 4
          %v862 = vshrl.u32 %v740, 16
          %v864 = vrot.slane %v862, 7
          %v865 = vshll.u32 %v740, 16
          %v867 = vor.u32 %v864, %v865
          %v868 = vrot.slane %v864, 4
          %s901 = scalar_lea.vmem [#allocation2], 8
          %vm902 = vcmask 1043456
          %vm903 = vmand %vm902, %vm486
          %v904 = vld [vmem:[%s901] sm:$0xf]
          %v905 = vsel %vm903, %v747, %v904
          %906 = vst [vmem:[%s901] sm:$0xf] %v905
          %v907 = vld [vmem:[%s901 + $0x4] sm:$0x1]
          %v908 = vsel %vm425, %v748, %v907
          %909 = vst [vmem:[%s901 + $0x4] sm:$0x1] %v908
          %v910 = vld [vmem:[%s901 + $0x8] sm:$0xf]
          %v911 = vsel %vm903, %v755, %v910
          %912 = vst [vmem:[%s901 + $0x8] sm:$0xf] %v911
          %v913 = vld [vmem:[%s901 + $0xc] sm:$0x1]
          %v914 = vsel %vm425, %v756, %v913
          %915 = vst [vmem:[%s901 + $0xc] sm:$0x1] %v914
          %v916 = vld [vmem:[%s901 + $0x10] sm:$0xf]
          %v917 = vsel %vm903, %v763, %v916
          %918 = vst [vmem:[%s901 + $0x10] sm:$0xf] %v917
          %v919 = vld [vmem:[%s901 + $0x14] sm:$0x1]
          %v920 = vsel %vm425, %v764, %v919
          %921 = vst [vmem:[%s901 + $0x14] sm:$0x1] %v920
          %v922 = vld [vmem:[%s901 + $0x18] sm:$0xf]
          %v923 = vsel %vm903, %v771, %v922
          %924 = vst [vmem:[%s901 + $0x18] sm:$0xf] %v923
          %v925 = vld [vmem:[%s901 + $0x1c] sm:$0x1]
          %v926 = vsel %vm425, %v772, %v925
          %927 = vst [vmem:[%s901 + $0x1c] sm:$0x1] %v926
          %v928 = vld [vmem:[%s901 + $0x20] sm:$0xf]
          %v929 = vsel %vm903, %v779, %v928
          %930 = vst [vmem:[%s901 + $0x20] sm:$0xf] %v929
          %v931 = vld [vmem:[%s901 + $0x24] sm:$0x1]
          %v932 = vsel %vm425, %v780, %v931
          %933 = vst [vmem:[%s901 + $0x24] sm:$0x1] %v932
          %v934 = vld [vmem:[%s901 + $0x28] sm:$0xf]
          %v935 = vsel %vm903, %v787, %v934
          %936 = vst [vmem:[%s901 + $0x28] sm:$0xf] %v935
          %v937 = vld [vmem:[%s901 + $0x2c] sm:$0x1]
          %v938 = vsel %vm425, %v788, %v937
          %939 = vst [vmem:[%s901 + $0x2c] sm:$0x1] %v938
          %v940 = vld [vmem:[%s901 + $0x30] sm:$0xf]
          %v941 = vsel %vm903, %v795, %v940
          %942 = vst [vmem:[%s901 + $0x30] sm:$0xf] %v941
          %v943 = vld [vmem:[%s901 + $0x34] sm:$0x1]
          %v944 = vsel %vm425, %v796, %v943
          %945 = vst [vmem:[%s901 + $0x34] sm:$0x1] %v944
          %v946 = vld [vmem:[%s901 + $0x38] sm:$0xf]
          %v947 = vsel %vm903, %v803, %v946
          %948 = vst [vmem:[%s901 + $0x38] sm:$0xf] %v947
          %v949 = vld [vmem:[%s901 + $0x3c] sm:$0x1]
          %v950 = vsel %vm425, %v804, %v949
          %951 = vst [vmem:[%s901 + $0x3c] sm:$0x1] %v950
          %v952 = vld [vmem:[%s901 + $0x50] sm:$0xf]
          %v953 = vsel %vm903, %v811, %v952
          %954 = vst [vmem:[%s901 + $0x50] sm:$0xf] %v953
          %v955 = vld [vmem:[%s901 + $0x54] sm:$0x1]
          %v956 = vsel %vm425, %v812, %v955
          %957 = vst [vmem:[%s901 + $0x54] sm:$0x1] %v956
          %v958 = vld [vmem:[%s901 + $0x58] sm:$0xf]
          %v959 = vsel %vm903, %v819, %v958
          %960 = vst [vmem:[%s901 + $0x58] sm:$0xf] %v959
          %v961 = vld [vmem:[%s901 + $0x5c] sm:$0x1]
          %v962 = vsel %vm425, %v820, %v961
          %963 = vst [vmem:[%s901 + $0x5c] sm:$0x1] %v962
          %v964 = vld [vmem:[%s901 + $0x60] sm:$0xf]
          %v965 = vsel %vm903, %v827, %v964
          %966 = vst [vmem:[%s901 + $0x60] sm:$0xf] %v965
          %v967 = vld [vmem:[%s901 + $0x64] sm:$0x1]
          %v968 = vsel %vm425, %v828, %v967
          %969 = vst [vmem:[%s901 + $0x64] sm:$0x1] %v968
          %v970 = vld [vmem:[%s901 + $0x68] sm:$0xf]
          %v971 = vsel %vm903, %v835, %v970
          %972 = vst [vmem:[%s901 + $0x68] sm:$0xf] %v971
          %v973 = vld [vmem:[%s901 + $0x6c] sm:$0x1]
          %v974 = vsel %vm425, %v836, %v973
          %975 = vst [vmem:[%s901 + $0x6c] sm:$0x1] %v974
          %v976 = vld [vmem:[%s901 + $0x70] sm:$0xf]
          %v977 = vsel %vm903, %v843, %v976
          %978 = vst [vmem:[%s901 + $0x70] sm:$0xf] %v977
          %v979 = vld [vmem:[%s901 + $0x74] sm:$0x1]
          %v980 = vsel %vm425, %v844, %v979
          %981 = vst [vmem:[%s901 + $0x74] sm:$0x1] %v980
          %v982 = vld [vmem:[%s901 + $0x78] sm:$0xf]
          %v983 = vsel %vm903, %v851, %v982
          %984 = vst [vmem:[%s901 + $0x78] sm:$0xf] %v983
          %v985 = vld [vmem:[%s901 + $0x7c] sm:$0x1]
          %v986 = vsel %vm425, %v852, %v985
          %987 = vst [vmem:[%s901 + $0x7c] sm:$0x1] %v986
          %v988 = vld [vmem:[%s901 + $0x80] sm:$0xf]
          %v989 = vsel %vm903, %v859, %v988
          %990 = vst [vmem:[%s901 + $0x80] sm:$0xf] %v989
          %v991 = vld [vmem:[%s901 + $0x84] sm:$0x1]
          %v992 = vsel %vm425, %v860, %v991
          %993 = vst [vmem:[%s901 + $0x84] sm:$0x1] %v992
          %v994 = vld [vmem:[%s901 + $0x88] sm:$0xf]
          %v995 = vsel %vm903, %v867, %v994
          %996 = vst [vmem:[%s901 + $0x88] sm:$0xf] %v995
          %v997 = vld [vmem:[%s901 + $0x8c] sm:$0x1]
          %v998 = vsel %vm425, %v868, %v997
          %999 = vst [vmem:[%s901 + $0x8c] sm:$0x1] %v998
        $region68: #{tpu_custom_call.1} parent=43 // pred_fallthru
          _
        %v1000 = vld [vmem:[#allocation2] sm:$0xf]
        %v1001 = vld [vmem:[#allocation2 + $0x8] sm:$0xf]
        %v1002 = vld [vmem:[#allocation2 + $0x10] sm:$0xf]
        %v1003 = vld [vmem:[#allocation2 + $0x18] sm:$0xf]
        %v1004 = vld [vmem:[#allocation2 + $0x20] sm:$0xf]
        %v1005 = vld [vmem:[#allocation2 + $0x28] sm:$0xf]
        %v1006 = vld [vmem:[#allocation2 + $0x30] sm:$0xf]
        %v1007 = vld [vmem:[#allocation2 + $0x38] sm:$0xf]
        %v1008 = vld [vmem:[#allocation2 + $0x50] sm:$0xf]
        %v1009 = vld [vmem:[#allocation2 + $0x58] sm:$0xf]
        %v1010 = vld [vmem:[#allocation2 + $0x60] sm:$0xf]
        %v1011 = vld [vmem:[#allocation2 + $0x68] sm:$0xf]
        %v1012 = vld [vmem:[#allocation2 + $0x70] sm:$0xf]
        %v1013 = vld [vmem:[#allocation2 + $0x78] sm:$0xf]
        %v1014 = vld [vmem:[#allocation2 + $0x80] sm:$0xf]
        %v1015 = vld [vmem:[#allocation2 + $0x88] sm:$0xf]
        %v1016 = vld [vmem:[%s335] sm:$0xf]
        %v1017 = vld [vmem:[%s335 + $0x4] sm:$0xf]
        %v1018 = vld [vmem:[%s335 + $0x8] sm:$0xf]
        %v1019 = vld [vmem:[%s335 + $0xc] sm:$0xf]
        %v1020 = vld [vmem:[%s335 + $0x10] sm:$0xf]
        %v1021 = vld [vmem:[%s335 + $0x14] sm:$0xf]
        %v1022 = vld [vmem:[%s335 + $0x18] sm:$0xf]
        %v1023 = vld [vmem:[%s335 + $0x1c] sm:$0xf]
        %v1024 = vld [vmem:[%s335 + $0x20] sm:$0xf]
        %v1025 = vld [vmem:[%s335 + $0x24] sm:$0xf]
        %v1026 = vld [vmem:[%s335 + $0x28] sm:$0xf]
        %v1027 = vld [vmem:[%s335 + $0x2c] sm:$0xf]
        %v1028 = vld [vmem:[%s335 + $0x30] sm:$0xf]
        %v1029 = vld [vmem:[%s335 + $0x34] sm:$0xf]
        %v1030 = vld [vmem:[%s335 + $0x38] sm:$0xf]
        %v1031 = vld [vmem:[%s335 + $0x3c] sm:$0xf]
        %v1032 = vld [vmem:[#allocation2 + $0x4] sm:$0x1]
        %v1033 = vld [vmem:[#allocation2 + $0xc] sm:$0x1]
        %v1034 = vld [vmem:[#allocation2 + $0x14] sm:$0x1]
        %v1035 = vld [vmem:[#allocation2 + $0x1c] sm:$0x1]
        %v1036 = vld [vmem:[#allocation2 + $0x24] sm:$0x1]
        %v1037 = vld [vmem:[#allocation2 + $0x2c] sm:$0x1]
        %v1038 = vld [vmem:[#allocation2 + $0x34] sm:$0x1]
        %v1039 = vld [vmem:[#allocation2 + $0x3c] sm:$0x1]
        %v1040 = vld [vmem:[#allocation2 + $0x54] sm:$0x1]
        %v1041 = vld [vmem:[#allocation2 + $0x5c] sm:$0x1]
        %v1042 = vld [vmem:[#allocation2 + $0x64] sm:$0x1]
        %v1043 = vld [vmem:[#allocation2 + $0x6c] sm:$0x1]
        %v1044 = vld [vmem:[#allocation2 + $0x74] sm:$0x1]
        %v1045 = vld [vmem:[#allocation2 + $0x7c] sm:$0x1]
        %v1046 = vld [vmem:[#allocation2 + $0x84] sm:$0x1]
        %v1047 = vld [vmem:[#allocation2 + $0x8c] sm:$0x1]
        %vm1048 = vsmask.f32 3328
        %vm1049 = vsmask.f32 7440
        %vm1050 = vmor %vm1048, %vm1049
        %v1052 = vshrl.u32 %v1000, 16
        %v1054 = vrot.slane %v1052, 4
        %v1055 = vshll.u32 %v1000, 16
        %v1057 = vrot.slane %v1055, 5
        %v1058 = vor.u32 %v1054, %v1057
        %v1059 = vrot.slane %v1058, 4
        %v1061 = vshll.u32 %v1032, 16
        %v1063 = vrot.slane %v1061, 5
        %v1064 = vsel %vm1050, %v1059, %v1063
        %v1066 = vshrl.u32 %v1001, 16
        %v1068 = vrot.slane %v1066, 4
        %v1069 = vshll.u32 %v1001, 16
        %v1071 = vrot.slane %v1069, 5
        %v1072 = vor.u32 %v1068, %v1071
        %v1073 = vrot.slane %v1072, 4
        %v1075 = vshll.u32 %v1033, 16
        %v1077 = vrot.slane %v1075, 5
        %v1078 = vsel %vm1050, %v1073, %v1077
        %v1080 = vshrl.u32 %v1002, 16
        %v1082 = vrot.slane %v1080, 4
        %v1083 = vshll.u32 %v1002, 16
        %v1085 = vrot.slane %v1083, 5
        %v1086 = vor.u32 %v1082, %v1085
        %v1087 = vrot.slane %v1086, 4
        %v1089 = vshll.u32 %v1034, 16
        %v1091 = vrot.slane %v1089, 5
        %v1092 = vsel %vm1050, %v1087, %v1091
        %v1094 = vshrl.u32 %v1003, 16
        %v1096 = vrot.slane %v1094, 4
        %v1097 = vshll.u32 %v1003, 16
        %v1099 = vrot.slane %v1097, 5
        %v1100 = vor.u32 %v1096, %v1099
        %v1101 = vrot.slane %v1100, 4
        %v1103 = vshll.u32 %v1035, 16
        %v1105 = vrot.slane %v1103, 5
        %v1106 = vsel %vm1050, %v1101, %v1105
        %v1108 = vshrl.u32 %v1004, 16
        %v1110 = vrot.slane %v1108, 4
        %v1111 = vshll.u32 %v1004, 16
        %v1113 = vrot.slane %v1111, 5
        %v1114 = vor.u32 %v1110, %v1113
        %v1115 = vrot.slane %v1114, 4
        %v1117 = vshll.u32 %v1036, 16
        %v1119 = vrot.slane %v1117, 5
        %v1120 = vsel %vm1050, %v1115, %v1119
        %v1122 = vshrl.u32 %v1005, 16
        %v1124 = vrot.slane %v1122, 4
        %v1125 = vshll.u32 %v1005, 16
        %v1127 = vrot.slane %v1125, 5
        %v1128 = vor.u32 %v1124, %v1127
        %v1129 = vrot.slane %v1128, 4
        %v1131 = vshll.u32 %v1037, 16
        %v1133 = vrot.slane %v1131, 5
        %v1134 = vsel %vm1050, %v1129, %v1133
        %v1136 = vshrl.u32 %v1006, 16
        %v1138 = vrot.slane %v1136, 4
        %v1139 = vshll.u32 %v1006, 16
        %v1141 = vrot.slane %v1139, 5
        %v1142 = vor.u32 %v1138, %v1141
        %v1143 = vrot.slane %v1142, 4
        %v1145 = vshll.u32 %v1038, 16
        %v1147 = vrot.slane %v1145, 5
        %v1148 = vsel %vm1050, %v1143, %v1147
        %v1150 = vshrl.u32 %v1007, 16
        %v1152 = vrot.slane %v1150, 4
        %v1153 = vshll.u32 %v1007, 16
        %v1155 = vrot.slane %v1153, 5
        %v1156 = vor.u32 %v1152, %v1155
        %v1157 = vrot.slane %v1156, 4
        %v1159 = vshll.u32 %v1039, 16
        %v1161 = vrot.slane %v1159, 5
        %v1162 = vsel %vm1050, %v1157, %v1161
        %v1164 = vshrl.u32 %v1008, 16
        %v1166 = vrot.slane %v1164, 4
        %v1167 = vshll.u32 %v1008, 16
        %v1169 = vrot.slane %v1167, 5
        %v1170 = vor.u32 %v1166, %v1169
        %v1171 = vrot.slane %v1170, 4
        %v1173 = vshll.u32 %v1040, 16
        %v1175 = vrot.slane %v1173, 5
        %v1176 = vsel %vm1050, %v1171, %v1175
        %v1178 = vshrl.u32 %v1009, 16
        %v1180 = vrot.slane %v1178, 4
        %v1181 = vshll.u32 %v1009, 16
        %v1183 = vrot.slane %v1181, 5
        %v1184 = vor.u32 %v1180, %v1183
        %v1185 = vrot.slane %v1184, 4
        %v1187 = vshll.u32 %v1041, 16
        %v1189 = vrot.slane %v1187, 5
        %v1190 = vsel %vm1050, %v1185, %v1189
        %v1192 = vshrl.u32 %v1010, 16
        %v1194 = vrot.slane %v1192, 4
        %v1195 = vshll.u32 %v1010, 16
        %v1197 = vrot.slane %v1195, 5
        %v1198 = vor.u32 %v1194, %v1197
        %v1199 = vrot.slane %v1198, 4
        %v1201 = vshll.u32 %v1042, 16
        %v1203 = vrot.slane %v1201, 5
        %v1204 = vsel %vm1050, %v1199, %v1203
        %v1206 = vshrl.u32 %v1011, 16
        %v1208 = vrot.slane %v1206, 4
        %v1209 = vshll.u32 %v1011, 16
        %v1211 = vrot.slane %v1209, 5
        %v1212 = vor.u32 %v1208, %v1211
        %v1213 = vrot.slane %v1212, 4
        %v1215 = vshll.u32 %v1043, 16
        %v1217 = vrot.slane %v1215, 5
        %v1218 = vsel %vm1050, %v1213, %v1217
        %v1220 = vshrl.u32 %v1012, 16
        %v1222 = vrot.slane %v1220, 4
        %v1223 = vshll.u32 %v1012, 16
        %v1225 = vrot.slane %v1223, 5
        %v1226 = vor.u32 %v1222, %v1225
        %v1227 = vrot.slane %v1226, 4
        %v1229 = vshll.u32 %v1044, 16
        %v1231 = vrot.slane %v1229, 5
        %v1232 = vsel %vm1050, %v1227, %v1231
        %v1234 = vshrl.u32 %v1013, 16
        %v1236 = vrot.slane %v1234, 4
        %v1237 = vshll.u32 %v1013, 16
        %v1239 = vrot.slane %v1237, 5
        %v1240 = vor.u32 %v1236, %v1239
        %v1241 = vrot.slane %v1240, 4
        %v1243 = vshll.u32 %v1045, 16
        %v1245 = vrot.slane %v1243, 5
        %v1246 = vsel %vm1050, %v1241, %v1245
        %v1248 = vshrl.u32 %v1014, 16
        %v1250 = vrot.slane %v1248, 4
        %v1251 = vshll.u32 %v1014, 16
        %v1253 = vrot.slane %v1251, 5
        %v1254 = vor.u32 %v1250, %v1253
        %v1255 = vrot.slane %v1254, 4
        %v1257 = vshll.u32 %v1046, 16
        %v1259 = vrot.slane %v1257, 5
        %v1260 = vsel %vm1050, %v1255, %v1259
        %v1262 = vshrl.u32 %v1015, 16
        %v1264 = vrot.slane %v1262, 4
        %v1265 = vshll.u32 %v1015, 16
        %v1267 = vrot.slane %v1265, 5
        %v1268 = vor.u32 %v1264, %v1267
        %v1269 = vrot.slane %v1268, 4
        %v1271 = vshll.u32 %v1047, 16
        %v1273 = vrot.slane %v1271, 5
        %v1274 = vsel %vm1050, %v1269, %v1273
        %s1275 = scalar_lea.vmem %s335, 64 [#allocation6]
        %v1276 = vld [vmem:[%s1275] sm:$0xf]
        %v1277 = vld [vmem:[%s1275 + $0x4] sm:$0xf]
        %v1278 = vld [vmem:[%s1275 + $0x8] sm:$0xf]
        %v1279 = vld [vmem:[%s1275 + $0xc] sm:$0xf]
        %v1280 = vld [vmem:[%s1275 + $0x10] sm:$0xf]
        %v1281 = vld [vmem:[%s1275 + $0x14] sm:$0xf]
        %v1282 = vld [vmem:[%s1275 + $0x18] sm:$0xf]
        %v1283 = vld [vmem:[%s1275 + $0x1c] sm:$0xf]
        %v1284 = vld [vmem:[%s1275 + $0x20] sm:$0xf]
        %v1285 = vld [vmem:[%s1275 + $0x24] sm:$0xf]
        %v1286 = vld [vmem:[%s1275 + $0x28] sm:$0xf]
        %v1287 = vld [vmem:[%s1275 + $0x2c] sm:$0xf]
        %v1288 = vld [vmem:[%s1275 + $0x30] sm:$0xf]
        %v1289 = vld [vmem:[%s1275 + $0x34] sm:$0xf]
        %v1290 = vld [vmem:[%s1275 + $0x38] sm:$0xf]
        %v1291 = vld [vmem:[%s1275 + $0x3c] sm:$0xf]
        %v1292 = vunpack.c.l.b16 %v1064
        %v1293 = vunpack.c.l.b16 %v1078
        %v1294 = vunpack.c.l.b16 %v1092
        %v1295 = vunpack.c.l.b16 %v1106
        %v1296 = vunpack.c.l.b16 %v1120
        %v1297 = vunpack.c.l.b16 %v1134
        %v1298 = vunpack.c.l.b16 %v1148
        %v1299 = vunpack.c.l.b16 %v1162
        %v1300 = vunpack.c.l.b16 %v1176
        %v1301 = vunpack.c.l.b16 %v1190
        %v1302 = vunpack.c.l.b16 %v1204
        %v1303 = vunpack.c.l.b16 %v1218
        %v1304 = vunpack.c.l.b16 %v1232
        %v1305 = vunpack.c.l.b16 %v1246
        %v1306 = vunpack.c.l.b16 %v1260
        %v1307 = vunpack.c.l.b16 %v1274
        %v1308 = vpack.c.b16 %v1293, %v1292
        %v1309 = vpack.c.b16 %v1295, %v1294
        %v1310 = vpack.c.b16 %v1297, %v1296
        %v1311 = vpack.c.b16 %v1299, %v1298
        %v1312 = vpack.c.b16 %v1301, %v1300
        %v1313 = vpack.c.b16 %v1303, %v1302
        %v1314 = vpack.c.b16 %v1305, %v1304
        %v1315 = vpack.c.b16 %v1307, %v1306
        %v1340 = vunpack.c.l.b16 %v1276
        %v1341 = vunpack.c.l.b16 %v1277
        %v1342 = vunpack.c.l.b16 %v1278
        %v1343 = vunpack.c.l.b16 %v1279
        %v1344 = vunpack.c.l.b16 %v1280
        %v1345 = vunpack.c.l.b16 %v1281
        %v1346 = vunpack.c.l.b16 %v1282
        %v1347 = vunpack.c.l.b16 %v1283
        %v1348 = vunpack.c.l.b16 %v1284
        %v1349 = vunpack.c.l.b16 %v1285
        %v1350 = vunpack.c.l.b16 %v1286
        %v1351 = vunpack.c.l.b16 %v1287
        %v1352 = vunpack.c.l.b16 %v1288
        %v1353 = vunpack.c.l.b16 %v1289
        %v1354 = vunpack.c.l.b16 %v1290
        %v1355 = vunpack.c.l.b16 %v1291
        %v1356 = vpack.c.b16 %v1341, %v1340
        %v1357 = vpack.c.b16 %v1343, %v1342
        %v1358 = vpack.c.b16 %v1345, %v1344
        %v1359 = vpack.c.b16 %v1347, %v1346
        %v1360 = vpack.c.b16 %v1349, %v1348
        %v1361 = vpack.c.b16 %v1351, %v1350
        %v1362 = vpack.c.b16 %v1353, %v1352
        %v1363 = vpack.c.b16 %v1355, %v1354
        %1372 = vmatprep.subr.bf16.mxu0 0
        %1373 = vmatpush1.bf16.msra.mxu0 %v1356
        %1374 = vmatprep.subr.bf16.mxu0 0
        %1375 = vmatpush1.bf16.msra.mxu0 %v1357
        %1376 = vmatprep.subr.bf16.mxu0 0
        %1377 = vmatpush1.bf16.msra.mxu0 %v1358
        %1378 = vmatprep.subr.bf16.mxu0 0
        %1379 = vmatpush1.bf16.msra.mxu0 %v1359
        %1380 = vmatprep.subr.bf16.mxu0 0
        %1381 = vmatpush1.bf16.msra.mxu0 %v1360
        %1382 = vmatprep.subr.bf16.mxu0 0
        %1383 = vmatpush1.bf16.msra.mxu0 %v1361
        %1384 = vmatprep.subr.bf16.mxu0 0
        %1385 = vmatpush1.bf16.msra.mxu0 %v1362
        %1386 = vmatprep.subr.bf16.mxu0 0
        %1387 = vmatpush1.bf16.msra.mxu0 %v1363
        %1388 = vmatprep.subr.bf16.mxu0 0
        %1389 = vmatpush1.bf16.msra.mxu0 0
        %1390 = vmatprep.subr.bf16.mxu0 0
        %1391 = vmatpush1.bf16.msra.mxu0 0
        %1392 = vmatprep.subr.bf16.mxu0 0
        %1393 = vmatpush1.bf16.msra.mxu0 0
        %1394 = vmatprep.subr.bf16.mxu0 0
        %1395 = vmatpush1.bf16.msra.mxu0 0
        %1396 = vmatprep.subr.bf16.mxu0 0
        %1397 = vmatpush1.bf16.msra.mxu0 0
        %1398 = vmatprep.subr.bf16.mxu0 0
        %1399 = vmatpush1.bf16.msra.mxu0 0
        %1400 = vmatprep.subr.bf16.mxu0 0
        %1401 = vmatpush1.bf16.msra.mxu0 0
        %1402 = vmatprep.subr.bf16.mxu0 0
        %1403 = vmatpush1.bf16.msra.mxu0 0
        %1404 = vmatprep.mubr.bf16.mxu0 0
        %1405 = vmatmul.mubr.bf16.gmra.mrb[0].mxu0 %v1308
        %v1406 = vpop.f32.mrb[0].mxu0
        %v1407 = vadd.f32 0.0, %v1406
        %v1408 = vpop.f32.mrb[0].mxu0
        %v1409 = vpop.f32.mrb[0].mxu0
        %v1410 = vadd.f32 0.0, %v1409
        %v1411 = vpop.f32.mrb[0].mxu0
        %1412 = vmatprep.mubr.bf16.mxu0 0
        %1413 = vmatmul.mubr.bf16.gmra.mrb[0].mxu0 %v1309
        %v1414 = vpop.f32.mrb[0].mxu0
        %v1415 = vadd.f32 0.0, %v1414
        %v1416 = vpop.f32.mrb[0].mxu0
        %v1417 = vpop.f32.mrb[0].mxu0
        %v1418 = vadd.f32 0.0, %v1417
        %v1419 = vpop.f32.mrb[0].mxu0
        %1420 = vmatprep.mubr.bf16.mxu0 0
        %1421 = vmatmul.mubr.bf16.gmra.mrb[0].mxu0 %v1310
        %v1422 = vpop.f32.mrb[0].mxu0
        %v1423 = vadd.f32 0.0, %v1422
        %v1424 = vpop.f32.mrb[0].mxu0
        %v1425 = vpop.f32.mrb[0].mxu0
        %v1426 = vadd.f32 0.0, %v1425
        %v1427 = vpop.f32.mrb[0].mxu0
        %1428 = vmatprep.mubr.bf16.mxu0 0
        %1429 = vmatmul.mubr.bf16.gmra.mrb[0].mxu0 %v1311
        %v1430 = vpop.f32.mrb[0].mxu0
        %v1431 = vadd.f32 0.0, %v1430
        %v1432 = vpop.f32.mrb[0].mxu0
        %v1433 = vpop.f32.mrb[0].mxu0
        %v1434 = vadd.f32 0.0, %v1433
        %v1435 = vpop.f32.mrb[0].mxu0
        %1436 = vmatprep.mubr.bf16.mxu0 0
        %1437 = vmatmul.mubr.bf16.gmra.mrb[0].mxu0 %v1312
        %v1438 = vpop.f32.mrb[0].mxu0
        %v1439 = vadd.f32 0.0, %v1438
        %v1440 = vpop.f32.mrb[0].mxu0
        %v1441 = vpop.f32.mrb[0].mxu0
        %v1442 = vadd.f32 0.0, %v1441
        %v1443 = vpop.f32.mrb[0].mxu0
        %1444 = vmatprep.mubr.bf16.mxu0 0
        %1445 = vmatmul.mubr.bf16.gmra.mrb[0].mxu0 %v1313
        %v1446 = vpop.f32.mrb[0].mxu0
        %v1447 = vadd.f32 0.0, %v1446
        %v1448 = vpop.f32.mrb[0].mxu0
        %v1449 = vpop.f32.mrb[0].mxu0
        %v1450 = vadd.f32 0.0, %v1449
        %v1451 = vpop.f32.mrb[0].mxu0
        %1452 = vmatprep.mubr.bf16.mxu0 0
        %1453 = vmatmul.mubr.bf16.gmra.mrb[0].mxu0 %v1314
        %v1454 = vpop.f32.mrb[0].mxu0
        %v1455 = vadd.f32 0.0, %v1454
        %v1456 = vpop.f32.mrb[0].mxu0
        %v1457 = vpop.f32.mrb[0].mxu0
        %v1458 = vadd.f32 0.0, %v1457
        %v1459 = vpop.f32.mrb[0].mxu0
        %1460 = vmatprep.mubr.bf16.mxu0 0
        %1461 = vmatmul.mubr.bf16.gmra.mrb[0].mxu0 %v1315
        %v1462 = vpop.f32.mrb[0].mxu0
        %v1463 = vadd.f32 0.0, %v1462
        %v1464 = vpop.f32.mrb[0].mxu0
        %v1465 = vpop.f32.mrb[0].mxu0
        %v1466 = vadd.f32 0.0, %v1465
        %v1467 = vpop.f32.mrb[0].mxu0
        %1468 = vdwg.mxu0
        %v1485 = vunpack.c.l.b16 %v1000
        %v1486 = vunpack.c.l.b16 %v1001
        %v1487 = vunpack.c.l.b16 %v1002
        %v1488 = vunpack.c.l.b16 %v1003
        %v1489 = vunpack.c.l.b16 %v1004
        %v1490 = vunpack.c.l.b16 %v1005
        %v1491 = vunpack.c.l.b16 %v1006
        %v1492 = vunpack.c.l.b16 %v1007
        %v1493 = vunpack.c.l.b16 %v1008
        %v1494 = vunpack.c.l.b16 %v1009
        %v1495 = vunpack.c.l.b16 %v1010
        %v1496 = vunpack.c.l.b16 %v1011
        %v1497 = vunpack.c.l.b16 %v1012
        %v1498 = vunpack.c.l.b16 %v1013
        %v1499 = vunpack.c.l.b16 %v1014
        %v1500 = vunpack.c.l.b16 %v1015
        %v1501 = vpack.c.b16 %v1486, %v1485
        %v1502 = vpack.c.b16 %v1488, %v1487
        %v1503 = vpack.c.b16 %v1490, %v1489
        %v1504 = vpack.c.b16 %v1492, %v1491
        %v1505 = vpack.c.b16 %v1494, %v1493
        %v1506 = vpack.c.b16 %v1496, %v1495
        %v1507 = vpack.c.b16 %v1498, %v1497
        %v1508 = vpack.c.b16 %v1500, %v1499
        %v1533 = vunpack.c.l.b16 %v1016
        %v1534 = vunpack.c.l.b16 %v1017
        %v1535 = vunpack.c.l.b16 %v1018
        %v1536 = vunpack.c.l.b16 %v1019
        %v1537 = vunpack.c.l.b16 %v1020
        %v1538 = vunpack.c.l.b16 %v1021
        %v1539 = vunpack.c.l.b16 %v1022
        %v1540 = vunpack.c.l.b16 %v1023
        %v1541 = vunpack.c.l.b16 %v1024
        %v1542 = vunpack.c.l.b16 %v1025
        %v1543 = vunpack.c.l.b16 %v1026
        %v1544 = vunpack.c.l.b16 %v1027
        %v1545 = vunpack.c.l.b16 %v1028
        %v1546 = vunpack.c.l.b16 %v1029
        %v1547 = vunpack.c.l.b16 %v1030
        %v1548 = vunpack.c.l.b16 %v1031
        %v1549 = vpack.c.b16 %v1534, %v1533
        %v1550 = vpack.c.b16 %v1536, %v1535
        %v1551 = vpack.c.b16 %v1538, %v1537
        %v1552 = vpack.c.b16 %v1540, %v1539
        %v1553 = vpack.c.b16 %v1542, %v1541
        %v1554 = vpack.c.b16 %v1544, %v1543
        %v1555 = vpack.c.b16 %v1546, %v1545
        %v1556 = vpack.c.b16 %v1548, %v1547
        %1565 = vmatprep.subr.bf16.mxu0 0
        %1566 = vmatpush1.bf16.msra.mxu0 %v1549
        %1567 = vmatprep.subr.bf16.mxu0 0
        %1568 = vmatpush1.bf16.msra.mxu0 %v1550
        %1569 = vmatprep.subr.bf16.mxu0 0
        %1570 = vmatpush1.bf16.msra.mxu0 %v1551
        %1571 = vmatprep.subr.bf16.mxu0 0
        %1572 = vmatpush1.bf16.msra.mxu0 %v1552
        %1573 = vmatprep.subr.bf16.mxu0 0
        %1574 = vmatpush1.bf16.msra.mxu0 %v1553
        %1575 = vmatprep.subr.bf16.mxu0 0
        %1576 = vmatpush1.bf16.msra.mxu0 %v1554
        %1577 = vmatprep.subr.bf16.mxu0 0
        %1578 = vmatpush1.bf16.msra.mxu0 %v1555
        %1579 = vmatprep.subr.bf16.mxu0 0
        %1580 = vmatpush1.bf16.msra.mxu0 %v1556
        %1581 = vmatprep.subr.bf16.mxu0 0
        %1582 = vmatpush1.bf16.msra.mxu0 0
        %1583 = vmatprep.subr.bf16.mxu0 0
        %1584 = vmatpush1.bf16.msra.mxu0 0
        %1585 = vmatprep.subr.bf16.mxu0 0
        %1586 = vmatpush1.bf16.msra.mxu0 0
        %1587 = vmatprep.subr.bf16.mxu0 0
        %1588 = vmatpush1.bf16.msra.mxu0 0
        %1589 = vmatprep.subr.bf16.mxu0 0
        %1590 = vmatpush1.bf16.msra.mxu0 0
        %1591 = vmatprep.subr.bf16.mxu0 0
        %1592 = vmatpush1.bf16.msra.mxu0 0
        %1593 = vmatprep.subr.bf16.mxu0 0
        %1594 = vmatpush1.bf16.msra.mxu0 0
        %1595 = vmatprep.subr.bf16.mxu0 0
        %1596 = vmatpush1.bf16.msra.mxu0 0
        %1597 = vmatprep.mubr.bf16.mxu0 0
        %1598 = vmatmul.mubr.bf16.gmra.mrb[0].mxu0 %v1501
        %v1599 = vpop.f32.mrb[0].mxu0
        %v1600 = vadd.f32 %v1407, %v1599
        %v1601 = vpop.f32.mrb[0].mxu0
        %v1602 = vpop.f32.mrb[0].mxu0
        %v1603 = vadd.f32 %v1410, %v1602
        %v1604 = vpop.f32.mrb[0].mxu0
        %1605 = vmatprep.mubr.bf16.mxu0 0
        %1606 = vmatmul.mubr.bf16.gmra.mrb[0].mxu0 %v1502
        %v1607 = vpop.f32.mrb[0].mxu0
        %v1608 = vadd.f32 %v1415, %v1607
        %v1609 = vpop.f32.mrb[0].mxu0
        %v1610 = vpop.f32.mrb[0].mxu0
        %v1611 = vadd.f32 %v1418, %v1610
        %v1612 = vpop.f32.mrb[0].mxu0
        %1613 = vmatprep.mubr.bf16.mxu0 0
        %1614 = vmatmul.mubr.bf16.gmra.mrb[0].mxu0 %v1503
        %v1615 = vpop.f32.mrb[0].mxu0
        %v1616 = vadd.f32 %v1423, %v1615
        %v1617 = vpop.f32.mrb[0].mxu0
        %v1618 = vpop.f32.mrb[0].mxu0
        %v1619 = vadd.f32 %v1426, %v1618
        %v1620 = vpop.f32.mrb[0].mxu0
        %1621 = vmatprep.mubr.bf16.mxu0 0
        %1622 = vmatmul.mubr.bf16.gmra.mrb[0].mxu0 %v1504
        %v1623 = vpop.f32.mrb[0].mxu0
        %v1624 = vadd.f32 %v1431, %v1623
        %v1625 = vpop.f32.mrb[0].mxu0
        %v1626 = vpop.f32.mrb[0].mxu0
        %v1627 = vadd.f32 %v1434, %v1626
        %v1628 = vpop.f32.mrb[0].mxu0
        %1629 = vmatprep.mubr.bf16.mxu0 0
        %1630 = vmatmul.mubr.bf16.gmra.mrb[0].mxu0 %v1505
        %v1631 = vpop.f32.mrb[0].mxu0
        %v1632 = vadd.f32 %v1439, %v1631
        %v1633 = vpop.f32.mrb[0].mxu0
        %v1634 = vpop.f32.mrb[0].mxu0
        %v1635 = vadd.f32 %v1442, %v1634
        %v1636 = vpop.f32.mrb[0].mxu0
        %1637 = vmatprep.mubr.bf16.mxu0 0
        %1638 = vmatmul.mubr.bf16.gmra.mrb[0].mxu0 %v1506
        %v1639 = vpop.f32.mrb[0].mxu0
        %v1640 = vadd.f32 %v1447, %v1639
        %v1641 = vpop.f32.mrb[0].mxu0
        %v1642 = vpop.f32.mrb[0].mxu0
        %v1643 = vadd.f32 %v1450, %v1642
        %v1644 = vpop.f32.mrb[0].mxu0
        %1645 = vmatprep.mubr.bf16.mxu0 0
        %1646 = vmatmul.mubr.bf16.gmra.mrb[0].mxu0 %v1507
        %v1647 = vpop.f32.mrb[0].mxu0
        %v1648 = vadd.f32 %v1455, %v1647
        %v1649 = vpop.f32.mrb[0].mxu0
        %v1650 = vpop.f32.mrb[0].mxu0
        %v1651 = vadd.f32 %v1458, %v1650
        %v1652 = vpop.f32.mrb[0].mxu0
        %1653 = vmatprep.mubr.bf16.mxu0 0
        %1654 = vmatmul.mubr.bf16.gmra.mrb[0].mxu0 %v1508
        %v1655 = vpop.f32.mrb[0].mxu0
        %v1656 = vadd.f32 %v1463, %v1655
        %v1657 = vpop.f32.mrb[0].mxu0
        %v1658 = vpop.f32.mrb[0].mxu0
        %v1659 = vadd.f32 %v1466, %v1658
        %v1660 = vpop.f32.mrb[0].mxu0
        %1661 = vdwg.mxu0
        %v1662 = vld [vmem:[#allocation2] sm:$0xe]
        %v1663 = vld [vmem:[#allocation2 + $0x8] sm:$0xe]
        %v1664 = vld [vmem:[#allocation2 + $0x10] sm:$0xe]
        %v1665 = vld [vmem:[#allocation2 + $0x18] sm:$0xe]
        %v1666 = vld [vmem:[#allocation2 + $0x20] sm:$0xe]
        %v1667 = vld [vmem:[#allocation2 + $0x28] sm:$0xe]
        %v1668 = vld [vmem:[#allocation2 + $0x30] sm:$0xe]
        %v1669 = vld [vmem:[#allocation2 + $0x38] sm:$0xe]
        %v1670 = vld [vmem:[#allocation2 + $0x50] sm:$0xe]
        %v1671 = vld [vmem:[#allocation2 + $0x58] sm:$0xe]
        %v1672 = vld [vmem:[#allocation2 + $0x60] sm:$0xe]
        %v1673 = vld [vmem:[#allocation2 + $0x68] sm:$0xe]
        %v1674 = vld [vmem:[#allocation2 + $0x70] sm:$0xe]
        %v1675 = vld [vmem:[#allocation2 + $0x78] sm:$0xe]
        %v1676 = vld [vmem:[#allocation2 + $0x80] sm:$0xe]
        %v1677 = vld [vmem:[#allocation2 + $0x88] sm:$0xe]
        %vm1710 = vcmask 1042432
        %vm1711 = vcmask 1046532
        %vm1712 = vmor %vm1710, %vm1711
        %v1713 = vrot.slane %v1662, 5
        %v1714 = vrot.slane %v1713, 4
        %v1715 = vrot.slane %v1032, 5
        %v1716 = vsel %vm1712, %v1714, %v1715
        %v1717 = vrot.slane %v1663, 5
        %v1718 = vrot.slane %v1717, 4
        %v1719 = vrot.slane %v1033, 5
        %v1720 = vsel %vm1712, %v1718, %v1719
        %v1721 = vrot.slane %v1664, 5
        %v1722 = vrot.slane %v1721, 4
        %v1723 = vrot.slane %v1034, 5
        %v1724 = vsel %vm1712, %v1722, %v1723
        %v1725 = vrot.slane %v1665, 5
        %v1726 = vrot.slane %v1725, 4
        %v1727 = vrot.slane %v1035, 5
        %v1728 = vsel %vm1712, %v1726, %v1727
        %v1729 = vrot.slane %v1666, 5
        %v1730 = vrot.slane %v1729, 4
        %v1731 = vrot.slane %v1036, 5
        %v1732 = vsel %vm1712, %v1730, %v1731
        %v1733 = vrot.slane %v1667, 5
        %v1734 = vrot.slane %v1733, 4
        %v1735 = vrot.slane %v1037, 5
        %v1736 = vsel %vm1712, %v1734, %v1735
        %v1737 = vrot.slane %v1668, 5
        %v1738 = vrot.slane %v1737, 4
        %v1739 = vrot.slane %v1038, 5
        %v1740 = vsel %vm1712, %v1738, %v1739
        %v1741 = vrot.slane %v1669, 5
        %v1742 = vrot.slane %v1741, 4
        %v1743 = vrot.slane %v1039, 5
        %v1744 = vsel %vm1712, %v1742, %v1743
        %v1745 = vrot.slane %v1670, 5
        %v1746 = vrot.slane %v1745, 4
        %v1747 = vrot.slane %v1040, 5
        %v1748 = vsel %vm1712, %v1746, %v1747
        %v1749 = vrot.slane %v1671, 5
        %v1750 = vrot.slane %v1749, 4
        %v1751 = vrot.slane %v1041, 5
        %v1752 = vsel %vm1712, %v1750, %v1751
        %v1753 = vrot.slane %v1672, 5
        %v1754 = vrot.slane %v1753, 4
        %v1755 = vrot.slane %v1042, 5
        %v1756 = vsel %vm1712, %v1754, %v1755
        %v1757 = vrot.slane %v1673, 5
        %v1758 = vrot.slane %v1757, 4
        %v1759 = vrot.slane %v1043, 5
        %v1760 = vsel %vm1712, %v1758, %v1759
        %v1761 = vrot.slane %v1674, 5
        %v1762 = vrot.slane %v1761, 4
        %v1763 = vrot.slane %v1044, 5
        %v1764 = vsel %vm1712, %v1762, %v1763
        %v1765 = vrot.slane %v1675, 5
        %v1766 = vrot.slane %v1765, 4
        %v1767 = vrot.slane %v1045, 5
        %v1768 = vsel %vm1712, %v1766, %v1767
        %v1769 = vrot.slane %v1676, 5
        %v1770 = vrot.slane %v1769, 4
        %v1771 = vrot.slane %v1046, 5
        %v1772 = vsel %vm1712, %v1770, %v1771
        %v1773 = vrot.slane %v1677, 5
        %v1774 = vrot.slane %v1773, 4
        %v1775 = vrot.slane %v1047, 5
        %v1776 = vsel %vm1712, %v1774, %v1775
        %s1777 = scalar_lea.vmem %s335, 128 [#allocation6]
        %v1778 = vld [vmem:[%s1777] sm:$0xf]
        %v1779 = vld [vmem:[%s1777 + $0x4] sm:$0xf]
        %v1780 = vld [vmem:[%s1777 + $0x8] sm:$0xf]
        %v1781 = vld [vmem:[%s1777 + $0xc] sm:$0xf]
        %v1782 = vld [vmem:[%s1777 + $0x10] sm:$0xf]
        %v1783 = vld [vmem:[%s1777 + $0x14] sm:$0xf]
        %v1784 = vld [vmem:[%s1777 + $0x18] sm:$0xf]
        %v1785 = vld [vmem:[%s1777 + $0x1c] sm:$0xf]
        %v1786 = vld [vmem:[%s1777 + $0x20] sm:$0xf]
        %v1787 = vld [vmem:[%s1777 + $0x24] sm:$0xf]
        %v1788 = vld [vmem:[%s1777 + $0x28] sm:$0xf]
        %v1789 = vld [vmem:[%s1777 + $0x2c] sm:$0xf]
        %v1790 = vld [vmem:[%s1777 + $0x30] sm:$0xf]
        %v1791 = vld [vmem:[%s1777 + $0x34] sm:$0xf]
        %v1792 = vld [vmem:[%s1777 + $0x38] sm:$0xf]
        %v1793 = vld [vmem:[%s1777 + $0x3c] sm:$0xf]
        %v1794 = vunpack.c.l.b16 %v1716
        %v1795 = vunpack.c.l.b16 %v1720
        %v1796 = vunpack.c.l.b16 %v1724
        %v1797 = vunpack.c.l.b16 %v1728
        %v1798 = vunpack.c.l.b16 %v1732
        %v1799 = vunpack.c.l.b16 %v1736
        %v1800 = vunpack.c.l.b16 %v1740
        %v1801 = vunpack.c.l.b16 %v1744
        %v1802 = vunpack.c.l.b16 %v1748
        %v1803 = vunpack.c.l.b16 %v1752
        %v1804 = vunpack.c.l.b16 %v1756
        %v1805 = vunpack.c.l.b16 %v1760
        %v1806 = vunpack.c.l.b16 %v1764
        %v1807 = vunpack.c.l.b16 %v1768
        %v1808 = vunpack.c.l.b16 %v1772
        %v1809 = vunpack.c.l.b16 %v1776
        %v1810 = vpack.c.b16 %v1795, %v1794
        %v1811 = vpack.c.b16 %v1797, %v1796
        %v1812 = vpack.c.b16 %v1799, %v1798
        %v1813 = vpack.c.b16 %v1801, %v1800
        %v1814 = vpack.c.b16 %v1803, %v1802
        %v1815 = vpack.c.b16 %v1805, %v1804
        %v1816 = vpack.c.b16 %v1807, %v1806
        %v1817 = vpack.c.b16 %v1809, %v1808
        %v1842 = vunpack.c.l.b16 %v1778
        %v1843 = vunpack.c.l.b16 %v1779
        %v1844 = vunpack.c.l.b16 %v1780
        %v1845 = vunpack.c.l.b16 %v1781
        %v1846 = vunpack.c.l.b16 %v1782
        %v1847 = vunpack.c.l.b16 %v1783
        %v1848 = vunpack.c.l.b16 %v1784
        %v1849 = vunpack.c.l.b16 %v1785
        %v1850 = vunpack.c.l.b16 %v1786
        %v1851 = vunpack.c.l.b16 %v1787
        %v1852 = vunpack.c.l.b16 %v1788
        %v1853 = vunpack.c.l.b16 %v1789
        %v1854 = vunpack.c.l.b16 %v1790
        %v1855 = vunpack.c.l.b16 %v1791
        %v1856 = vunpack.c.l.b16 %v1792
        %v1857 = vunpack.c.l.b16 %v1793
        %v1858 = vpack.c.b16 %v1843, %v1842
        %v1859 = vpack.c.b16 %v1845, %v1844
        %v1860 = vpack.c.b16 %v1847, %v1846
        %v1861 = vpack.c.b16 %v1849, %v1848
        %v1862 = vpack.c.b16 %v1851, %v1850
        %v1863 = vpack.c.b16 %v1853, %v1852
        %v1864 = vpack.c.b16 %v1855, %v1854
        %v1865 = vpack.c.b16 %v1857, %v1856
        %1874 = vmatprep.subr.bf16.mxu0 0
        %1875 = vmatpush1.bf16.msra.mxu0 %v1858
        %1876 = vmatprep.subr.bf16.mxu0 0
        %1877 = vmatpush1.bf16.msra.mxu0 %v1859
        %1878 = vmatprep.subr.bf16.mxu0 0
        %1879 = vmatpush1.bf16.msra.mxu0 %v1860
        %1880 = vmatprep.subr.bf16.mxu0 0
        %1881 = vmatpush1.bf16.msra.mxu0 %v1861
        %1882 = vmatprep.subr.bf16.mxu0 0
        %1883 = vmatpush1.bf16.msra.mxu0 %v1862
        %1884 = vmatprep.subr.bf16.mxu0 0
        %1885 = vmatpush1.bf16.msra.mxu0 %v1863
        %1886 = vmatprep.subr.bf16.mxu0 0
        %1887 = vmatpush1.bf16.msra.mxu0 %v1864
        %1888 = vmatprep.subr.bf16.mxu0 0
        %1889 = vmatpush1.bf16.msra.mxu0 %v1865
        %1890 = vmatprep.subr.bf16.mxu0 0
        %1891 = vmatpush1.bf16.msra.mxu0 0
        %1892 = vmatprep.subr.bf16.mxu0 0
        %1893 = vmatpush1.bf16.msra.mxu0 0
        %1894 = vmatprep.subr.bf16.mxu0 0
        %1895 = vmatpush1.bf16.msra.mxu0 0
        %1896 = vmatprep.subr.bf16.mxu0 0
        %1897 = vmatpush1.bf16.msra.mxu0 0
        %1898 = vmatprep.subr.bf16.mxu0 0
        %1899 = vmatpush1.bf16.msra.mxu0 0
        %1900 = vmatprep.subr.bf16.mxu0 0
        %1901 = vmatpush1.bf16.msra.mxu0 0
        %1902 = vmatprep.subr.bf16.mxu0 0
        %1903 = vmatpush1.bf16.msra.mxu0 0
        %1904 = vmatprep.subr.bf16.mxu0 0
        %1905 = vmatpush1.bf16.msra.mxu0 0
        %1906 = vmatprep.mubr.bf16.mxu0 0
        %1907 = vmatmul.mubr.bf16.gmra.mrb[0].mxu0 %v1810
        %v1908 = vpop.f32.mrb[0].mxu0
        %v1909 = vadd.f32 0.0, %v1908
        %v1910 = vpop.f32.mrb[0].mxu0
        %v1911 = vpop.f32.mrb[0].mxu0
        %v1912 = vadd.f32 0.0, %v1911
        %v1913 = vpop.f32.mrb[0].mxu0
        %1914 = vmatprep.mubr.bf16.mxu0 0
        %1915 = vmatmul.mubr.bf16.gmra.mrb[0].mxu0 %v1811
        %v1916 = vpop.f32.mrb[0].mxu0
        %v1917 = vadd.f32 0.0, %v1916
        %v1918 = vpop.f32.mrb[0].mxu0
        %v1919 = vpop.f32.mrb[0].mxu0
        %v1920 = vadd.f32 0.0, %v1919
        %v1921 = vpop.f32.mrb[0].mxu0
        %1922 = vmatprep.mubr.bf16.mxu0 0
        %1923 = vmatmul.mubr.bf16.gmra.mrb[0].mxu0 %v1812
        %v1924 = vpop.f32.mrb[0].mxu0
        %v1925 = vadd.f32 0.0, %v1924
        %v1926 = vpop.f32.mrb[0].mxu0
        %v1927 = vpop.f32.mrb[0].mxu0
        %v1928 = vadd.f32 0.0, %v1927
        %v1929 = vpop.f32.mrb[0].mxu0
        %1930 = vmatprep.mubr.bf16.mxu0 0
        %1931 = vmatmul.mubr.bf16.gmra.mrb[0].mxu0 %v1813
        %v1932 = vpop.f32.mrb[0].mxu0
        %v1933 = vadd.f32 0.0, %v1932
        %v1934 = vpop.f32.mrb[0].mxu0
        %v1935 = vpop.f32.mrb[0].mxu0
        %v1936 = vadd.f32 0.0, %v1935
        %v1937 = vpop.f32.mrb[0].mxu0
        %1938 = vmatprep.mubr.bf16.mxu0 0
        %1939 = vmatmul.mubr.bf16.gmra.mrb[0].mxu0 %v1814
        %v1940 = vpop.f32.mrb[0].mxu0
        %v1941 = vadd.f32 0.0, %v1940
        %v1942 = vpop.f32.mrb[0].mxu0
        %v1943 = vpop.f32.mrb[0].mxu0
        %v1944 = vadd.f32 0.0, %v1943
        %v1945 = vpop.f32.mrb[0].mxu0
        %1946 = vmatprep.mubr.bf16.mxu0 0
        %1947 = vmatmul.mubr.bf16.gmra.mrb[0].mxu0 %v1815
        %v1948 = vpop.f32.mrb[0].mxu0
        %v1949 = vadd.f32 0.0, %v1948
        %v1950 = vpop.f32.mrb[0].mxu0
        %v1951 = vpop.f32.mrb[0].mxu0
        %v1952 = vadd.f32 0.0, %v1951
        %v1953 = vpop.f32.mrb[0].mxu0
        %1954 = vmatprep.mubr.bf16.mxu0 0
        %1955 = vmatmul.mubr.bf16.gmra.mrb[0].mxu0 %v1816
        %v1956 = vpop.f32.mrb[0].mxu0
        %v1957 = vadd.f32 0.0, %v1956
        %v1958 = vpop.f32.mrb[0].mxu0
        %v1959 = vpop.f32.mrb[0].mxu0
        %v1960 = vadd.f32 0.0, %v1959
        %v1961 = vpop.f32.mrb[0].mxu0
        %1962 = vmatprep.mubr.bf16.mxu0 0
        %1963 = vmatmul.mubr.bf16.gmra.mrb[0].mxu0 %v1817
        %v1964 = vpop.f32.mrb[0].mxu0
        %v1965 = vadd.f32 0.0, %v1964
        %v1966 = vpop.f32.mrb[0].mxu0
        %v1967 = vpop.f32.mrb[0].mxu0
        %v1968 = vadd.f32 0.0, %v1967
        %v1969 = vpop.f32.mrb[0].mxu0
        %1970 = vdwg.mxu0
        %v1971 = vadd.f32 %v1600, %v1909
        %v1972 = vadd.f32 %v1603, %v1912
        %v1973 = vadd.f32 %v1608, %v1917
        %v1974 = vadd.f32 %v1611, %v1920
        %v1975 = vadd.f32 %v1616, %v1925
        %v1976 = vadd.f32 %v1619, %v1928
        %v1977 = vadd.f32 %v1624, %v1933
        %v1978 = vadd.f32 %v1627, %v1936
        %v1979 = vadd.f32 %v1632, %v1941
        %v1980 = vadd.f32 %v1635, %v1944
        %v1981 = vadd.f32 %v1640, %v1949
        %v1982 = vadd.f32 %v1643, %v1952
        %v1983 = vadd.f32 %v1648, %v1957
        %v1984 = vadd.f32 %v1651, %v1960
        %v1985 = vadd.f32 %v1656, %v1965
        %v1986 = vadd.f32 %v1659, %v1968
        %s1987 = scalar_lea.vmem [#allocation2], 8
        %v1988 = vld [vmem:[%s1987] sm:$0xf]
        %v1989 = vld [vmem:[%s1987 + $0x8] sm:$0xf]
        %v1990 = vld [vmem:[%s1987 + $0x10] sm:$0xf]
        %v1991 = vld [vmem:[%s1987 + $0x18] sm:$0xf]
        %v1992 = vld [vmem:[%s1987 + $0x20] sm:$0xf]
        %v1993 = vld [vmem:[%s1987 + $0x28] sm:$0xf]
        %v1994 = vld [vmem:[%s1987 + $0x30] sm:$0xf]
        %v1995 = vld [vmem:[%s1987 + $0x38] sm:$0xf]
        %v1996 = vld [vmem:[%s1987 + $0x50] sm:$0xf]
        %v1997 = vld [vmem:[%s1987 + $0x58] sm:$0xf]
        %v1998 = vld [vmem:[%s1987 + $0x60] sm:$0xf]
        %v1999 = vld [vmem:[%s1987 + $0x68] sm:$0xf]
        %v2000 = vld [vmem:[%s1987 + $0x70] sm:$0xf]
        %v2001 = vld [vmem:[%s1987 + $0x78] sm:$0xf]
        %v2002 = vld [vmem:[%s1987 + $0x80] sm:$0xf]
        %v2003 = vld [vmem:[%s1987 + $0x88] sm:$0xf]
        %s2004 = scalar_lea.vmem %s335, 192 [#allocation6]
        %v2005 = vld [vmem:[%s2004] sm:$0xf]
        %v2006 = vld [vmem:[%s2004 + $0x4] sm:$0xf]
        %v2007 = vld [vmem:[%s2004 + $0x8] sm:$0xf]
        %v2008 = vld [vmem:[%s2004 + $0xc] sm:$0xf]
        %v2009 = vld [vmem:[%s2004 + $0x10] sm:$0xf]
        %v2010 = vld [vmem:[%s2004 + $0x14] sm:$0xf]
        %v2011 = vld [vmem:[%s2004 + $0x18] sm:$0xf]
        %v2012 = vld [vmem:[%s2004 + $0x1c] sm:$0xf]
        %v2013 = vld [vmem:[%s2004 + $0x20] sm:$0xf]
        %v2014 = vld [vmem:[%s2004 + $0x24] sm:$0xf]
        %v2015 = vld [vmem:[%s2004 + $0x28] sm:$0xf]
        %v2016 = vld [vmem:[%s2004 + $0x2c] sm:$0xf]
        %v2017 = vld [vmem:[%s2004 + $0x30] sm:$0xf]
        %v2018 = vld [vmem:[%s2004 + $0x34] sm:$0xf]
        %v2019 = vld [vmem:[%s2004 + $0x38] sm:$0xf]
        %v2020 = vld [vmem:[%s2004 + $0x3c] sm:$0xf]
        %v2037 = vunpack.c.l.b16 %v1988
        %v2038 = vunpack.c.l.b16 %v1989
        %v2039 = vunpack.c.l.b16 %v1990
        %v2040 = vunpack.c.l.b16 %v1991
        %v2041 = vunpack.c.l.b16 %v1992
        %v2042 = vunpack.c.l.b16 %v1993
        %v2043 = vunpack.c.l.b16 %v1994
        %v2044 = vunpack.c.l.b16 %v1995
        %v2045 = vunpack.c.l.b16 %v1996
        %v2046 = vunpack.c.l.b16 %v1997
        %v2047 = vunpack.c.l.b16 %v1998
        %v2048 = vunpack.c.l.b16 %v1999
        %v2049 = vunpack.c.l.b16 %v2000
        %v2050 = vunpack.c.l.b16 %v2001
        %v2051 = vunpack.c.l.b16 %v2002
        %v2052 = vunpack.c.l.b16 %v2003
        %v2053 = vpack.c.b16 %v2038, %v2037
        %v2054 = vpack.c.b16 %v2040, %v2039
        %v2055 = vpack.c.b16 %v2042, %v2041
        %v2056 = vpack.c.b16 %v2044, %v2043
        %v2057 = vpack.c.b16 %v2046, %v2045
        %v2058 = vpack.c.b16 %v2048, %v2047
        %v2059 = vpack.c.b16 %v2050, %v2049
        %v2060 = vpack.c.b16 %v2052, %v2051
        %v2085 = vunpack.c.l.b16 %v2005
        %v2086 = vunpack.c.l.b16 %v2006
        %v2087 = vunpack.c.l.b16 %v2007
        %v2088 = vunpack.c.l.b16 %v2008
        %v2089 = vunpack.c.l.b16 %v2009
        %v2090 = vunpack.c.l.b16 %v2010
        %v2091 = vunpack.c.l.b16 %v2011
        %v2092 = vunpack.c.l.b16 %v2012
        %v2093 = vunpack.c.l.b16 %v2013
        %v2094 = vunpack.c.l.b16 %v2014
        %v2095 = vunpack.c.l.b16 %v2015
        %v2096 = vunpack.c.l.b16 %v2016
        %v2097 = vunpack.c.l.b16 %v2017
        %v2098 = vunpack.c.l.b16 %v2018
        %v2099 = vunpack.c.l.b16 %v2019
        %v2100 = vunpack.c.l.b16 %v2020
        %v2101 = vpack.c.b16 %v2086, %v2085
        %v2102 = vpack.c.b16 %v2088, %v2087
        %v2103 = vpack.c.b16 %v2090, %v2089
        %v2104 = vpack.c.b16 %v2092, %v2091
        %v2105 = vpack.c.b16 %v2094, %v2093
        %v2106 = vpack.c.b16 %v2096, %v2095
        %v2107 = vpack.c.b16 %v2098, %v2097
        %v2108 = vpack.c.b16 %v2100, %v2099
        %2117 = vmatprep.subr.bf16.mxu0 0
        %2118 = vmatpush1.bf16.msra.mxu0 %v2101
        %2119 = vmatprep.subr.bf16.mxu0 0
        %2120 = vmatpush1.bf16.msra.mxu0 %v2102
        %2121 = vmatprep.subr.bf16.mxu0 0
        %2122 = vmatpush1.bf16.msra.mxu0 %v2103
        %2123 = vmatprep.subr.bf16.mxu0 0
        %2124 = vmatpush1.bf16.msra.mxu0 %v2104
        %2125 = vmatprep.subr.bf16.mxu0 0
        %2126 = vmatpush1.bf16.msra.mxu0 %v2105
        %2127 = vmatprep.subr.bf16.mxu0 0
        %2128 = vmatpush1.bf16.msra.mxu0 %v2106
        %2129 = vmatprep.subr.bf16.mxu0 0
        %2130 = vmatpush1.bf16.msra.mxu0 %v2107
        %2131 = vmatprep.subr.bf16.mxu0 0
        %2132 = vmatpush1.bf16.msra.mxu0 %v2108
        %2133 = vmatprep.subr.bf16.mxu0 0
        %2134 = vmatpush1.bf16.msra.mxu0 0
        %2135 = vmatprep.subr.bf16.mxu0 0
        %2136 = vmatpush1.bf16.msra.mxu0 0
        %2137 = vmatprep.subr.bf16.mxu0 0
        %2138 = vmatpush1.bf16.msra.mxu0 0
        %2139 = vmatprep.subr.bf16.mxu0 0
        %2140 = vmatpush1.bf16.msra.mxu0 0
        %2141 = vmatprep.subr.bf16.mxu0 0
        %2142 = vmatpush1.bf16.msra.mxu0 0
        %2143 = vmatprep.subr.bf16.mxu0 0
        %2144 = vmatpush1.bf16.msra.mxu0 0
        %2145 = vmatprep.subr.bf16.mxu0 0
        %2146 = vmatpush1.bf16.msra.mxu0 0
        %2147 = vmatprep.subr.bf16.mxu0 0
        %2148 = vmatpush1.bf16.msra.mxu0 0
        %2149 = vmatprep.mubr.bf16.mxu0 0
        %2150 = vmatmul.mubr.bf16.gmra.mrb[0].mxu0 %v2053
        %v2151 = vpop.f32.mrb[0].mxu0
        %v2152 = vadd.f32 0.0, %v2151
        %v2153 = vpop.f32.mrb[0].mxu0
        %v2154 = vpop.f32.mrb[0].mxu0
        %v2155 = vadd.f32 0.0, %v2154
        %v2156 = vpop.f32.mrb[0].mxu0
        %2157 = vmatprep.mubr.bf16.mxu0 0
        %2158 = vmatmul.mubr.bf16.gmra.mrb[0].mxu0 %v2054
        %v2159 = vpop.f32.mrb[0].mxu0
        %v2160 = vadd.f32 0.0, %v2159
        %v2161 = vpop.f32.mrb[0].mxu0
        %v2162 = vpop.f32.mrb[0].mxu0
        %v2163 = vadd.f32 0.0, %v2162
        %v2164 = vpop.f32.mrb[0].mxu0
        %2165 = vmatprep.mubr.bf16.mxu0 0
        %2166 = vmatmul.mubr.bf16.gmra.mrb[0].mxu0 %v2055
        %v2167 = vpop.f32.mrb[0].mxu0
        %v2168 = vadd.f32 0.0, %v2167
        %v2169 = vpop.f32.mrb[0].mxu0
        %v2170 = vpop.f32.mrb[0].mxu0
        %v2171 = vadd.f32 0.0, %v2170
        %v2172 = vpop.f32.mrb[0].mxu0
        %2173 = vmatprep.mubr.bf16.mxu0 0
        %2174 = vmatmul.mubr.bf16.gmra.mrb[0].mxu0 %v2056
        %v2175 = vpop.f32.mrb[0].mxu0
        %v2176 = vadd.f32 0.0, %v2175
        %v2177 = vpop.f32.mrb[0].mxu0
        %v2178 = vpop.f32.mrb[0].mxu0
        %v2179 = vadd.f32 0.0, %v2178
        %v2180 = vpop.f32.mrb[0].mxu0
        %2181 = vmatprep.mubr.bf16.mxu0 0
        %2182 = vmatmul.mubr.bf16.gmra.mrb[0].mxu0 %v2057
        %v2183 = vpop.f32.mrb[0].mxu0
        %v2184 = vadd.f32 0.0, %v2183
        %v2185 = vpop.f32.mrb[0].mxu0
        %v2186 = vpop.f32.mrb[0].mxu0
        %v2187 = vadd.f32 0.0, %v2186
        %v2188 = vpop.f32.mrb[0].mxu0
        %2189 = vmatprep.mubr.bf16.mxu0 0
        %2190 = vmatmul.mubr.bf16.gmra.mrb[0].mxu0 %v2058
        %v2191 = vpop.f32.mrb[0].mxu0
        %v2192 = vadd.f32 0.0, %v2191
        %v2193 = vpop.f32.mrb[0].mxu0
        %v2194 = vpop.f32.mrb[0].mxu0
        %v2195 = vadd.f32 0.0, %v2194
        %v2196 = vpop.f32.mrb[0].mxu0
        %2197 = vmatprep.mubr.bf16.mxu0 0
        %2198 = vmatmul.mubr.bf16.gmra.mrb[0].mxu0 %v2059
        %v2199 = vpop.f32.mrb[0].mxu0
        %v2200 = vadd.f32 0.0, %v2199
        %v2201 = vpop.f32.mrb[0].mxu0
        %v2202 = vpop.f32.mrb[0].mxu0
        %v2203 = vadd.f32 0.0, %v2202
        %v2204 = vpop.f32.mrb[0].mxu0
        %2205 = vmatprep.mubr.bf16.mxu0 0
        %2206 = vmatmul.mubr.bf16.gmra.mrb[0].mxu0 %v2060
        %v2207 = vpop.f32.mrb[0].mxu0
        %v2208 = vadd.f32 0.0, %v2207
        %v2209 = vpop.f32.mrb[0].mxu0
        %v2210 = vpop.f32.mrb[0].mxu0
        %v2211 = vadd.f32 0.0, %v2210
        %v2212 = vpop.f32.mrb[0].mxu0
        %2213 = vdwg.mxu0
        %v2214 = vadd.f32 %v1971, %v2152
        %v2215 = vadd.f32 %v1972, %v2155
        %v2216 = vadd.f32 %v1973, %v2160
        %v2217 = vadd.f32 %v1974, %v2163
        %v2218 = vadd.f32 %v1975, %v2168
        %v2219 = vadd.f32 %v1976, %v2171
        %v2220 = vadd.f32 %v1977, %v2176
        %v2221 = vadd.f32 %v1978, %v2179
        %v2222 = vadd.f32 %v1979, %v2184
        %v2223 = vadd.f32 %v1980, %v2187
        %v2224 = vadd.f32 %v1981, %v2192
        %v2225 = vadd.f32 %v1982, %v2195
        %v2226 = vadd.f32 %v1983, %v2200
        %v2227 = vadd.f32 %v1984, %v2203
        %v2228 = vadd.f32 %v1985, %v2208
        %v2229 = vadd.f32 %v1986, %v2211
        %v2230 = vld [vmem:[%s1987] sm:$0xf]
        %v2231 = vld [vmem:[%s1987 + $0x4] sm:$0x1]
        %v2232 = vld [vmem:[%s1987 + $0x8] sm:$0xf]
        %v2233 = vld [vmem:[%s1987 + $0xc] sm:$0x1]
        %v2234 = vld [vmem:[%s1987 + $0x10] sm:$0xf]
        %v2235 = vld [vmem:[%s1987 + $0x14] sm:$0x1]
        %v2236 = vld [vmem:[%s1987 + $0x18] sm:$0xf]
        %v2237 = vld [vmem:[%s1987 + $0x1c] sm:$0x1]
        %v2238 = vld [vmem:[%s1987 + $0x20] sm:$0xf]
        %v2239 = vld [vmem:[%s1987 + $0x24] sm:$0x1]
        %v2240 = vld [vmem:[%s1987 + $0x28] sm:$0xf]
        %v2241 = vld [vmem:[%s1987 + $0x2c] sm:$0x1]
        %v2242 = vld [vmem:[%s1987 + $0x30] sm:$0xf]
        %v2243 = vld [vmem:[%s1987 + $0x34] sm:$0x1]
        %v2244 = vld [vmem:[%s1987 + $0x38] sm:$0xf]
        %v2245 = vld [vmem:[%s1987 + $0x3c] sm:$0x1]
        %v2246 = vld [vmem:[%s1987 + $0x50] sm:$0xf]
        %v2247 = vld [vmem:[%s1987 + $0x54] sm:$0x1]
        %v2248 = vld [vmem:[%s1987 + $0x58] sm:$0xf]
        %v2249 = vld [vmem:[%s1987 + $0x5c] sm:$0x1]
        %v2250 = vld [vmem:[%s1987 + $0x60] sm:$0xf]
        %v2251 = vld [vmem:[%s1987 + $0x64] sm:$0x1]
        %v2252 = vld [vmem:[%s1987 + $0x68] sm:$0xf]
        %v2253 = vld [vmem:[%s1987 + $0x6c] sm:$0x1]
        %v2254 = vld [vmem:[%s1987 + $0x70] sm:$0xf]
        %v2255 = vld [vmem:[%s1987 + $0x74] sm:$0x1]
        %v2256 = vld [vmem:[%s1987 + $0x78] sm:$0xf]
        %v2257 = vld [vmem:[%s1987 + $0x7c] sm:$0x1]
        %v2258 = vld [vmem:[%s1987 + $0x80] sm:$0xf]
        %v2259 = vld [vmem:[%s1987 + $0x84] sm:$0x1]
        %v2260 = vld [vmem:[%s1987 + $0x88] sm:$0xf]
        %v2261 = vld [vmem:[%s1987 + $0x8c] sm:$0x1]
        %v2263 = vshrl.u32 %v2230, 16
        %v2265 = vrot.slane %v2263, 4
        %v2266 = vshll.u32 %v2230, 16
        %v2268 = vrot.slane %v2266, 5
        %v2269 = vor.u32 %v2265, %v2268
        %v2270 = vrot.slane %v2269, 4
        %v2272 = vshll.u32 %v2231, 16
        %v2274 = vrot.slane %v2272, 5
        %v2275 = vsel %vm1050, %v2270, %v2274
        %v2277 = vshrl.u32 %v2232, 16
        %v2279 = vrot.slane %v2277, 4
        %v2280 = vshll.u32 %v2232, 16
        %v2282 = vrot.slane %v2280, 5
        %v2283 = vor.u32 %v2279, %v2282
        %v2284 = vrot.slane %v2283, 4
        %v2286 = vshll.u32 %v2233, 16
        %v2288 = vrot.slane %v2286, 5
        %v2289 = vsel %vm1050, %v2284, %v2288
        %v2291 = vshrl.u32 %v2234, 16
        %v2293 = vrot.slane %v2291, 4
        %v2294 = vshll.u32 %v2234, 16
        %v2296 = vrot.slane %v2294, 5
        %v2297 = vor.u32 %v2293, %v2296
        %v2298 = vrot.slane %v2297, 4
        %v2300 = vshll.u32 %v2235, 16
        %v2302 = vrot.slane %v2300, 5
        %v2303 = vsel %vm1050, %v2298, %v2302
        %v2305 = vshrl.u32 %v2236, 16
        %v2307 = vrot.slane %v2305, 4
        %v2308 = vshll.u32 %v2236, 16
        %v2310 = vrot.slane %v2308, 5
        %v2311 = vor.u32 %v2307, %v2310
        %v2312 = vrot.slane %v2311, 4
        %v2314 = vshll.u32 %v2237, 16
        %v2316 = vrot.slane %v2314, 5
        %v2317 = vsel %vm1050, %v2312, %v2316
        %v2319 = vshrl.u32 %v2238, 16
        %v2321 = vrot.slane %v2319, 4
        %v2322 = vshll.u32 %v2238, 16
        %v2324 = vrot.slane %v2322, 5
        %v2325 = vor.u32 %v2321, %v2324
        %v2326 = vrot.slane %v2325, 4
        %v2328 = vshll.u32 %v2239, 16
        %v2330 = vrot.slane %v2328, 5
        %v2331 = vsel %vm1050, %v2326, %v2330
        %v2333 = vshrl.u32 %v2240, 16
        %v2335 = vrot.slane %v2333, 4
        %v2336 = vshll.u32 %v2240, 16
        %v2338 = vrot.slane %v2336, 5
        %v2339 = vor.u32 %v2335, %v2338
        %v2340 = vrot.slane %v2339, 4
        %v2342 = vshll.u32 %v2241, 16
        %v2344 = vrot.slane %v2342, 5
        %v2345 = vsel %vm1050, %v2340, %v2344
        %v2347 = vshrl.u32 %v2242, 16
        %v2349 = vrot.slane %v2347, 4
        %v2350 = vshll.u32 %v2242, 16
        %v2352 = vrot.slane %v2350, 5
        %v2353 = vor.u32 %v2349, %v2352
        %v2354 = vrot.slane %v2353, 4
        %v2356 = vshll.u32 %v2243, 16
        %v2358 = vrot.slane %v2356, 5
        %v2359 = vsel %vm1050, %v2354, %v2358
        %v2361 = vshrl.u32 %v2244, 16
        %v2363 = vrot.slane %v2361, 4
        %v2364 = vshll.u32 %v2244, 16
        %v2366 = vrot.slane %v2364, 5
        %v2367 = vor.u32 %v2363, %v2366
        %v2368 = vrot.slane %v2367, 4
        %v2370 = vshll.u32 %v2245, 16
        %v2372 = vrot.slane %v2370, 5
        %v2373 = vsel %vm1050, %v2368, %v2372
        %v2375 = vshrl.u32 %v2246, 16
        %v2377 = vrot.slane %v2375, 4
        %v2378 = vshll.u32 %v2246, 16
        %v2380 = vrot.slane %v2378, 5
        %v2381 = vor.u32 %v2377, %v2380
        %v2382 = vrot.slane %v2381, 4
        %v2384 = vshll.u32 %v2247, 16
        %v2386 = vrot.slane %v2384, 5
        %v2387 = vsel %vm1050, %v2382, %v2386
        %v2389 = vshrl.u32 %v2248, 16
        %v2391 = vrot.slane %v2389, 4
        %v2392 = vshll.u32 %v2248, 16
        %v2394 = vrot.slane %v2392, 5
        %v2395 = vor.u32 %v2391, %v2394
        %v2396 = vrot.slane %v2395, 4
        %v2398 = vshll.u32 %v2249, 16
        %v2400 = vrot.slane %v2398, 5
        %v2401 = vsel %vm1050, %v2396, %v2400
        %v2403 = vshrl.u32 %v2250, 16
        %v2405 = vrot.slane %v2403, 4
        %v2406 = vshll.u32 %v2250, 16
        %v2408 = vrot.slane %v2406, 5
        %v2409 = vor.u32 %v2405, %v2408
        %v2410 = vrot.slane %v2409, 4
        %v2412 = vshll.u32 %v2251, 16
        %v2414 = vrot.slane %v2412, 5
        %v2415 = vsel %vm1050, %v2410, %v2414
        %v2417 = vshrl.u32 %v2252, 16
        %v2419 = vrot.slane %v2417, 4
        %v2420 = vshll.u32 %v2252, 16
        %v2422 = vrot.slane %v2420, 5
        %v2423 = vor.u32 %v2419, %v2422
        %v2424 = vrot.slane %v2423, 4
        %v2426 = vshll.u32 %v2253, 16
        %v2428 = vrot.slane %v2426, 5
        %v2429 = vsel %vm1050, %v2424, %v2428
        %v2431 = vshrl.u32 %v2254, 16
        %v2433 = vrot.slane %v2431, 4
        %v2434 = vshll.u32 %v2254, 16
        %v2436 = vrot.slane %v2434, 5
        %v2437 = vor.u32 %v2433, %v2436
        %v2438 = vrot.slane %v2437, 4
        %v2440 = vshll.u32 %v2255, 16
        %v2442 = vrot.slane %v2440, 5
        %v2443 = vsel %vm1050, %v2438, %v2442
        %v2445 = vshrl.u32 %v2256, 16
        %v2447 = vrot.slane %v2445, 4
        %v2448 = vshll.u32 %v2256, 16
        %v2450 = vrot.slane %v2448, 5
        %v2451 = vor.u32 %v2447, %v2450
        %v2452 = vrot.slane %v2451, 4
        %v2454 = vshll.u32 %v2257, 16
        %v2456 = vrot.slane %v2454, 5
        %v2457 = vsel %vm1050, %v2452, %v2456
        %v2459 = vshrl.u32 %v2258, 16
        %v2461 = vrot.slane %v2459, 4
        %v2462 = vshll.u32 %v2258, 16
        %v2464 = vrot.slane %v2462, 5
        %v2465 = vor.u32 %v2461, %v2464
        %v2466 = vrot.slane %v2465, 4
        %v2468 = vshll.u32 %v2259, 16
        %v2470 = vrot.slane %v2468, 5
        %v2471 = vsel %vm1050, %v2466, %v2470
        %v2473 = vshrl.u32 %v2260, 16
        %v2475 = vrot.slane %v2473, 4
        %v2476 = vshll.u32 %v2260, 16
        %v2478 = vrot.slane %v2476, 5
        %v2479 = vor.u32 %v2475, %v2478
        %v2480 = vrot.slane %v2479, 4
        %v2482 = vshll.u32 %v2261, 16
        %v2484 = vrot.slane %v2482, 5
        %v2485 = vsel %vm1050, %v2480, %v2484
        %s2486 = scalar_lea.vmem %s335, 256 [#allocation6]
        %v2487 = vld [vmem:[%s2486] sm:$0xf]
        %v2488 = vld [vmem:[%s2486 + $0x4] sm:$0xf]
        %v2489 = vld [vmem:[%s2486 + $0x8] sm:$0xf]
        %v2490 = vld [vmem:[%s2486 + $0xc] sm:$0xf]
        %v2491 = vld [vmem:[%s2486 + $0x10] sm:$0xf]
        %v2492 = vld [vmem:[%s2486 + $0x14] sm:$0xf]
        %v2493 = vld [vmem:[%s2486 + $0x18] sm:$0xf]
        %v2494 = vld [vmem:[%s2486 + $0x1c] sm:$0xf]
        %v2495 = vld [vmem:[%s2486 + $0x20] sm:$0xf]
        %v2496 = vld [vmem:[%s2486 + $0x24] sm:$0xf]
        %v2497 = vld [vmem:[%s2486 + $0x28] sm:$0xf]
        %v2498 = vld [vmem:[%s2486 + $0x2c] sm:$0xf]
        %v2499 = vld [vmem:[%s2486 + $0x30] sm:$0xf]
        %v2500 = vld [vmem:[%s2486 + $0x34] sm:$0xf]
        %v2501 = vld [vmem:[%s2486 + $0x38] sm:$0xf]
        %v2502 = vld [vmem:[%s2486 + $0x3c] sm:$0xf]
        %v2503 = vunpack.c.l.b16 %v2275
        %v2504 = vunpack.c.l.b16 %v2289
        %v2505 = vunpack.c.l.b16 %v2303
        %v2506 = vunpack.c.l.b16 %v2317
        %v2507 = vunpack.c.l.b16 %v2331
        %v2508 = vunpack.c.l.b16 %v2345
        %v2509 = vunpack.c.l.b16 %v2359
        %v2510 = vunpack.c.l.b16 %v2373
        %v2511 = vunpack.c.l.b16 %v2387
        %v2512 = vunpack.c.l.b16 %v2401
        %v2513 = vunpack.c.l.b16 %v2415
        %v2514 = vunpack.c.l.b16 %v2429
        %v2515 = vunpack.c.l.b16 %v2443
        %v2516 = vunpack.c.l.b16 %v2457
        %v2517 = vunpack.c.l.b16 %v2471
        %v2518 = vunpack.c.l.b16 %v2485
        %v2519 = vpack.c.b16 %v2504, %v2503
        %v2520 = vpack.c.b16 %v2506, %v2505
        %v2521 = vpack.c.b16 %v2508, %v2507
        %v2522 = vpack.c.b16 %v2510, %v2509
        %v2523 = vpack.c.b16 %v2512, %v2511
        %v2524 = vpack.c.b16 %v2514, %v2513
        %v2525 = vpack.c.b16 %v2516, %v2515
        %v2526 = vpack.c.b16 %v2518, %v2517
        %v2551 = vunpack.c.l.b16 %v2487
        %v2552 = vunpack.c.l.b16 %v2488
        %v2553 = vunpack.c.l.b16 %v2489
        %v2554 = vunpack.c.l.b16 %v2490
        %v2555 = vunpack.c.l.b16 %v2491
        %v2556 = vunpack.c.l.b16 %v2492
        %v2557 = vunpack.c.l.b16 %v2493
        %v2558 = vunpack.c.l.b16 %v2494
        %v2559 = vunpack.c.l.b16 %v2495
        %v2560 = vunpack.c.l.b16 %v2496
        %v2561 = vunpack.c.l.b16 %v2497
        %v2562 = vunpack.c.l.b16 %v2498
        %v2563 = vunpack.c.l.b16 %v2499
        %v2564 = vunpack.c.l.b16 %v2500
        %v2565 = vunpack.c.l.b16 %v2501
        %v2566 = vunpack.c.l.b16 %v2502
        %v2567 = vpack.c.b16 %v2552, %v2551
        %v2568 = vpack.c.b16 %v2554, %v2553
        %v2569 = vpack.c.b16 %v2556, %v2555
        %v2570 = vpack.c.b16 %v2558, %v2557
        %v2571 = vpack.c.b16 %v2560, %v2559
        %v2572 = vpack.c.b16 %v2562, %v2561
        %v2573 = vpack.c.b16 %v2564, %v2563
        %v2574 = vpack.c.b16 %v2566, %v2565
        %2583 = vmatprep.subr.bf16.mxu0 0
        %2584 = vmatpush1.bf16.msra.mxu0 %v2567
        %2585 = vmatprep.subr.bf16.mxu0 0
        %2586 = vmatpush1.bf16.msra.mxu0 %v2568
        %2587 = vmatprep.subr.bf16.mxu0 0
        %2588 = vmatpush1.bf16.msra.mxu0 %v2569
        %2589 = vmatprep.subr.bf16.mxu0 0
        %2590 = vmatpush1.bf16.msra.mxu0 %v2570
        %2591 = vmatprep.subr.bf16.mxu0 0
        %2592 = vmatpush1.bf16.msra.mxu0 %v2571
        %2593 = vmatprep.subr.bf16.mxu0 0
        %2594 = vmatpush1.bf16.msra.mxu0 %v2572
        %2595 = vmatprep.subr.bf16.mxu0 0
        %2596 = vmatpush1.bf16.msra.mxu0 %v2573
        %2597 = vmatprep.subr.bf16.mxu0 0
        %2598 = vmatpush1.bf16.msra.mxu0 %v2574
        %2599 = vmatprep.subr.bf16.mxu0 0
        %2600 = vmatpush1.bf16.msra.mxu0 0
        %2601 = vmatprep.subr.bf16.mxu0 0
        %2602 = vmatpush1.bf16.msra.mxu0 0
        %2603 = vmatprep.subr.bf16.mxu0 0
        %2604 = vmatpush1.bf16.msra.mxu0 0
        %2605 = vmatprep.subr.bf16.mxu0 0
        %2606 = vmatpush1.bf16.msra.mxu0 0
        %2607 = vmatprep.subr.bf16.mxu0 0
        %2608 = vmatpush1.bf16.msra.mxu0 0
        %2609 = vmatprep.subr.bf16.mxu0 0
        %2610 = vmatpush1.bf16.msra.mxu0 0
        %2611 = vmatprep.subr.bf16.mxu0 0
        %2612 = vmatpush1.bf16.msra.mxu0 0
        %2613 = vmatprep.subr.bf16.mxu0 0
        %2614 = vmatpush1.bf16.msra.mxu0 0
        %2615 = vmatprep.mubr.bf16.mxu0 0
        %2616 = vmatmul.mubr.bf16.gmra.mrb[0].mxu0 %v2519
        %v2617 = vpop.f32.mrb[0].mxu0
        %v2618 = vadd.f32 0.0, %v2617
        %v2619 = vpop.f32.mrb[0].mxu0
        %v2620 = vpop.f32.mrb[0].mxu0
        %v2621 = vadd.f32 0.0, %v2620
        %v2622 = vpop.f32.mrb[0].mxu0
        %2623 = vmatprep.mubr.bf16.mxu0 0
        %2624 = vmatmul.mubr.bf16.gmra.mrb[0].mxu0 %v2520
        %v2625 = vpop.f32.mrb[0].mxu0
        %v2626 = vadd.f32 0.0, %v2625
        %v2627 = vpop.f32.mrb[0].mxu0
        %v2628 = vpop.f32.mrb[0].mxu0
        %v2629 = vadd.f32 0.0, %v2628
        %v2630 = vpop.f32.mrb[0].mxu0
        %2631 = vmatprep.mubr.bf16.mxu0 0
        %2632 = vmatmul.mubr.bf16.gmra.mrb[0].mxu0 %v2521
        %v2633 = vpop.f32.mrb[0].mxu0
        %v2634 = vadd.f32 0.0, %v2633
        %v2635 = vpop.f32.mrb[0].mxu0
        %v2636 = vpop.f32.mrb[0].mxu0
        %v2637 = vadd.f32 0.0, %v2636
        %v2638 = vpop.f32.mrb[0].mxu0
        %2639 = vmatprep.mubr.bf16.mxu0 0
        %2640 = vmatmul.mubr.bf16.gmra.mrb[0].mxu0 %v2522
        %v2641 = vpop.f32.mrb[0].mxu0
        %v2642 = vadd.f32 0.0, %v2641
        %v2643 = vpop.f32.mrb[0].mxu0
        %v2644 = vpop.f32.mrb[0].mxu0
        %v2645 = vadd.f32 0.0, %v2644
        %v2646 = vpop.f32.mrb[0].mxu0
        %2647 = vmatprep.mubr.bf16.mxu0 0
        %2648 = vmatmul.mubr.bf16.gmra.mrb[0].mxu0 %v2523
        %v2649 = vpop.f32.mrb[0].mxu0
        %v2650 = vadd.f32 0.0, %v2649
        %v2651 = vpop.f32.mrb[0].mxu0
        %v2652 = vpop.f32.mrb[0].mxu0
        %v2653 = vadd.f32 0.0, %v2652
        %v2654 = vpop.f32.mrb[0].mxu0
        %2655 = vmatprep.mubr.bf16.mxu0 0
        %2656 = vmatmul.mubr.bf16.gmra.mrb[0].mxu0 %v2524
        %v2657 = vpop.f32.mrb[0].mxu0
        %v2658 = vadd.f32 0.0, %v2657
        %v2659 = vpop.f32.mrb[0].mxu0
        %v2660 = vpop.f32.mrb[0].mxu0
        %v2661 = vadd.f32 0.0, %v2660
        %v2662 = vpop.f32.mrb[0].mxu0
        %2663 = vmatprep.mubr.bf16.mxu0 0
        %2664 = vmatmul.mubr.bf16.gmra.mrb[0].mxu0 %v2525
        %v2665 = vpop.f32.mrb[0].mxu0
        %v2666 = vadd.f32 0.0, %v2665
        %v2667 = vpop.f32.mrb[0].mxu0
        %v2668 = vpop.f32.mrb[0].mxu0
        %v2669 = vadd.f32 0.0, %v2668
        %v2670 = vpop.f32.mrb[0].mxu0
        %2671 = vmatprep.mubr.bf16.mxu0 0
        %2672 = vmatmul.mubr.bf16.gmra.mrb[0].mxu0 %v2526
        %v2673 = vpop.f32.mrb[0].mxu0
        %v2674 = vadd.f32 0.0, %v2673
        %v2675 = vpop.f32.mrb[0].mxu0
        %v2676 = vpop.f32.mrb[0].mxu0
        %v2677 = vadd.f32 0.0, %v2676
        %v2678 = vpop.f32.mrb[0].mxu0
        %2679 = vdwg.mxu0
        %v2680 = vadd.f32 %v2214, %v2618
        %v2681 = vadd.f32 %v2215, %v2621
        %v2682 = vadd.f32 %v2216, %v2626
        %v2683 = vadd.f32 %v2217, %v2629
        %v2684 = vadd.f32 %v2218, %v2634
        %v2685 = vadd.f32 %v2219, %v2637
        %v2686 = vadd.f32 %v2220, %v2642
        %v2687 = vadd.f32 %v2221, %v2645
        %v2688 = vadd.f32 %v2222, %v2650
        %v2689 = vadd.f32 %v2223, %v2653
        %v2690 = vadd.f32 %v2224, %v2658
        %v2691 = vadd.f32 %v2225, %v2661
        %v2692 = vadd.f32 %v2226, %v2666
        %v2693 = vadd.f32 %v2227, %v2669
        %v2694 = vadd.f32 %v2228, %v2674
        %v2695 = vadd.f32 %v2229, %v2677
        %v2696 = vld [vmem:[%s1987] sm:$0xe]
        %v2697 = vld [vmem:[%s1987 + $0x8] sm:$0xe]
        %v2698 = vld [vmem:[%s1987 + $0x10] sm:$0xe]
        %v2699 = vld [vmem:[%s1987 + $0x18] sm:$0xe]
        %v2700 = vld [vmem:[%s1987 + $0x20] sm:$0xe]
        %v2701 = vld [vmem:[%s1987 + $0x28] sm:$0xe]
        %v2702 = vld [vmem:[%s1987 + $0x30] sm:$0xe]
        %v2703 = vld [vmem:[%s1987 + $0x38] sm:$0xe]
        %v2704 = vld [vmem:[%s1987 + $0x50] sm:$0xe]
        %v2705 = vld [vmem:[%s1987 + $0x58] sm:$0xe]
        %v2706 = vld [vmem:[%s1987 + $0x60] sm:$0xe]
        %v2707 = vld [vmem:[%s1987 + $0x68] sm:$0xe]
        %v2708 = vld [vmem:[%s1987 + $0x70] sm:$0xe]
        %v2709 = vld [vmem:[%s1987 + $0x78] sm:$0xe]
        %v2710 = vld [vmem:[%s1987 + $0x80] sm:$0xe]
        %v2711 = vld [vmem:[%s1987 + $0x88] sm:$0xe]
        %v2744 = vrot.slane %v2696, 5
        %v2745 = vrot.slane %v2744, 4
        %v2746 = vrot.slane %v2231, 5
        %v2747 = vsel %vm1712, %v2745, %v2746
        %v2748 = vrot.slane %v2697, 5
        %v2749 = vrot.slane %v2748, 4
        %v2750 = vrot.slane %v2233, 5
        %v2751 = vsel %vm1712, %v2749, %v2750
        %v2752 = vrot.slane %v2698, 5
        %v2753 = vrot.slane %v2752, 4
        %v2754 = vrot.slane %v2235, 5
        %v2755 = vsel %vm1712, %v2753, %v2754
        %v2756 = vrot.slane %v2699, 5
        %v2757 = vrot.slane %v2756, 4
        %v2758 = vrot.slane %v2237, 5
        %v2759 = vsel %vm1712, %v2757, %v2758
        %v2760 = vrot.slane %v2700, 5
        %v2761 = vrot.slane %v2760, 4
        %v2762 = vrot.slane %v2239, 5
        %v2763 = vsel %vm1712, %v2761, %v2762
        %v2764 = vrot.slane %v2701, 5
        %v2765 = vrot.slane %v2764, 4
        %v2766 = vrot.slane %v2241, 5
        %v2767 = vsel %vm1712, %v2765, %v2766
        %v2768 = vrot.slane %v2702, 5
        %v2769 = vrot.slane %v2768, 4
        %v2770 = vrot.slane %v2243, 5
        %v2771 = vsel %vm1712, %v2769, %v2770
        %v2772 = vrot.slane %v2703, 5
        %v2773 = vrot.slane %v2772, 4
        %v2774 = vrot.slane %v2245, 5
        %v2775 = vsel %vm1712, %v2773, %v2774
        %v2776 = vrot.slane %v2704, 5
        %v2777 = vrot.slane %v2776, 4
        %v2778 = vrot.slane %v2247, 5
        %v2779 = vsel %vm1712, %v2777, %v2778
        %v2780 = vrot.slane %v2705, 5
        %v2781 = vrot.slane %v2780, 4
        %v2782 = vrot.slane %v2249, 5
        %v2783 = vsel %vm1712, %v2781, %v2782
        %v2784 = vrot.slane %v2706, 5
        %v2785 = vrot.slane %v2784, 4
        %v2786 = vrot.slane %v2251, 5
        %v2787 = vsel %vm1712, %v2785, %v2786
        %v2788 = vrot.slane %v2707, 5
        %v2789 = vrot.slane %v2788, 4
        %v2790 = vrot.slane %v2253, 5
        %v2791 = vsel %vm1712, %v2789, %v2790
        %v2792 = vrot.slane %v2708, 5
        %v2793 = vrot.slane %v2792, 4
        %v2794 = vrot.slane %v2255, 5
        %v2795 = vsel %vm1712, %v2793, %v2794
        %v2796 = vrot.slane %v2709, 5
        %v2797 = vrot.slane %v2796, 4
        %v2798 = vrot.slane %v2257, 5
        %v2799 = vsel %vm1712, %v2797, %v2798
        %v2800 = vrot.slane %v2710, 5
        %v2801 = vrot.slane %v2800, 4
        %v2802 = vrot.slane %v2259, 5
        %v2803 = vsel %vm1712, %v2801, %v2802
        %v2804 = vrot.slane %v2711, 5
        %v2805 = vrot.slane %v2804, 4
        %v2806 = vrot.slane %v2261, 5
        %v2807 = vsel %vm1712, %v2805, %v2806
        %s2808 = scalar_lea.vmem %s335, 320 [#allocation6]
        %v2809 = vld [vmem:[%s2808] sm:$0xf]
        %v2810 = vld [vmem:[%s2808 + $0x4] sm:$0xf]
        %v2811 = vld [vmem:[%s2808 + $0x8] sm:$0xf]
        %v2812 = vld [vmem:[%s2808 + $0xc] sm:$0xf]
        %v2813 = vld [vmem:[%s2808 + $0x10] sm:$0xf]
        %v2814 = vld [vmem:[%s2808 + $0x14] sm:$0xf]
        %v2815 = vld [vmem:[%s2808 + $0x18] sm:$0xf]
        %v2816 = vld [vmem:[%s2808 + $0x1c] sm:$0xf]
        %v2817 = vld [vmem:[%s2808 + $0x20] sm:$0xf]
        %v2818 = vld [vmem:[%s2808 + $0x24] sm:$0xf]
        %v2819 = vld [vmem:[%s2808 + $0x28] sm:$0xf]
        %v2820 = vld [vmem:[%s2808 + $0x2c] sm:$0xf]
        %v2821 = vld [vmem:[%s2808 + $0x30] sm:$0xf]
        %v2822 = vld [vmem:[%s2808 + $0x34] sm:$0xf]
        %v2823 = vld [vmem:[%s2808 + $0x38] sm:$0xf]
        %v2824 = vld [vmem:[%s2808 + $0x3c] sm:$0xf]
        %v2825 = vunpack.c.l.b16 %v2747
        %v2826 = vunpack.c.l.b16 %v2751
        %v2827 = vunpack.c.l.b16 %v2755
        %v2828 = vunpack.c.l.b16 %v2759
        %v2829 = vunpack.c.l.b16 %v2763
        %v2830 = vunpack.c.l.b16 %v2767
        %v2831 = vunpack.c.l.b16 %v2771
        %v2832 = vunpack.c.l.b16 %v2775
        %v2833 = vunpack.c.l.b16 %v2779
        %v2834 = vunpack.c.l.b16 %v2783
        %v2835 = vunpack.c.l.b16 %v2787
        %v2836 = vunpack.c.l.b16 %v2791
        %v2837 = vunpack.c.l.b16 %v2795
        %v2838 = vunpack.c.l.b16 %v2799
        %v2839 = vunpack.c.l.b16 %v2803
        %v2840 = vunpack.c.l.b16 %v2807
        %v2841 = vpack.c.b16 %v2826, %v2825
        %v2842 = vpack.c.b16 %v2828, %v2827
        %v2843 = vpack.c.b16 %v2830, %v2829
        %v2844 = vpack.c.b16 %v2832, %v2831
        %v2845 = vpack.c.b16 %v2834, %v2833
        %v2846 = vpack.c.b16 %v2836, %v2835
        %v2847 = vpack.c.b16 %v2838, %v2837
        %v2848 = vpack.c.b16 %v2840, %v2839
        %v2873 = vunpack.c.l.b16 %v2809
        %v2874 = vunpack.c.l.b16 %v2810
        %v2875 = vunpack.c.l.b16 %v2811
        %v2876 = vunpack.c.l.b16 %v2812
        %v2877 = vunpack.c.l.b16 %v2813
        %v2878 = vunpack.c.l.b16 %v2814
        %v2879 = vunpack.c.l.b16 %v2815
        %v2880 = vunpack.c.l.b16 %v2816
        %v2881 = vunpack.c.l.b16 %v2817
        %v2882 = vunpack.c.l.b16 %v2818
        %v2883 = vunpack.c.l.b16 %v2819
        %v2884 = vunpack.c.l.b16 %v2820
        %v2885 = vunpack.c.l.b16 %v2821
        %v2886 = vunpack.c.l.b16 %v2822
        %v2887 = vunpack.c.l.b16 %v2823
        %v2888 = vunpack.c.l.b16 %v2824
        %v2889 = vpack.c.b16 %v2874, %v2873
        %v2890 = vpack.c.b16 %v2876, %v2875
        %v2891 = vpack.c.b16 %v2878, %v2877
        %v2892 = vpack.c.b16 %v2880, %v2879
        %v2893 = vpack.c.b16 %v2882, %v2881
        %v2894 = vpack.c.b16 %v2884, %v2883
        %v2895 = vpack.c.b16 %v2886, %v2885
        %v2896 = vpack.c.b16 %v2888, %v2887
        %2905 = vmatprep.subr.bf16.mxu0 0
        %2906 = vmatpush1.bf16.msra.mxu0 %v2889
        %2907 = vmatprep.subr.bf16.mxu0 0
        %2908 = vmatpush1.bf16.msra.mxu0 %v2890
        %2909 = vmatprep.subr.bf16.mxu0 0
        %2910 = vmatpush1.bf16.msra.mxu0 %v2891
        %2911 = vmatprep.subr.bf16.mxu0 0
        %2912 = vmatpush1.bf16.msra.mxu0 %v2892
        %2913 = vmatprep.subr.bf16.mxu0 0
        %2914 = vmatpush1.bf16.msra.mxu0 %v2893
        %2915 = vmatprep.subr.bf16.mxu0 0
        %2916 = vmatpush1.bf16.msra.mxu0 %v2894
        %2917 = vmatprep.subr.bf16.mxu0 0
        %2918 = vmatpush1.bf16.msra.mxu0 %v2895
        %2919 = vmatprep.subr.bf16.mxu0 0
        %2920 = vmatpush1.bf16.msra.mxu0 %v2896
        %2921 = vmatprep.subr.bf16.mxu0 0
        %2922 = vmatpush1.bf16.msra.mxu0 0
        %2923 = vmatprep.subr.bf16.mxu0 0
        %2924 = vmatpush1.bf16.msra.mxu0 0
        %2925 = vmatprep.subr.bf16.mxu0 0
        %2926 = vmatpush1.bf16.msra.mxu0 0
        %2927 = vmatprep.subr.bf16.mxu0 0
        %2928 = vmatpush1.bf16.msra.mxu0 0
        %2929 = vmatprep.subr.bf16.mxu0 0
        %2930 = vmatpush1.bf16.msra.mxu0 0
        %2931 = vmatprep.subr.bf16.mxu0 0
        %2932 = vmatpush1.bf16.msra.mxu0 0
        %2933 = vmatprep.subr.bf16.mxu0 0
        %2934 = vmatpush1.bf16.msra.mxu0 0
        %2935 = vmatprep.subr.bf16.mxu0 0
        %2936 = vmatpush1.bf16.msra.mxu0 0
        %2937 = vmatprep.mubr.bf16.mxu0 0
        %2938 = vmatmul.mubr.bf16.gmra.mrb[0].mxu0 %v2841
        %v2939 = vpop.f32.mrb[0].mxu0
        %v2940 = vadd.f32 0.0, %v2939
        %v2941 = vpop.f32.mrb[0].mxu0
        %v2942 = vpop.f32.mrb[0].mxu0
        %v2943 = vadd.f32 0.0, %v2942
        %v2944 = vpop.f32.mrb[0].mxu0
        %2945 = vmatprep.mubr.bf16.mxu0 0
        %2946 = vmatmul.mubr.bf16.gmra.mrb[0].mxu0 %v2842
        %v2947 = vpop.f32.mrb[0].mxu0
        %v2948 = vadd.f32 0.0, %v2947
        %v2949 = vpop.f32.mrb[0].mxu0
        %v2950 = vpop.f32.mrb[0].mxu0
        %v2951 = vadd.f32 0.0, %v2950
        %v2952 = vpop.f32.mrb[0].mxu0
        %2953 = vmatprep.mubr.bf16.mxu0 0
        %2954 = vmatmul.mubr.bf16.gmra.mrb[0].mxu0 %v2843
        %v2955 = vpop.f32.mrb[0].mxu0
        %v2956 = vadd.f32 0.0, %v2955
        %v2957 = vpop.f32.mrb[0].mxu0
        %v2958 = vpop.f32.mrb[0].mxu0
        %v2959 = vadd.f32 0.0, %v2958
        %v2960 = vpop.f32.mrb[0].mxu0
        %2961 = vmatprep.mubr.bf16.mxu0 0
        %2962 = vmatmul.mubr.bf16.gmra.mrb[0].mxu0 %v2844
        %v2963 = vpop.f32.mrb[0].mxu0
        %v2964 = vadd.f32 0.0, %v2963
        %v2965 = vpop.f32.mrb[0].mxu0
        %v2966 = vpop.f32.mrb[0].mxu0
        %v2967 = vadd.f32 0.0, %v2966
        %v2968 = vpop.f32.mrb[0].mxu0
        %2969 = vmatprep.mubr.bf16.mxu0 0
        %2970 = vmatmul.mubr.bf16.gmra.mrb[0].mxu0 %v2845
        %v2971 = vpop.f32.mrb[0].mxu0
        %v2972 = vadd.f32 0.0, %v2971
        %v2973 = vpop.f32.mrb[0].mxu0
        %v2974 = vpop.f32.mrb[0].mxu0
        %v2975 = vadd.f32 0.0, %v2974
        %v2976 = vpop.f32.mrb[0].mxu0
        %2977 = vmatprep.mubr.bf16.mxu0 0
        %2978 = vmatmul.mubr.bf16.gmra.mrb[0].mxu0 %v2846
        %v2979 = vpop.f32.mrb[0].mxu0
        %v2980 = vadd.f32 0.0, %v2979
        %v2981 = vpop.f32.mrb[0].mxu0
        %v2982 = vpop.f32.mrb[0].mxu0
        %v2983 = vadd.f32 0.0, %v2982
        %v2984 = vpop.f32.mrb[0].mxu0
        %2985 = vmatprep.mubr.bf16.mxu0 0
        %2986 = vmatmul.mubr.bf16.gmra.mrb[0].mxu0 %v2847
        %v2987 = vpop.f32.mrb[0].mxu0
        %v2988 = vadd.f32 0.0, %v2987
        %v2989 = vpop.f32.mrb[0].mxu0
        %v2990 = vpop.f32.mrb[0].mxu0
        %v2991 = vadd.f32 0.0, %v2990
        %v2992 = vpop.f32.mrb[0].mxu0
        %2993 = vmatprep.mubr.bf16.mxu0 0
        %2994 = vmatmul.mubr.bf16.gmra.mrb[0].mxu0 %v2848
        %v2995 = vpop.f32.mrb[0].mxu0
        %v2996 = vadd.f32 0.0, %v2995
        %v2997 = vpop.f32.mrb[0].mxu0
        %v2998 = vpop.f32.mrb[0].mxu0
        %v2999 = vadd.f32 0.0, %v2998
        %v3000 = vpop.f32.mrb[0].mxu0
        %3001 = vdwg.mxu0
        %v3002 = vadd.f32 %v2680, %v2940
        %v3003 = vadd.f32 %v2681, %v2943
        %v3004 = vadd.f32 %v2682, %v2948
        %v3005 = vadd.f32 %v2683, %v2951
        %v3006 = vadd.f32 %v2684, %v2956
        %v3007 = vadd.f32 %v2685, %v2959
        %v3008 = vadd.f32 %v2686, %v2964
        %v3009 = vadd.f32 %v2687, %v2967
        %v3010 = vadd.f32 %v2688, %v2972
        %v3011 = vadd.f32 %v2689, %v2975
        %v3012 = vadd.f32 %v2690, %v2980
        %v3013 = vadd.f32 %v2691, %v2983
        %v3014 = vadd.f32 %v2692, %v2988
        %v3015 = vadd.f32 %v2693, %v2991
        %v3016 = vadd.f32 %v2694, %v2996
        %v3017 = vadd.f32 %v2695, %v2999
        %s3018 = scalar_lea.vmem [#allocation2], 16
        %v3019 = vld [vmem:[%s3018] sm:$0xf]
        %v3020 = vld [vmem:[%s3018 + $0x8] sm:$0xf]
        %v3021 = vld [vmem:[%s3018 + $0x10] sm:$0xf]
        %v3022 = vld [vmem:[%s3018 + $0x18] sm:$0xf]
        %v3023 = vld [vmem:[%s3018 + $0x20] sm:$0xf]
        %v3024 = vld [vmem:[%s3018 + $0x28] sm:$0xf]
        %v3025 = vld [vmem:[%s3018 + $0x30] sm:$0xf]
        %v3026 = vld [vmem:[%s3018 + $0x38] sm:$0xf]
        %v3027 = vld [vmem:[%s3018 + $0x50] sm:$0xf]
        %v3028 = vld [vmem:[%s3018 + $0x58] sm:$0xf]
        %v3029 = vld [vmem:[%s3018 + $0x60] sm:$0xf]
        %v3030 = vld [vmem:[%s3018 + $0x68] sm:$0xf]
        %v3031 = vld [vmem:[%s3018 + $0x70] sm:$0xf]
        %v3032 = vld [vmem:[%s3018 + $0x78] sm:$0xf]
        %v3033 = vld [vmem:[%s3018 + $0x80] sm:$0xf]
        %v3034 = vld [vmem:[%s3018 + $0x88] sm:$0xf]
        %s3035 = scalar_lea.vmem %s335, 384 [#allocation6]
        %v3036 = vld [vmem:[%s3035] sm:$0xf]
        %v3037 = vld [vmem:[%s3035 + $0x4] sm:$0xf]
        %v3038 = vld [vmem:[%s3035 + $0x8] sm:$0xf]
        %v3039 = vld [vmem:[%s3035 + $0xc] sm:$0xf]
        %v3040 = vld [vmem:[%s3035 + $0x10] sm:$0xf]
        %v3041 = vld [vmem:[%s3035 + $0x14] sm:$0xf]
        %v3042 = vld [vmem:[%s3035 + $0x18] sm:$0xf]
        %v3043 = vld [vmem:[%s3035 + $0x1c] sm:$0xf]
        %v3044 = vld [vmem:[%s3035 + $0x20] sm:$0xf]
        %v3045 = vld [vmem:[%s3035 + $0x24] sm:$0xf]
        %v3046 = vld [vmem:[%s3035 + $0x28] sm:$0xf]
        %v3047 = vld [vmem:[%s3035 + $0x2c] sm:$0xf]
        %v3048 = vld [vmem:[%s3035 + $0x30] sm:$0xf]
        %v3049 = vld [vmem:[%s3035 + $0x34] sm:$0xf]
        %v3050 = vld [vmem:[%s3035 + $0x38] sm:$0xf]
        %v3051 = vld [vmem:[%s3035 + $0x3c] sm:$0xf]
        %v3068 = vunpack.c.l.b16 %v3019
        %v3069 = vunpack.c.l.b16 %v3020
        %v3070 = vunpack.c.l.b16 %v3021
        %v3071 = vunpack.c.l.b16 %v3022
        %v3072 = vunpack.c.l.b16 %v3023
        %v3073 = vunpack.c.l.b16 %v3024
        %v3074 = vunpack.c.l.b16 %v3025
        %v3075 = vunpack.c.l.b16 %v3026
        %v3076 = vunpack.c.l.b16 %v3027
        %v3077 = vunpack.c.l.b16 %v3028
        %v3078 = vunpack.c.l.b16 %v3029
        %v3079 = vunpack.c.l.b16 %v3030
        %v3080 = vunpack.c.l.b16 %v3031
        %v3081 = vunpack.c.l.b16 %v3032
        %v3082 = vunpack.c.l.b16 %v3033
        %v3083 = vunpack.c.l.b16 %v3034
        %v3084 = vpack.c.b16 %v3069, %v3068
        %v3085 = vpack.c.b16 %v3071, %v3070
        %v3086 = vpack.c.b16 %v3073, %v3072
        %v3087 = vpack.c.b16 %v3075, %v3074
        %v3088 = vpack.c.b16 %v3077, %v3076
        %v3089 = vpack.c.b16 %v3079, %v3078
        %v3090 = vpack.c.b16 %v3081, %v3080
        %v3091 = vpack.c.b16 %v3083, %v3082
        %v3116 = vunpack.c.l.b16 %v3036
        %v3117 = vunpack.c.l.b16 %v3037
        %v3118 = vunpack.c.l.b16 %v3038
        %v3119 = vunpack.c.l.b16 %v3039
        %v3120 = vunpack.c.l.b16 %v3040
        %v3121 = vunpack.c.l.b16 %v3041
        %v3122 = vunpack.c.l.b16 %v3042
        %v3123 = vunpack.c.l.b16 %v3043
        %v3124 = vunpack.c.l.b16 %v3044
        %v3125 = vunpack.c.l.b16 %v3045
        %v3126 = vunpack.c.l.b16 %v3046
        %v3127 = vunpack.c.l.b16 %v3047
        %v3128 = vunpack.c.l.b16 %v3048
        %v3129 = vunpack.c.l.b16 %v3049
        %v3130 = vunpack.c.l.b16 %v3050
        %v3131 = vunpack.c.l.b16 %v3051
        %v3132 = vpack.c.b16 %v3117, %v3116
        %v3133 = vpack.c.b16 %v3119, %v3118
        %v3134 = vpack.c.b16 %v3121, %v3120
        %v3135 = vpack.c.b16 %v3123, %v3122
        %v3136 = vpack.c.b16 %v3125, %v3124
        %v3137 = vpack.c.b16 %v3127, %v3126
        %v3138 = vpack.c.b16 %v3129, %v3128
        %v3139 = vpack.c.b16 %v3131, %v3130
        %3148 = vmatprep.subr.bf16.mxu0 0
        %3149 = vmatpush1.bf16.msra.mxu0 %v3132
        %3150 = vmatprep.subr.bf16.mxu0 0
        %3151 = vmatpush1.bf16.msra.mxu0 %v3133
        %3152 = vmatprep.subr.bf16.mxu0 0
        %3153 = vmatpush1.bf16.msra.mxu0 %v3134
        %3154 = vmatprep.subr.bf16.mxu0 0
        %3155 = vmatpush1.bf16.msra.mxu0 %v3135
        %3156 = vmatprep.subr.bf16.mxu0 0
        %3157 = vmatpush1.bf16.msra.mxu0 %v3136
        %3158 = vmatprep.subr.bf16.mxu0 0
        %3159 = vmatpush1.bf16.msra.mxu0 %v3137
        %3160 = vmatprep.subr.bf16.mxu0 0
        %3161 = vmatpush1.bf16.msra.mxu0 %v3138
        %3162 = vmatprep.subr.bf16.mxu0 0
        %3163 = vmatpush1.bf16.msra.mxu0 %v3139
        %3164 = vmatprep.subr.bf16.mxu0 0
        %3165 = vmatpush1.bf16.msra.mxu0 0
        %3166 = vmatprep.subr.bf16.mxu0 0
        %3167 = vmatpush1.bf16.msra.mxu0 0
        %3168 = vmatprep.subr.bf16.mxu0 0
        %3169 = vmatpush1.bf16.msra.mxu0 0
        %3170 = vmatprep.subr.bf16.mxu0 0
        %3171 = vmatpush1.bf16.msra.mxu0 0
        %3172 = vmatprep.subr.bf16.mxu0 0
        %3173 = vmatpush1.bf16.msra.mxu0 0
        %3174 = vmatprep.subr.bf16.mxu0 0
        %3175 = vmatpush1.bf16.msra.mxu0 0
        %3176 = vmatprep.subr.bf16.mxu0 0
        %3177 = vmatpush1.bf16.msra.mxu0 0
        %3178 = vmatprep.subr.bf16.mxu0 0
        %3179 = vmatpush1.bf16.msra.mxu0 0
        %3180 = vmatprep.mubr.bf16.mxu0 0
        %3181 = vmatmul.mubr.bf16.gmra.mrb[0].mxu0 %v3084
        %v3182 = vpop.f32.mrb[0].mxu0
        %v3183 = vadd.f32 0.0, %v3182
        %v3184 = vpop.f32.mrb[0].mxu0
        %v3185 = vpop.f32.mrb[0].mxu0
        %v3186 = vadd.f32 0.0, %v3185
        %v3187 = vpop.f32.mrb[0].mxu0
        %3188 = vmatprep.mubr.bf16.mxu0 0
        %3189 = vmatmul.mubr.bf16.gmra.mrb[0].mxu0 %v3085
        %v3190 = vpop.f32.mrb[0].mxu0
        %v3191 = vadd.f32 0.0, %v3190
        %v3192 = vpop.f32.mrb[0].mxu0
        %v3193 = vpop.f32.mrb[0].mxu0
        %v3194 = vadd.f32 0.0, %v3193
        %v3195 = vpop.f32.mrb[0].mxu0
        %3196 = vmatprep.mubr.bf16.mxu0 0
        %3197 = vmatmul.mubr.bf16.gmra.mrb[0].mxu0 %v3086
        %v3198 = vpop.f32.mrb[0].mxu0
        %v3199 = vadd.f32 0.0, %v3198
        %v3200 = vpop.f32.mrb[0].mxu0
        %v3201 = vpop.f32.mrb[0].mxu0
        %v3202 = vadd.f32 0.0, %v3201
        %v3203 = vpop.f32.mrb[0].mxu0
        %3204 = vmatprep.mubr.bf16.mxu0 0
        %3205 = vmatmul.mubr.bf16.gmra.mrb[0].mxu0 %v3087
        %v3206 = vpop.f32.mrb[0].mxu0
        %v3207 = vadd.f32 0.0, %v3206
        %v3208 = vpop.f32.mrb[0].mxu0
        %v3209 = vpop.f32.mrb[0].mxu0
        %v3210 = vadd.f32 0.0, %v3209
        %v3211 = vpop.f32.mrb[0].mxu0
        %3212 = vmatprep.mubr.bf16.mxu0 0
        %3213 = vmatmul.mubr.bf16.gmra.mrb[0].mxu0 %v3088
        %v3214 = vpop.f32.mrb[0].mxu0
        %v3215 = vadd.f32 0.0, %v3214
        %v3216 = vpop.f32.mrb[0].mxu0
        %v3217 = vpop.f32.mrb[0].mxu0
        %v3218 = vadd.f32 0.0, %v3217
        %v3219 = vpop.f32.mrb[0].mxu0
        %3220 = vmatprep.mubr.bf16.mxu0 0
        %3221 = vmatmul.mubr.bf16.gmra.mrb[0].mxu0 %v3089
        %v3222 = vpop.f32.mrb[0].mxu0
        %v3223 = vadd.f32 0.0, %v3222
        %v3224 = vpop.f32.mrb[0].mxu0
        %v3225 = vpop.f32.mrb[0].mxu0
        %v3226 = vadd.f32 0.0, %v3225
        %v3227 = vpop.f32.mrb[0].mxu0
        %3228 = vmatprep.mubr.bf16.mxu0 0
        %3229 = vmatmul.mubr.bf16.gmra.mrb[0].mxu0 %v3090
        %v3230 = vpop.f32.mrb[0].mxu0
        %v3231 = vadd.f32 0.0, %v3230
        %v3232 = vpop.f32.mrb[0].mxu0
        %v3233 = vpop.f32.mrb[0].mxu0
        %v3234 = vadd.f32 0.0, %v3233
        %v3235 = vpop.f32.mrb[0].mxu0
        %3236 = vmatprep.mubr.bf16.mxu0 0
        %3237 = vmatmul.mubr.bf16.gmra.mrb[0].mxu0 %v3091
        %v3238 = vpop.f32.mrb[0].mxu0
        %v3239 = vadd.f32 0.0, %v3238
        %v3240 = vpop.f32.mrb[0].mxu0
        %v3241 = vpop.f32.mrb[0].mxu0
        %v3242 = vadd.f32 0.0, %v3241
        %v3243 = vpop.f32.mrb[0].mxu0
        %3244 = vdwg.mxu0
        %v3245 = vadd.f32 %v3002, %v3183
        %v3246 = vadd.f32 %v3003, %v3186
        %v3247 = vadd.f32 %v3004, %v3191
        %v3248 = vadd.f32 %v3005, %v3194
        %v3249 = vadd.f32 %v3006, %v3199
        %v3250 = vadd.f32 %v3007, %v3202
        %v3251 = vadd.f32 %v3008, %v3207
        %v3252 = vadd.f32 %v3009, %v3210
        %v3253 = vadd.f32 %v3010, %v3215
        %v3254 = vadd.f32 %v3011, %v3218
        %v3255 = vadd.f32 %v3012, %v3223
        %v3256 = vadd.f32 %v3013, %v3226
        %v3257 = vadd.f32 %v3014, %v3231
        %v3258 = vadd.f32 %v3015, %v3234
        %v3259 = vadd.f32 %v3016, %v3239
        %v3260 = vadd.f32 %v3017, %v3242
        %v3261 = vld [vmem:[%s3018] sm:$0xf]
        %v3262 = vld [vmem:[%s3018 + $0x4] sm:$0x1]
        %v3263 = vld [vmem:[%s3018 + $0x8] sm:$0xf]
        %v3264 = vld [vmem:[%s3018 + $0xc] sm:$0x1]
        %v3265 = vld [vmem:[%s3018 + $0x10] sm:$0xf]
        %v3266 = vld [vmem:[%s3018 + $0x14] sm:$0x1]
        %v3267 = vld [vmem:[%s3018 + $0x18] sm:$0xf]
        %v3268 = vld [vmem:[%s3018 + $0x1c] sm:$0x1]
        %v3269 = vld [vmem:[%s3018 + $0x20] sm:$0xf]
        %v3270 = vld [vmem:[%s3018 + $0x24] sm:$0x1]
        %v3271 = vld [vmem:[%s3018 + $0x28] sm:$0xf]
        %v3272 = vld [vmem:[%s3018 + $0x2c] sm:$0x1]
        %v3273 = vld [vmem:[%s3018 + $0x30] sm:$0xf]
        %v3274 = vld [vmem:[%s3018 + $0x34] sm:$0x1]
        %v3275 = vld [vmem:[%s3018 + $0x38] sm:$0xf]
        %v3276 = vld [vmem:[%s3018 + $0x3c] sm:$0x1]
        %v3277 = vld [vmem:[%s3018 + $0x50] sm:$0xf]
        %v3278 = vld [vmem:[%s3018 + $0x54] sm:$0x1]
        %v3279 = vld [vmem:[%s3018 + $0x58] sm:$0xf]
        %v3280 = vld [vmem:[%s3018 + $0x5c] sm:$0x1]
        %v3281 = vld [vmem:[%s3018 + $0x60] sm:$0xf]
        %v3282 = vld [vmem:[%s3018 + $0x64] sm:$0x1]
        %v3283 = vld [vmem:[%s3018 + $0x68] sm:$0xf]
        %v3284 = vld [vmem:[%s3018 + $0x6c] sm:$0x1]
        %v3285 = vld [vmem:[%s3018 + $0x70] sm:$0xf]
        %v3286 = vld [vmem:[%s3018 + $0x74] sm:$0x1]
        %v3287 = vld [vmem:[%s3018 + $0x78] sm:$0xf]
        %v3288 = vld [vmem:[%s3018 + $0x7c] sm:$0x1]
        %v3289 = vld [vmem:[%s3018 + $0x80] sm:$0xf]
        %v3290 = vld [vmem:[%s3018 + $0x84] sm:$0x1]
        %v3291 = vld [vmem:[%s3018 + $0x88] sm:$0xf]
        %v3292 = vld [vmem:[%s3018 + $0x8c] sm:$0x1]
        %v3294 = vshrl.u32 %v3261, 16
        %v3296 = vrot.slane %v3294, 4
        %v3297 = vshll.u32 %v3261, 16
        %v3299 = vrot.slane %v3297, 5
        %v3300 = vor.u32 %v3296, %v3299
        %v3301 = vrot.slane %v3300, 4
        %v3303 = vshll.u32 %v3262, 16
        %v3305 = vrot.slane %v3303, 5
        %v3306 = vsel %vm1050, %v3301, %v3305
        %v3308 = vshrl.u32 %v3263, 16
        %v3310 = vrot.slane %v3308, 4
        %v3311 = vshll.u32 %v3263, 16
        %v3313 = vrot.slane %v3311, 5
        %v3314 = vor.u32 %v3310, %v3313
        %v3315 = vrot.slane %v3314, 4
        %v3317 = vshll.u32 %v3264, 16
        %v3319 = vrot.slane %v3317, 5
        %v3320 = vsel %vm1050, %v3315, %v3319
        %v3322 = vshrl.u32 %v3265, 16
        %v3324 = vrot.slane %v3322, 4
        %v3325 = vshll.u32 %v3265, 16
        %v3327 = vrot.slane %v3325, 5
        %v3328 = vor.u32 %v3324, %v3327
        %v3329 = vrot.slane %v3328, 4
        %v3331 = vshll.u32 %v3266, 16
        %v3333 = vrot.slane %v3331, 5
        %v3334 = vsel %vm1050, %v3329, %v3333
        %v3336 = vshrl.u32 %v3267, 16
        %v3338 = vrot.slane %v3336, 4
        %v3339 = vshll.u32 %v3267, 16
        %v3341 = vrot.slane %v3339, 5
        %v3342 = vor.u32 %v3338, %v3341
        %v3343 = vrot.slane %v3342, 4
        %v3345 = vshll.u32 %v3268, 16
        %v3347 = vrot.slane %v3345, 5
        %v3348 = vsel %vm1050, %v3343, %v3347
        %v3350 = vshrl.u32 %v3269, 16
        %v3352 = vrot.slane %v3350, 4
        %v3353 = vshll.u32 %v3269, 16
        %v3355 = vrot.slane %v3353, 5
        %v3356 = vor.u32 %v3352, %v3355
        %v3357 = vrot.slane %v3356, 4
        %v3359 = vshll.u32 %v3270, 16
        %v3361 = vrot.slane %v3359, 5
        %v3362 = vsel %vm1050, %v3357, %v3361
        %v3364 = vshrl.u32 %v3271, 16
        %v3366 = vrot.slane %v3364, 4
        %v3367 = vshll.u32 %v3271, 16
        %v3369 = vrot.slane %v3367, 5
        %v3370 = vor.u32 %v3366, %v3369
        %v3371 = vrot.slane %v3370, 4
        %v3373 = vshll.u32 %v3272, 16
        %v3375 = vrot.slane %v3373, 5
        %v3376 = vsel %vm1050, %v3371, %v3375
        %v3378 = vshrl.u32 %v3273, 16
        %v3380 = vrot.slane %v3378, 4
        %v3381 = vshll.u32 %v3273, 16
        %v3383 = vrot.slane %v3381, 5
        %v3384 = vor.u32 %v3380, %v3383
        %v3385 = vrot.slane %v3384, 4
        %v3387 = vshll.u32 %v3274, 16
        %v3389 = vrot.slane %v3387, 5
        %v3390 = vsel %vm1050, %v3385, %v3389
        %v3392 = vshrl.u32 %v3275, 16
        %v3394 = vrot.slane %v3392, 4
        %v3395 = vshll.u32 %v3275, 16
        %v3397 = vrot.slane %v3395, 5
        %v3398 = vor.u32 %v3394, %v3397
        %v3399 = vrot.slane %v3398, 4
        %v3401 = vshll.u32 %v3276, 16
        %v3403 = vrot.slane %v3401, 5
        %v3404 = vsel %vm1050, %v3399, %v3403
        %v3406 = vshrl.u32 %v3277, 16
        %v3408 = vrot.slane %v3406, 4
        %v3409 = vshll.u32 %v3277, 16
        %v3411 = vrot.slane %v3409, 5
        %v3412 = vor.u32 %v3408, %v3411
        %v3413 = vrot.slane %v3412, 4
        %v3415 = vshll.u32 %v3278, 16
        %v3417 = vrot.slane %v3415, 5
        %v3418 = vsel %vm1050, %v3413, %v3417
        %v3420 = vshrl.u32 %v3279, 16
        %v3422 = vrot.slane %v3420, 4
        %v3423 = vshll.u32 %v3279, 16
        %v3425 = vrot.slane %v3423, 5
        %v3426 = vor.u32 %v3422, %v3425
        %v3427 = vrot.slane %v3426, 4
        %v3429 = vshll.u32 %v3280, 16
        %v3431 = vrot.slane %v3429, 5
        %v3432 = vsel %vm1050, %v3427, %v3431
        %v3434 = vshrl.u32 %v3281, 16
        %v3436 = vrot.slane %v3434, 4
        %v3437 = vshll.u32 %v3281, 16
        %v3439 = vrot.slane %v3437, 5
        %v3440 = vor.u32 %v3436, %v3439
        %v3441 = vrot.slane %v3440, 4
        %v3443 = vshll.u32 %v3282, 16
        %v3445 = vrot.slane %v3443, 5
        %v3446 = vsel %vm1050, %v3441, %v3445
        %v3448 = vshrl.u32 %v3283, 16
        %v3450 = vrot.slane %v3448, 4
        %v3451 = vshll.u32 %v3283, 16
        %v3453 = vrot.slane %v3451, 5
        %v3454 = vor.u32 %v3450, %v3453
        %v3455 = vrot.slane %v3454, 4
        %v3457 = vshll.u32 %v3284, 16
        %v3459 = vrot.slane %v3457, 5
        %v3460 = vsel %vm1050, %v3455, %v3459
        %v3462 = vshrl.u32 %v3285, 16
        %v3464 = vrot.slane %v3462, 4
        %v3465 = vshll.u32 %v3285, 16
        %v3467 = vrot.slane %v3465, 5
        %v3468 = vor.u32 %v3464, %v3467
        %v3469 = vrot.slane %v3468, 4
        %v3471 = vshll.u32 %v3286, 16
        %v3473 = vrot.slane %v3471, 5
        %v3474 = vsel %vm1050, %v3469, %v3473
        %v3476 = vshrl.u32 %v3287, 16
        %v3478 = vrot.slane %v3476, 4
        %v3479 = vshll.u32 %v3287, 16
        %v3481 = vrot.slane %v3479, 5
        %v3482 = vor.u32 %v3478, %v3481
        %v3483 = vrot.slane %v3482, 4
        %v3485 = vshll.u32 %v3288, 16
        %v3487 = vrot.slane %v3485, 5
        %v3488 = vsel %vm1050, %v3483, %v3487
        %v3490 = vshrl.u32 %v3289, 16
        %v3492 = vrot.slane %v3490, 4
        %v3493 = vshll.u32 %v3289, 16
        %v3495 = vrot.slane %v3493, 5
        %v3496 = vor.u32 %v3492, %v3495
        %v3497 = vrot.slane %v3496, 4
        %v3499 = vshll.u32 %v3290, 16
        %v3501 = vrot.slane %v3499, 5
        %v3502 = vsel %vm1050, %v3497, %v3501
        %v3504 = vshrl.u32 %v3291, 16
        %v3506 = vrot.slane %v3504, 4
        %v3507 = vshll.u32 %v3291, 16
        %v3509 = vrot.slane %v3507, 5
        %v3510 = vor.u32 %v3506, %v3509
        %v3511 = vrot.slane %v3510, 4
        %v3513 = vshll.u32 %v3292, 16
        %v3515 = vrot.slane %v3513, 5
        %v3516 = vsel %vm1050, %v3511, %v3515
        %s3517 = scalar_lea.vmem %s335, 448 [#allocation6]
        %v3518 = vld [vmem:[%s3517] sm:$0xf]
        %v3519 = vld [vmem:[%s3517 + $0x4] sm:$0xf]
        %v3520 = vld [vmem:[%s3517 + $0x8] sm:$0xf]
        %v3521 = vld [vmem:[%s3517 + $0xc] sm:$0xf]
        %v3522 = vld [vmem:[%s3517 + $0x10] sm:$0xf]
        %v3523 = vld [vmem:[%s3517 + $0x14] sm:$0xf]
        %v3524 = vld [vmem:[%s3517 + $0x18] sm:$0xf]
        %v3525 = vld [vmem:[%s3517 + $0x1c] sm:$0xf]
        %v3526 = vld [vmem:[%s3517 + $0x20] sm:$0xf]
        %v3527 = vld [vmem:[%s3517 + $0x24] sm:$0xf]
        %v3528 = vld [vmem:[%s3517 + $0x28] sm:$0xf]
        %v3529 = vld [vmem:[%s3517 + $0x2c] sm:$0xf]
        %v3530 = vld [vmem:[%s3517 + $0x30] sm:$0xf]
        %v3531 = vld [vmem:[%s3517 + $0x34] sm:$0xf]
        %v3532 = vld [vmem:[%s3517 + $0x38] sm:$0xf]
        %v3533 = vld [vmem:[%s3517 + $0x3c] sm:$0xf]
        %v3534 = vunpack.c.l.b16 %v3306
        %v3535 = vunpack.c.l.b16 %v3320
        %v3536 = vunpack.c.l.b16 %v3334
        %v3537 = vunpack.c.l.b16 %v3348
        %v3538 = vunpack.c.l.b16 %v3362
        %v3539 = vunpack.c.l.b16 %v3376
        %v3540 = vunpack.c.l.b16 %v3390
        %v3541 = vunpack.c.l.b16 %v3404
        %v3542 = vunpack.c.l.b16 %v3418
        %v3543 = vunpack.c.l.b16 %v3432
        %v3544 = vunpack.c.l.b16 %v3446
        %v3545 = vunpack.c.l.b16 %v3460
        %v3546 = vunpack.c.l.b16 %v3474
        %v3547 = vunpack.c.l.b16 %v3488
        %v3548 = vunpack.c.l.b16 %v3502
        %v3549 = vunpack.c.l.b16 %v3516
        %v3550 = vpack.c.b16 %v3535, %v3534
        %v3551 = vpack.c.b16 %v3537, %v3536
        %v3552 = vpack.c.b16 %v3539, %v3538
        %v3553 = vpack.c.b16 %v3541, %v3540
        %v3554 = vpack.c.b16 %v3543, %v3542
        %v3555 = vpack.c.b16 %v3545, %v3544
        %v3556 = vpack.c.b16 %v3547, %v3546
        %v3557 = vpack.c.b16 %v3549, %v3548
        %v3582 = vunpack.c.l.b16 %v3518
        %v3583 = vunpack.c.l.b16 %v3519
        %v3584 = vunpack.c.l.b16 %v3520
        %v3585 = vunpack.c.l.b16 %v3521
        %v3586 = vunpack.c.l.b16 %v3522
        %v3587 = vunpack.c.l.b16 %v3523
        %v3588 = vunpack.c.l.b16 %v3524
        %v3589 = vunpack.c.l.b16 %v3525
        %v3590 = vunpack.c.l.b16 %v3526
        %v3591 = vunpack.c.l.b16 %v3527
        %v3592 = vunpack.c.l.b16 %v3528
        %v3593 = vunpack.c.l.b16 %v3529
        %v3594 = vunpack.c.l.b16 %v3530
        %v3595 = vunpack.c.l.b16 %v3531
        %v3596 = vunpack.c.l.b16 %v3532
        %v3597 = vunpack.c.l.b16 %v3533
        %v3598 = vpack.c.b16 %v3583, %v3582
        %v3599 = vpack.c.b16 %v3585, %v3584
        %v3600 = vpack.c.b16 %v3587, %v3586
        %v3601 = vpack.c.b16 %v3589, %v3588
        %v3602 = vpack.c.b16 %v3591, %v3590
        %v3603 = vpack.c.b16 %v3593, %v3592
        %v3604 = vpack.c.b16 %v3595, %v3594
        %v3605 = vpack.c.b16 %v3597, %v3596
        %3614 = vmatprep.subr.bf16.mxu0 0
        %3615 = vmatpush1.bf16.msra.mxu0 %v3598
        %3616 = vmatprep.subr.bf16.mxu0 0
        %3617 = vmatpush1.bf16.msra.mxu0 %v3599
        %3618 = vmatprep.subr.bf16.mxu0 0
        %3619 = vmatpush1.bf16.msra.mxu0 %v3600
        %3620 = vmatprep.subr.bf16.mxu0 0
        %3621 = vmatpush1.bf16.msra.mxu0 %v3601
        %3622 = vmatprep.subr.bf16.mxu0 0
        %3623 = vmatpush1.bf16.msra.mxu0 %v3602
        %3624 = vmatprep.subr.bf16.mxu0 0
        %3625 = vmatpush1.bf16.msra.mxu0 %v3603
        %3626 = vmatprep.subr.bf16.mxu0 0
        %3627 = vmatpush1.bf16.msra.mxu0 %v3604
        %3628 = vmatprep.subr.bf16.mxu0 0
        %3629 = vmatpush1.bf16.msra.mxu0 %v3605
        %3630 = vmatprep.subr.bf16.mxu0 0
        %3631 = vmatpush1.bf16.msra.mxu0 0
        %3632 = vmatprep.subr.bf16.mxu0 0
        %3633 = vmatpush1.bf16.msra.mxu0 0
        %3634 = vmatprep.subr.bf16.mxu0 0
        %3635 = vmatpush1.bf16.msra.mxu0 0
        %3636 = vmatprep.subr.bf16.mxu0 0
        %3637 = vmatpush1.bf16.msra.mxu0 0
        %3638 = vmatprep.subr.bf16.mxu0 0
        %3639 = vmatpush1.bf16.msra.mxu0 0
        %3640 = vmatprep.subr.bf16.mxu0 0
        %3641 = vmatpush1.bf16.msra.mxu0 0
        %3642 = vmatprep.subr.bf16.mxu0 0
        %3643 = vmatpush1.bf16.msra.mxu0 0
        %3644 = vmatprep.subr.bf16.mxu0 0
        %3645 = vmatpush1.bf16.msra.mxu0 0
        %3646 = vmatprep.mubr.bf16.mxu0 0
        %3647 = vmatmul.mubr.bf16.gmra.mrb[0].mxu0 %v3550
        %v3648 = vpop.f32.mrb[0].mxu0
        %v3649 = vadd.f32 0.0, %v3648
        %v3650 = vpop.f32.mrb[0].mxu0
        %v3651 = vpop.f32.mrb[0].mxu0
        %v3652 = vadd.f32 0.0, %v3651
        %v3653 = vpop.f32.mrb[0].mxu0
        %3654 = vmatprep.mubr.bf16.mxu0 0
        %3655 = vmatmul.mubr.bf16.gmra.mrb[0].mxu0 %v3551
        %v3656 = vpop.f32.mrb[0].mxu0
        %v3657 = vadd.f32 0.0, %v3656
        %v3658 = vpop.f32.mrb[0].mxu0
        %v3659 = vpop.f32.mrb[0].mxu0
        %v3660 = vadd.f32 0.0, %v3659
        %v3661 = vpop.f32.mrb[0].mxu0
        %3662 = vmatprep.mubr.bf16.mxu0 0
        %3663 = vmatmul.mubr.bf16.gmra.mrb[0].mxu0 %v3552
        %v3664 = vpop.f32.mrb[0].mxu0
        %v3665 = vadd.f32 0.0, %v3664
        %v3666 = vpop.f32.mrb[0].mxu0
        %v3667 = vpop.f32.mrb[0].mxu0
        %v3668 = vadd.f32 0.0, %v3667
        %v3669 = vpop.f32.mrb[0].mxu0
        %3670 = vmatprep.mubr.bf16.mxu0 0
        %3671 = vmatmul.mubr.bf16.gmra.mrb[0].mxu0 %v3553
        %v3672 = vpop.f32.mrb[0].mxu0
        %v3673 = vadd.f32 0.0, %v3672
        %v3674 = vpop.f32.mrb[0].mxu0
        %v3675 = vpop.f32.mrb[0].mxu0
        %v3676 = vadd.f32 0.0, %v3675
        %v3677 = vpop.f32.mrb[0].mxu0
        %3678 = vmatprep.mubr.bf16.mxu0 0
        %3679 = vmatmul.mubr.bf16.gmra.mrb[0].mxu0 %v3554
        %v3680 = vpop.f32.mrb[0].mxu0
        %v3681 = vadd.f32 0.0, %v3680
        %v3682 = vpop.f32.mrb[0].mxu0
        %v3683 = vpop.f32.mrb[0].mxu0
        %v3684 = vadd.f32 0.0, %v3683
        %v3685 = vpop.f32.mrb[0].mxu0
        %3686 = vmatprep.mubr.bf16.mxu0 0
        %3687 = vmatmul.mubr.bf16.gmra.mrb[0].mxu0 %v3555
        %v3688 = vpop.f32.mrb[0].mxu0
        %v3689 = vadd.f32 0.0, %v3688
        %v3690 = vpop.f32.mrb[0].mxu0
        %v3691 = vpop.f32.mrb[0].mxu0
        %v3692 = vadd.f32 0.0, %v3691
        %v3693 = vpop.f32.mrb[0].mxu0
        %3694 = vmatprep.mubr.bf16.mxu0 0
        %3695 = vmatmul.mubr.bf16.gmra.mrb[0].mxu0 %v3556
        %v3696 = vpop.f32.mrb[0].mxu0
        %v3697 = vadd.f32 0.0, %v3696
        %v3698 = vpop.f32.mrb[0].mxu0
        %v3699 = vpop.f32.mrb[0].mxu0
        %v3700 = vadd.f32 0.0, %v3699
        %v3701 = vpop.f32.mrb[0].mxu0
        %3702 = vmatprep.mubr.bf16.mxu0 0
        %3703 = vmatmul.mubr.bf16.gmra.mrb[0].mxu0 %v3557
        %v3704 = vpop.f32.mrb[0].mxu0
        %v3705 = vadd.f32 0.0, %v3704
        %v3706 = vpop.f32.mrb[0].mxu0
        %v3707 = vpop.f32.mrb[0].mxu0
        %v3708 = vadd.f32 0.0, %v3707
        %v3709 = vpop.f32.mrb[0].mxu0
        %3710 = vdwg.mxu0
        %v3711 = vadd.f32 %v3245, %v3649
        %v3712 = vadd.f32 %v3246, %v3652
        %v3713 = vadd.f32 %v3247, %v3657
        %v3714 = vadd.f32 %v3248, %v3660
        %v3715 = vadd.f32 %v3249, %v3665
        %v3716 = vadd.f32 %v3250, %v3668
        %v3717 = vadd.f32 %v3251, %v3673
        %v3718 = vadd.f32 %v3252, %v3676
        %v3719 = vadd.f32 %v3253, %v3681
        %v3720 = vadd.f32 %v3254, %v3684
        %v3721 = vadd.f32 %v3255, %v3689
        %v3722 = vadd.f32 %v3256, %v3692
        %v3723 = vadd.f32 %v3257, %v3697
        %v3724 = vadd.f32 %v3258, %v3700
        %v3725 = vadd.f32 %v3259, %v3705
        %v3726 = vadd.f32 %v3260, %v3708
        %v3727 = vld [vmem:[%s3018] sm:$0xe]
        %v3728 = vld [vmem:[%s3018 + $0x8] sm:$0xe]
        %v3729 = vld [vmem:[%s3018 + $0x10] sm:$0xe]
        %v3730 = vld [vmem:[%s3018 + $0x18] sm:$0xe]
        %v3731 = vld [vmem:[%s3018 + $0x20] sm:$0xe]
        %v3732 = vld [vmem:[%s3018 + $0x28] sm:$0xe]
        %v3733 = vld [vmem:[%s3018 + $0x30] sm:$0xe]
        %v3734 = vld [vmem:[%s3018 + $0x38] sm:$0xe]
        %v3735 = vld [vmem:[%s3018 + $0x50] sm:$0xe]
        %v3736 = vld [vmem:[%s3018 + $0x58] sm:$0xe]
        %v3737 = vld [vmem:[%s3018 + $0x60] sm:$0xe]
        %v3738 = vld [vmem:[%s3018 + $0x68] sm:$0xe]
        %v3739 = vld [vmem:[%s3018 + $0x70] sm:$0xe]
        %v3740 = vld [vmem:[%s3018 + $0x78] sm:$0xe]
        %v3741 = vld [vmem:[%s3018 + $0x80] sm:$0xe]
        %v3742 = vld [vmem:[%s3018 + $0x88] sm:$0xe]
        %v3775 = vrot.slane %v3727, 5
        %v3776 = vrot.slane %v3775, 4
        %v3777 = vrot.slane %v3262, 5
        %v3778 = vsel %vm1712, %v3776, %v3777
        %v3779 = vrot.slane %v3728, 5
        %v3780 = vrot.slane %v3779, 4
        %v3781 = vrot.slane %v3264, 5
        %v3782 = vsel %vm1712, %v3780, %v3781
        %v3783 = vrot.slane %v3729, 5
        %v3784 = vrot.slane %v3783, 4
        %v3785 = vrot.slane %v3266, 5
        %v3786 = vsel %vm1712, %v3784, %v3785
        %v3787 = vrot.slane %v3730, 5
        %v3788 = vrot.slane %v3787, 4
        %v3789 = vrot.slane %v3268, 5
        %v3790 = vsel %vm1712, %v3788, %v3789
        %v3791 = vrot.slane %v3731, 5
        %v3792 = vrot.slane %v3791, 4
        %v3793 = vrot.slane %v3270, 5
        %v3794 = vsel %vm1712, %v3792, %v3793
        %v3795 = vrot.slane %v3732, 5
        %v3796 = vrot.slane %v3795, 4
        %v3797 = vrot.slane %v3272, 5
        %v3798 = vsel %vm1712, %v3796, %v3797
        %v3799 = vrot.slane %v3733, 5
        %v3800 = vrot.slane %v3799, 4
        %v3801 = vrot.slane %v3274, 5
        %v3802 = vsel %vm1712, %v3800, %v3801
        %v3803 = vrot.slane %v3734, 5
        %v3804 = vrot.slane %v3803, 4
        %v3805 = vrot.slane %v3276, 5
        %v3806 = vsel %vm1712, %v3804, %v3805
        %v3807 = vrot.slane %v3735, 5
        %v3808 = vrot.slane %v3807, 4
        %v3809 = vrot.slane %v3278, 5
        %v3810 = vsel %vm1712, %v3808, %v3809
        %v3811 = vrot.slane %v3736, 5
        %v3812 = vrot.slane %v3811, 4
        %v3813 = vrot.slane %v3280, 5
        %v3814 = vsel %vm1712, %v3812, %v3813
        %v3815 = vrot.slane %v3737, 5
        %v3816 = vrot.slane %v3815, 4
        %v3817 = vrot.slane %v3282, 5
        %v3818 = vsel %vm1712, %v3816, %v3817
        %v3819 = vrot.slane %v3738, 5
        %v3820 = vrot.slane %v3819, 4
        %v3821 = vrot.slane %v3284, 5
        %v3822 = vsel %vm1712, %v3820, %v3821
        %v3823 = vrot.slane %v3739, 5
        %v3824 = vrot.slane %v3823, 4
        %v3825 = vrot.slane %v3286, 5
        %v3826 = vsel %vm1712, %v3824, %v3825
        %v3827 = vrot.slane %v3740, 5
        %v3828 = vrot.slane %v3827, 4
        %v3829 = vrot.slane %v3288, 5
        %v3830 = vsel %vm1712, %v3828, %v3829
        %v3831 = vrot.slane %v3741, 5
        %v3832 = vrot.slane %v3831, 4
        %v3833 = vrot.slane %v3290, 5
        %v3834 = vsel %vm1712, %v3832, %v3833
        %v3835 = vrot.slane %v3742, 5
        %v3836 = vrot.slane %v3835, 4
        %v3837 = vrot.slane %v3292, 5
        %v3838 = vsel %vm1712, %v3836, %v3837
        %s3839 = scalar_lea.vmem %s335, 512 [#allocation6]
        %v3840 = vld [vmem:[%s3839] sm:$0xf]
        %v3841 = vld [vmem:[%s3839 + $0x4] sm:$0xf]
        %v3842 = vld [vmem:[%s3839 + $0x8] sm:$0xf]
        %v3843 = vld [vmem:[%s3839 + $0xc] sm:$0xf]
        %v3844 = vld [vmem:[%s3839 + $0x10] sm:$0xf]
        %v3845 = vld [vmem:[%s3839 + $0x14] sm:$0xf]
        %v3846 = vld [vmem:[%s3839 + $0x18] sm:$0xf]
        %v3847 = vld [vmem:[%s3839 + $0x1c] sm:$0xf]
        %v3848 = vld [vmem:[%s3839 + $0x20] sm:$0xf]
        %v3849 = vld [vmem:[%s3839 + $0x24] sm:$0xf]
        %v3850 = vld [vmem:[%s3839 + $0x28] sm:$0xf]
        %v3851 = vld [vmem:[%s3839 + $0x2c] sm:$0xf]
        %v3852 = vld [vmem:[%s3839 + $0x30] sm:$0xf]
        %v3853 = vld [vmem:[%s3839 + $0x34] sm:$0xf]
        %v3854 = vld [vmem:[%s3839 + $0x38] sm:$0xf]
        %v3855 = vld [vmem:[%s3839 + $0x3c] sm:$0xf]
        %v3856 = vunpack.c.l.b16 %v3778
        %v3857 = vunpack.c.l.b16 %v3782
        %v3858 = vunpack.c.l.b16 %v3786
        %v3859 = vunpack.c.l.b16 %v3790
        %v3860 = vunpack.c.l.b16 %v3794
        %v3861 = vunpack.c.l.b16 %v3798
        %v3862 = vunpack.c.l.b16 %v3802
        %v3863 = vunpack.c.l.b16 %v3806
        %v3864 = vunpack.c.l.b16 %v3810
        %v3865 = vunpack.c.l.b16 %v3814
        %v3866 = vunpack.c.l.b16 %v3818
        %v3867 = vunpack.c.l.b16 %v3822
        %v3868 = vunpack.c.l.b16 %v3826
        %v3869 = vunpack.c.l.b16 %v3830
        %v3870 = vunpack.c.l.b16 %v3834
        %v3871 = vunpack.c.l.b16 %v3838
        %v3872 = vpack.c.b16 %v3857, %v3856
        %v3873 = vpack.c.b16 %v3859, %v3858
        %v3874 = vpack.c.b16 %v3861, %v3860
        %v3875 = vpack.c.b16 %v3863, %v3862
        %v3876 = vpack.c.b16 %v3865, %v3864
        %v3877 = vpack.c.b16 %v3867, %v3866
        %v3878 = vpack.c.b16 %v3869, %v3868
        %v3879 = vpack.c.b16 %v3871, %v3870
        %v3904 = vunpack.c.l.b16 %v3840
        %v3905 = vunpack.c.l.b16 %v3841
        %v3906 = vunpack.c.l.b16 %v3842
        %v3907 = vunpack.c.l.b16 %v3843
        %v3908 = vunpack.c.l.b16 %v3844
        %v3909 = vunpack.c.l.b16 %v3845
        %v3910 = vunpack.c.l.b16 %v3846
        %v3911 = vunpack.c.l.b16 %v3847
        %v3912 = vunpack.c.l.b16 %v3848
        %v3913 = vunpack.c.l.b16 %v3849
        %v3914 = vunpack.c.l.b16 %v3850
        %v3915 = vunpack.c.l.b16 %v3851
        %v3916 = vunpack.c.l.b16 %v3852
        %v3917 = vunpack.c.l.b16 %v3853
        %v3918 = vunpack.c.l.b16 %v3854
        %v3919 = vunpack.c.l.b16 %v3855
        %v3920 = vpack.c.b16 %v3905, %v3904
        %v3921 = vpack.c.b16 %v3907, %v3906
        %v3922 = vpack.c.b16 %v3909, %v3908
        %v3923 = vpack.c.b16 %v3911, %v3910
        %v3924 = vpack.c.b16 %v3913, %v3912
        %v3925 = vpack.c.b16 %v3915, %v3914
        %v3926 = vpack.c.b16 %v3917, %v3916
        %v3927 = vpack.c.b16 %v3919, %v3918
        %3936 = vmatprep.subr.bf16.mxu0 0
        %3937 = vmatpush1.bf16.msra.mxu0 %v3920
        %3938 = vmatprep.subr.bf16.mxu0 0
        %3939 = vmatpush1.bf16.msra.mxu0 %v3921
        %3940 = vmatprep.subr.bf16.mxu0 0
        %3941 = vmatpush1.bf16.msra.mxu0 %v3922
        %3942 = vmatprep.subr.bf16.mxu0 0
        %3943 = vmatpush1.bf16.msra.mxu0 %v3923
        %3944 = vmatprep.subr.bf16.mxu0 0
        %3945 = vmatpush1.bf16.msra.mxu0 %v3924
        %3946 = vmatprep.subr.bf16.mxu0 0
        %3947 = vmatpush1.bf16.msra.mxu0 %v3925
        %3948 = vmatprep.subr.bf16.mxu0 0
        %3949 = vmatpush1.bf16.msra.mxu0 %v3926
        %3950 = vmatprep.subr.bf16.mxu0 0
        %3951 = vmatpush1.bf16.msra.mxu0 %v3927
        %3952 = vmatprep.subr.bf16.mxu0 0
        %3953 = vmatpush1.bf16.msra.mxu0 0
        %3954 = vmatprep.subr.bf16.mxu0 0
        %3955 = vmatpush1.bf16.msra.mxu0 0
        %3956 = vmatprep.subr.bf16.mxu0 0
        %3957 = vmatpush1.bf16.msra.mxu0 0
        %3958 = vmatprep.subr.bf16.mxu0 0
        %3959 = vmatpush1.bf16.msra.mxu0 0
        %3960 = vmatprep.subr.bf16.mxu0 0
        %3961 = vmatpush1.bf16.msra.mxu0 0
        %3962 = vmatprep.subr.bf16.mxu0 0
        %3963 = vmatpush1.bf16.msra.mxu0 0
        %3964 = vmatprep.subr.bf16.mxu0 0
        %3965 = vmatpush1.bf16.msra.mxu0 0
        %3966 = vmatprep.subr.bf16.mxu0 0
        %3967 = vmatpush1.bf16.msra.mxu0 0
        %3968 = vmatprep.mubr.bf16.mxu0 0
        %3969 = vmatmul.mubr.bf16.gmra.mrb[0].mxu0 %v3872
        %v3970 = vpop.f32.mrb[0].mxu0
        %v3971 = vadd.f32 0.0, %v3970
        %v3972 = vpop.f32.mrb[0].mxu0
        %v3973 = vpop.f32.mrb[0].mxu0
        %v3974 = vadd.f32 0.0, %v3973
        %v3975 = vpop.f32.mrb[0].mxu0
        %3976 = vmatprep.mubr.bf16.mxu0 0
        %3977 = vmatmul.mubr.bf16.gmra.mrb[0].mxu0 %v3873
        %v3978 = vpop.f32.mrb[0].mxu0
        %v3979 = vadd.f32 0.0, %v3978
        %v3980 = vpop.f32.mrb[0].mxu0
        %v3981 = vpop.f32.mrb[0].mxu0
        %v3982 = vadd.f32 0.0, %v3981
        %v3983 = vpop.f32.mrb[0].mxu0
        %3984 = vmatprep.mubr.bf16.mxu0 0
        %3985 = vmatmul.mubr.bf16.gmra.mrb[0].mxu0 %v3874
        %v3986 = vpop.f32.mrb[0].mxu0
        %v3987 = vadd.f32 0.0, %v3986
        %v3988 = vpop.f32.mrb[0].mxu0
        %v3989 = vpop.f32.mrb[0].mxu0
        %v3990 = vadd.f32 0.0, %v3989
        %v3991 = vpop.f32.mrb[0].mxu0
        %3992 = vmatprep.mubr.bf16.mxu0 0
        %3993 = vmatmul.mubr.bf16.gmra.mrb[0].mxu0 %v3875
        %v3994 = vpop.f32.mrb[0].mxu0
        %v3995 = vadd.f32 0.0, %v3994
        %v3996 = vpop.f32.mrb[0].mxu0
        %v3997 = vpop.f32.mrb[0].mxu0
        %v3998 = vadd.f32 0.0, %v3997
        %v3999 = vpop.f32.mrb[0].mxu0
        %4000 = vmatprep.mubr.bf16.mxu0 0
        %4001 = vmatmul.mubr.bf16.gmra.mrb[0].mxu0 %v3876
        %v4002 = vpop.f32.mrb[0].mxu0
        %v4003 = vadd.f32 0.0, %v4002
        %v4004 = vpop.f32.mrb[0].mxu0
        %v4005 = vpop.f32.mrb[0].mxu0
        %v4006 = vadd.f32 0.0, %v4005
        %v4007 = vpop.f32.mrb[0].mxu0
        %4008 = vmatprep.mubr.bf16.mxu0 0
        %4009 = vmatmul.mubr.bf16.gmra.mrb[0].mxu0 %v3877
        %v4010 = vpop.f32.mrb[0].mxu0
        %v4011 = vadd.f32 0.0, %v4010
        %v4012 = vpop.f32.mrb[0].mxu0
        %v4013 = vpop.f32.mrb[0].mxu0
        %v4014 = vadd.f32 0.0, %v4013
        %v4015 = vpop.f32.mrb[0].mxu0
        %4016 = vmatprep.mubr.bf16.mxu0 0
        %4017 = vmatmul.mubr.bf16.gmra.mrb[0].mxu0 %v3878
        %v4018 = vpop.f32.mrb[0].mxu0
        %v4019 = vadd.f32 0.0, %v4018
        %v4020 = vpop.f32.mrb[0].mxu0
        %v4021 = vpop.f32.mrb[0].mxu0
        %v4022 = vadd.f32 0.0, %v4021
        %v4023 = vpop.f32.mrb[0].mxu0
        %4024 = vmatprep.mubr.bf16.mxu0 0
        %4025 = vmatmul.mubr.bf16.gmra.mrb[0].mxu0 %v3879
        %v4026 = vpop.f32.mrb[0].mxu0
        %v4027 = vadd.f32 0.0, %v4026
        %v4028 = vpop.f32.mrb[0].mxu0
        %v4029 = vpop.f32.mrb[0].mxu0
        %v4030 = vadd.f32 0.0, %v4029
        %v4031 = vpop.f32.mrb[0].mxu0
        %4032 = vdwg.mxu0
        %v4033 = vadd.f32 %v3711, %v3971
        %v4034 = vadd.f32 %v3712, %v3974
        %v4035 = vadd.f32 %v3713, %v3979
        %v4036 = vadd.f32 %v3714, %v3982
        %v4037 = vadd.f32 %v3715, %v3987
        %v4038 = vadd.f32 %v3716, %v3990
        %v4039 = vadd.f32 %v3717, %v3995
        %v4040 = vadd.f32 %v3718, %v3998
        %v4041 = vadd.f32 %v3719, %v4003
        %v4042 = vadd.f32 %v3720, %v4006
        %v4043 = vadd.f32 %v3721, %v4011
        %v4044 = vadd.f32 %v3722, %v4014
        %v4045 = vadd.f32 %v3723, %v4019
        %v4046 = vadd.f32 %v3724, %v4022
        %v4047 = vadd.f32 %v3725, %v4027
        %v4048 = vadd.f32 %v3726, %v4030
        %v4049 = vld [vmem:[%s343] sm:$0x1]
        %v4051 = vlaneseq
        %v4052 = vshrl.u32 %v4051, 7
        %v4053 = vsub.s32 0, %v4052
        %v4054 = vrot.slane %v4049, %v4053
        %v4056 = vadd.f32 %v4033, %v4054
        %v4057 = vadd.f32 %v4034, %v4054
        %v4058 = vadd.f32 %v4035, %v4054
        %v4059 = vadd.f32 %v4036, %v4054
        %v4060 = vadd.f32 %v4037, %v4054
        %v4061 = vadd.f32 %v4038, %v4054
        %v4062 = vadd.f32 %v4039, %v4054
        %v4063 = vadd.f32 %v4040, %v4054
        %v4064 = vadd.f32 %v4041, %v4054
        %v4065 = vadd.f32 %v4042, %v4054
        %v4066 = vadd.f32 %v4043, %v4054
        %v4067 = vadd.f32 %v4044, %v4054
        %v4068 = vadd.f32 %v4045, %v4054
        %v4069 = vadd.f32 %v4046, %v4054
        %v4070 = vadd.f32 %v4047, %v4054
        %v4071 = vadd.f32 %v4048, %v4054
        %p4072 = scmp.lt.s32.totalorder %s30, 4
        // Predicated region
        $region69: #{tpu_custom_call.1} parent=43 // pred_check
          %p4073 = pneg %p4072
        $region70: #{tpu_custom_call.1} parent=43 // pred_check_branch
          %4075 = sbr.rel (%p4073) target = $region72
        $region71: #{tpu_custom_call.1} parent=43 // pred_region
          %v4076 = vadd.f32 %v4056, %v4057
          %v4077 = vadd.f32 %v4076, %v4058
          %v4078 = vadd.f32 %v4077, %v4059
          %v4079 = vadd.f32 %v4078, %v4060
          %v4080 = vadd.f32 %v4079, %v4061
          %v4081 = vadd.f32 %v4080, %v4062
          %v4082 = vadd.f32 %v4081, %v4063
          %v4083 = vrot.slane %v4082, 4
          %v4084 = vadd.f32 %v4082, %v4083
          %v4085 = vrot.slane %v4084, 2
          %v4086 = vadd.f32 %v4084, %v4085
          %v4087 = vrot.slane %v4086, 1
          %v4088 = vadd.f32 %v4086, %v4087
          %v4089 = vadd.f32 %v4064, %v4065
          %v4090 = vadd.f32 %v4089, %v4066
          %v4091 = vadd.f32 %v4090, %v4067
          %v4092 = vadd.f32 %v4091, %v4068
          %v4093 = vadd.f32 %v4092, %v4069
          %v4094 = vadd.f32 %v4093, %v4070
          %v4095 = vadd.f32 %v4094, %v4071
          %v4096 = vrot.slane %v4095, 4
          %v4097 = vadd.f32 %v4095, %v4096
          %v4098 = vrot.slane %v4097, 2
          %v4099 = vadd.f32 %v4097, %v4098
          %v4100 = vrot.slane %v4099, 1
          %v4101 = vadd.f32 %v4099, %v4100
          %v4102 = vlaneseq
          %v4103 = vand.u32 %v4102, 127
          %vm4106 = vcmask 1041409
          %v4107 = vsel %vm4106, %v4101, %v4088
          %4108 = vrot.lane.b32.xlu0 %v4107, 127
          %v4109 = vpop.permute.xlu0 %4108
          %4111 = vrot.lane.b32.xlu0 %v4107, 1
          %v4112 = vpop.permute.xlu0 %4111
          %vm4114 = vcmp.lt.s32.totalorder %v4103, 0
          %v4115 = vsub.s32 0, %v4103
          %v4116 = vsel %vm4114, %v4115, %v4103
          %v4117 = vshrl.u32 %v4116, 1
          %v4118 = vand.u32 %v4116, 1
          %v4119 = vsub.s32 0, %v4118
          %v4120 = vsel %vm4114, %v4119, %v4118
          %vm4121 = vcmp.ne.s32.totalorder %v4120, 0
          %vm4122 = vcmp.lt.s32.totalorder %v4120, 0
          %vm4123 = vmand %vm4122, %vm4121
          %v4124 = vadd.s32 %v4120, 2
          %v4125 = vsel %vm4123, %v4124, %v4120
          %vm4126 = vcmp.lt.s32.totalorder %v4125, 1
          %v4127 = vsel %vm4126, %v4109, %v4112
          %v4129 = vrot.slane %v4127, 1
          %v4132 = vadd.f32 %v4088, %v4127
          %v4133 = vadd.f32 %v4101, %v4129
          %v4134 = vrcp.pop 128.0
          %v4135 = vmul.f32 %v4132, %v4134
          %v4136 = vmul.f32 %v4133, %v4134
          %v4137 = vlaneseq
          %v4138 = vshrl.u32 %v4137, 7
          %v4139 = vsub.s32 0, %v4138
          %v4140 = vrot.slane %v4135, %v4139
          %v4141 = vlaneseq
          %v4142 = vshrl.u32 %v4141, 7
          %v4143 = vsub.s32 0, %v4142
          %v4144 = vrot.slane %v4136, %v4143
          %v4145 = vsub.f32 %v4056, %v4140
          %v4146 = vsub.f32 %v4057, %v4140
          %v4147 = vsub.f32 %v4058, %v4140
          %v4148 = vsub.f32 %v4059, %v4140
          %v4149 = vsub.f32 %v4060, %v4140
          %v4150 = vsub.f32 %v4061, %v4140
          %v4151 = vsub.f32 %v4062, %v4140
          %v4152 = vsub.f32 %v4063, %v4140
          %v4153 = vsub.f32 %v4064, %v4144
          %v4154 = vsub.f32 %v4065, %v4144
          %v4155 = vsub.f32 %v4066, %v4144
          %v4156 = vsub.f32 %v4067, %v4144
          %v4157 = vsub.f32 %v4068, %v4144
          %v4158 = vsub.f32 %v4069, %v4144
          %v4159 = vsub.f32 %v4070, %v4144
          %v4160 = vsub.f32 %v4071, %v4144
          %v4161 = vmul.f32 %v4145, %v4145
          %v4162 = vmul.f32 %v4146, %v4146
          %v4163 = vmul.f32 %v4147, %v4147
          %v4164 = vmul.f32 %v4148, %v4148
          %v4165 = vmul.f32 %v4149, %v4149
          %v4166 = vmul.f32 %v4150, %v4150
          %v4167 = vmul.f32 %v4151, %v4151
          %v4168 = vmul.f32 %v4152, %v4152
          %v4169 = vmul.f32 %v4153, %v4153
          %v4170 = vmul.f32 %v4154, %v4154
          %v4171 = vmul.f32 %v4155, %v4155
          %v4172 = vmul.f32 %v4156, %v4156
          %v4173 = vmul.f32 %v4157, %v4157
          %v4174 = vmul.f32 %v4158, %v4158
          %v4175 = vmul.f32 %v4159, %v4159
          %v4176 = vmul.f32 %v4160, %v4160
          %v4177 = vadd.f32 %v4161, %v4162
          %v4178 = vadd.f32 %v4177, %v4163
          %v4179 = vadd.f32 %v4178, %v4164
          %v4180 = vadd.f32 %v4179, %v4165
          %v4181 = vadd.f32 %v4180, %v4166
          %v4182 = vadd.f32 %v4181, %v4167
          %v4183 = vadd.f32 %v4182, %v4168
          %v4184 = vrot.slane %v4183, 4
          %v4185 = vadd.f32 %v4183, %v4184
          %v4186 = vrot.slane %v4185, 2
          %v4187 = vadd.f32 %v4185, %v4186
          %v4188 = vrot.slane %v4187, 1
          %v4189 = vadd.f32 %v4187, %v4188
          %v4190 = vadd.f32 %v4169, %v4170
          %v4191 = vadd.f32 %v4190, %v4171
          %v4192 = vadd.f32 %v4191, %v4172
          %v4193 = vadd.f32 %v4192, %v4173
          %v4194 = vadd.f32 %v4193, %v4174
          %v4195 = vadd.f32 %v4194, %v4175
          %v4196 = vadd.f32 %v4195, %v4176
          %v4197 = vrot.slane %v4196, 4
          %v4198 = vadd.f32 %v4196, %v4197
          %v4199 = vrot.slane %v4198, 2
          %v4200 = vadd.f32 %v4198, %v4199
          %v4201 = vrot.slane %v4200, 1
          %v4202 = vadd.f32 %v4200, %v4201
          %v4205 = vsel %vm4106, %v4202, %v4189
          %4206 = vrot.lane.b32.xlu0 %v4205, 127
          %v4207 = vpop.permute.xlu0 %4206
          %4209 = vrot.lane.b32.xlu0 %v4205, 1
          %v4210 = vpop.permute.xlu0 %4209
          %v4212 = vsel %vm4126, %v4207, %v4210
          %v4214 = vrot.slane %v4212, 1
          %v4217 = vadd.f32 %v4189, %v4212
          %v4218 = vadd.f32 %v4202, %v4214
          %v4219 = vmul.f32 %v4217, %v4134
          %v4220 = vmul.f32 %v4218, %v4134
          %v4221 = vadd.f32 %v4219, 1e-05
          %v4222 = vadd.f32 %v4220, 1e-05
          %v4223 = vrsqrt.pop %v4221
          %v4224 = vrsqrt.pop %v4222
          %v4225 = vld [vmem:[%s351] sm:$0x1]
          %v4227 = vlaneseq
          %v4228 = vshrl.u32 %v4227, 7
          %v4229 = vsub.s32 0, %v4228
          %v4230 = vrot.slane %v4225, %v4229
          %v4232 = vmul.f32 %v4223, %v4230
          %v4233 = vmul.f32 %v4224, %v4230
          %v4234 = vlaneseq
          %v4235 = vshrl.u32 %v4234, 7
          %v4236 = vsub.s32 0, %v4235
          %v4237 = vrot.slane %v4232, %v4236
          %v4238 = vlaneseq
          %v4239 = vshrl.u32 %v4238, 7
          %v4240 = vsub.s32 0, %v4239
          %v4241 = vrot.slane %v4233, %v4240
          %v4242 = vmul.f32 %v4145, %v4237
          %v4243 = vmul.f32 %v4146, %v4237
          %v4244 = vmul.f32 %v4147, %v4237
          %v4245 = vmul.f32 %v4148, %v4237
          %v4246 = vmul.f32 %v4149, %v4237
          %v4247 = vmul.f32 %v4150, %v4237
          %v4248 = vmul.f32 %v4151, %v4237
          %v4249 = vmul.f32 %v4152, %v4237
          %v4250 = vmul.f32 %v4153, %v4241
          %v4251 = vmul.f32 %v4154, %v4241
          %v4252 = vmul.f32 %v4155, %v4241
          %v4253 = vmul.f32 %v4156, %v4241
          %v4254 = vmul.f32 %v4157, %v4241
          %v4255 = vmul.f32 %v4158, %v4241
          %v4256 = vmul.f32 %v4159, %v4241
          %v4257 = vmul.f32 %v4160, %v4241
          %v4258 = vld [vmem:[%s359] sm:$0x1]
          %v4260 = vlaneseq
          %v4261 = vshrl.u32 %v4260, 7
          %v4262 = vsub.s32 0, %v4261
          %v4263 = vrot.slane %v4258, %v4262
          %v4265 = vadd.f32 %v4242, %v4263
          %v4266 = vadd.f32 %v4243, %v4263
          %v4267 = vadd.f32 %v4244, %v4263
          %v4268 = vadd.f32 %v4245, %v4263
          %v4269 = vadd.f32 %v4246, %v4263
          %v4270 = vadd.f32 %v4247, %v4263
          %v4271 = vadd.f32 %v4248, %v4263
          %v4272 = vadd.f32 %v4249, %v4263
          %v4273 = vadd.f32 %v4250, %v4263
          %v4274 = vadd.f32 %v4251, %v4263
          %v4275 = vadd.f32 %v4252, %v4263
          %v4276 = vadd.f32 %v4253, %v4263
          %v4277 = vadd.f32 %v4254, %v4263
          %v4278 = vadd.f32 %v4255, %v4263
          %v4279 = vadd.f32 %v4256, %v4263
          %v4280 = vadd.f32 %v4257, %v4263
          %v4281 = vmax.f32 %v4265, 0.0
          %v4282 = vmax.f32 %v4266, 0.0
          %v4283 = vmax.f32 %v4267, 0.0
          %v4284 = vmax.f32 %v4268, 0.0
          %v4285 = vmax.f32 %v4269, 0.0
          %v4286 = vmax.f32 %v4270, 0.0
          %v4287 = vmax.f32 %v4271, 0.0
          %v4288 = vmax.f32 %v4272, 0.0
          %v4289 = vmax.f32 %v4273, 0.0
          %v4290 = vmax.f32 %v4274, 0.0
          %v4291 = vmax.f32 %v4275, 0.0
          %v4292 = vmax.f32 %v4276, 0.0
          %v4293 = vmax.f32 %v4277, 0.0
          %v4294 = vmax.f32 %v4278, 0.0
          %v4295 = vmax.f32 %v4279, 0.0
          %v4296 = vmax.f32 %v4280, 0.0
          %v4297 = vpack.c.bf16 %v4281, %v4281
          %v4298 = vpack.c.bf16 %v4282, %v4282
          %v4299 = vpack.c.bf16 %v4283, %v4283
          %v4300 = vpack.c.bf16 %v4284, %v4284
          %v4301 = vpack.c.bf16 %v4285, %v4285
          %v4302 = vpack.c.bf16 %v4286, %v4286
          %v4303 = vpack.c.bf16 %v4287, %v4287
          %v4304 = vpack.c.bf16 %v4288, %v4288
          %v4305 = vpack.c.bf16 %v4289, %v4289
          %v4306 = vpack.c.bf16 %v4290, %v4290
          %v4307 = vpack.c.bf16 %v4291, %v4291
          %v4308 = vpack.c.bf16 %v4292, %v4292
          %v4309 = vpack.c.bf16 %v4293, %v4293
          %v4310 = vpack.c.bf16 %v4294, %v4294
          %v4311 = vpack.c.bf16 %v4295, %v4295
          %v4312 = vpack.c.bf16 %v4296, %v4296
          %v4329 = vunpack.c.l.b16 %v4297
          %v4330 = vunpack.c.l.b16 %v4298
          %v4331 = vunpack.c.l.b16 %v4299
          %v4332 = vunpack.c.l.b16 %v4300
          %v4333 = vunpack.c.l.b16 %v4301
          %v4334 = vunpack.c.l.b16 %v4302
          %v4335 = vunpack.c.l.b16 %v4303
          %v4336 = vunpack.c.l.b16 %v4304
          %v4337 = vunpack.c.l.b16 %v4305
          %v4338 = vunpack.c.l.b16 %v4306
          %v4339 = vunpack.c.l.b16 %v4307
          %v4340 = vunpack.c.l.b16 %v4308
          %v4341 = vunpack.c.l.b16 %v4309
          %v4342 = vunpack.c.l.b16 %v4310
          %v4343 = vunpack.c.l.b16 %v4311
          %v4344 = vunpack.c.l.b16 %v4312
          %v4345 = vpack.c.b16 %v4329, %v4329
          %v4346 = vpack.c.b16 %v4330, %v4330
          %v4347 = vpack.c.b16 %v4331, %v4331
          %v4348 = vpack.c.b16 %v4332, %v4332
          %v4349 = vpack.c.b16 %v4333, %v4333
          %v4350 = vpack.c.b16 %v4334, %v4334
          %v4351 = vpack.c.b16 %v4335, %v4335
          %v4352 = vpack.c.b16 %v4336, %v4336
          %v4353 = vpack.c.b16 %v4337, %v4337
          %v4354 = vpack.c.b16 %v4338, %v4338
          %v4355 = vpack.c.b16 %v4339, %v4339
          %v4356 = vpack.c.b16 %v4340, %v4340
          %v4357 = vpack.c.b16 %v4341, %v4341
          %v4358 = vpack.c.b16 %v4342, %v4342
          %v4359 = vpack.c.b16 %v4343, %v4343
          %v4360 = vpack.c.b16 %v4344, %v4344
          %v4362 = vshrl.u32 %v4345, 16
          %v4364 = vrot.slane %v4362, 7
          %v4365 = vshll.u32 %v4345, 16
          %v4367 = vor.u32 %v4364, %v4365
          %v4368 = vrot.slane %v4364, 4
          %v4370 = vshrl.u32 %v4346, 16
          %v4372 = vrot.slane %v4370, 7
          %v4373 = vshll.u32 %v4346, 16
          %v4375 = vor.u32 %v4372, %v4373
          %v4376 = vrot.slane %v4372, 4
          %v4378 = vshrl.u32 %v4347, 16
          %v4380 = vrot.slane %v4378, 7
          %v4381 = vshll.u32 %v4347, 16
          %v4383 = vor.u32 %v4380, %v4381
          %v4384 = vrot.slane %v4380, 4
          %v4386 = vshrl.u32 %v4348, 16
          %v4388 = vrot.slane %v4386, 7
          %v4389 = vshll.u32 %v4348, 16
          %v4391 = vor.u32 %v4388, %v4389
          %v4392 = vrot.slane %v4388, 4
          %v4394 = vshrl.u32 %v4349, 16
          %v4396 = vrot.slane %v4394, 7
          %v4397 = vshll.u32 %v4349, 16
          %v4399 = vor.u32 %v4396, %v4397
          %v4400 = vrot.slane %v4396, 4
          %v4402 = vshrl.u32 %v4350, 16
          %v4404 = vrot.slane %v4402, 7
          %v4405 = vshll.u32 %v4350, 16
          %v4407 = vor.u32 %v4404, %v4405
          %v4408 = vrot.slane %v4404, 4
          %v4410 = vshrl.u32 %v4351, 16
          %v4412 = vrot.slane %v4410, 7
          %v4413 = vshll.u32 %v4351, 16
          %v4415 = vor.u32 %v4412, %v4413
          %v4416 = vrot.slane %v4412, 4
          %v4418 = vshrl.u32 %v4352, 16
          %v4420 = vrot.slane %v4418, 7
          %v4421 = vshll.u32 %v4352, 16
          %v4423 = vor.u32 %v4420, %v4421
          %v4424 = vrot.slane %v4420, 4
          %v4426 = vshrl.u32 %v4353, 16
          %v4428 = vrot.slane %v4426, 7
          %v4429 = vshll.u32 %v4353, 16
          %v4431 = vor.u32 %v4428, %v4429
          %v4432 = vrot.slane %v4428, 4
          %v4434 = vshrl.u32 %v4354, 16
          %v4436 = vrot.slane %v4434, 7
          %v4437 = vshll.u32 %v4354, 16
          %v4439 = vor.u32 %v4436, %v4437
          %v4440 = vrot.slane %v4436, 4
          %v4442 = vshrl.u32 %v4355, 16
          %v4444 = vrot.slane %v4442, 7
          %v4445 = vshll.u32 %v4355, 16
          %v4447 = vor.u32 %v4444, %v4445
          %v4448 = vrot.slane %v4444, 4
          %v4450 = vshrl.u32 %v4356, 16
          %v4452 = vrot.slane %v4450, 7
          %v4453 = vshll.u32 %v4356, 16
          %v4455 = vor.u32 %v4452, %v4453
          %v4456 = vrot.slane %v4452, 4
          %v4458 = vshrl.u32 %v4357, 16
          %v4460 = vrot.slane %v4458, 7
          %v4461 = vshll.u32 %v4357, 16
          %v4463 = vor.u32 %v4460, %v4461
          %v4464 = vrot.slane %v4460, 4
          %v4466 = vshrl.u32 %v4358, 16
          %v4468 = vrot.slane %v4466, 7
          %v4469 = vshll.u32 %v4358, 16
          %v4471 = vor.u32 %v4468, %v4469
          %v4472 = vrot.slane %v4468, 4
          %v4474 = vshrl.u32 %v4359, 16
          %v4476 = vrot.slane %v4474, 7
          %v4477 = vshll.u32 %v4359, 16
          %v4479 = vor.u32 %v4476, %v4477
          %v4480 = vrot.slane %v4476, 4
          %v4482 = vshrl.u32 %v4360, 16
          %v4484 = vrot.slane %v4482, 7
          %v4485 = vshll.u32 %v4360, 16
          %v4487 = vor.u32 %v4484, %v4485
          %v4488 = vrot.slane %v4484, 4
          %vm4521 = vcmask 1043456
          %vm4522 = vsmask.f32 7938
          %vm4523 = vmand %vm4521, %vm4522
          %v4524 = vld [vmem:[%s1987] sm:$0xf]
          %v4525 = vsel %vm4523, %v4367, %v4524
          %4526 = vst [vmem:[%s1987] sm:$0xf] %v4525
          %vm4527 = vcmask 1040384
          %vm4528 = vsmask.f32 256
          %vm4529 = vmand %vm4527, %vm4528
          %v4530 = vld [vmem:[%s1987 + $0x4] sm:$0x1]
          %v4531 = vsel %vm4529, %v4368, %v4530
          %4532 = vst [vmem:[%s1987 + $0x4] sm:$0x1] %v4531
          %v4533 = vld [vmem:[%s1987 + $0x8] sm:$0xf]
          %v4534 = vsel %vm4523, %v4375, %v4533
          %4535 = vst [vmem:[%s1987 + $0x8] sm:$0xf] %v4534
          %v4536 = vld [vmem:[%s1987 + $0xc] sm:$0x1]
          %v4537 = vsel %vm4529, %v4376, %v4536
          %4538 = vst [vmem:[%s1987 + $0xc] sm:$0x1] %v4537
          %v4539 = vld [vmem:[%s1987 + $0x10] sm:$0xf]
          %v4540 = vsel %vm4523, %v4383, %v4539
          %4541 = vst [vmem:[%s1987 + $0x10] sm:$0xf] %v4540
          %v4542 = vld [vmem:[%s1987 + $0x14] sm:$0x1]
          %v4543 = vsel %vm4529, %v4384, %v4542
          %4544 = vst [vmem:[%s1987 + $0x14] sm:$0x1] %v4543
          %v4545 = vld [vmem:[%s1987 + $0x18] sm:$0xf]
          %v4546 = vsel %vm4523, %v4391, %v4545
          %4547 = vst [vmem:[%s1987 + $0x18] sm:$0xf] %v4546
          %v4548 = vld [vmem:[%s1987 + $0x1c] sm:$0x1]
          %v4549 = vsel %vm4529, %v4392, %v4548
          %4550 = vst [vmem:[%s1987 + $0x1c] sm:$0x1] %v4549
          %v4551 = vld [vmem:[%s1987 + $0x20] sm:$0xf]
          %v4552 = vsel %vm4523, %v4399, %v4551
          %4553 = vst [vmem:[%s1987 + $0x20] sm:$0xf] %v4552
          %v4554 = vld [vmem:[%s1987 + $0x24] sm:$0x1]
          %v4555 = vsel %vm4529, %v4400, %v4554
          %4556 = vst [vmem:[%s1987 + $0x24] sm:$0x1] %v4555
          %v4557 = vld [vmem:[%s1987 + $0x28] sm:$0xf]
          %v4558 = vsel %vm4523, %v4407, %v4557
          %4559 = vst [vmem:[%s1987 + $0x28] sm:$0xf] %v4558
          %v4560 = vld [vmem:[%s1987 + $0x2c] sm:$0x1]
          %v4561 = vsel %vm4529, %v4408, %v4560
          %4562 = vst [vmem:[%s1987 + $0x2c] sm:$0x1] %v4561
          %v4563 = vld [vmem:[%s1987 + $0x30] sm:$0xf]
          %v4564 = vsel %vm4523, %v4415, %v4563
          %4565 = vst [vmem:[%s1987 + $0x30] sm:$0xf] %v4564
          %v4566 = vld [vmem:[%s1987 + $0x34] sm:$0x1]
          %v4567 = vsel %vm4529, %v4416, %v4566
          %4568 = vst [vmem:[%s1987 + $0x34] sm:$0x1] %v4567
          %v4569 = vld [vmem:[%s1987 + $0x38] sm:$0xf]
          %v4570 = vsel %vm4523, %v4423, %v4569
          %4571 = vst [vmem:[%s1987 + $0x38] sm:$0xf] %v4570
          %v4572 = vld [vmem:[%s1987 + $0x3c] sm:$0x1]
          %v4573 = vsel %vm4529, %v4424, %v4572
          %4574 = vst [vmem:[%s1987 + $0x3c] sm:$0x1] %v4573
          %v4575 = vld [vmem:[%s1987 + $0x50] sm:$0xf]
          %v4576 = vsel %vm4523, %v4431, %v4575
          %4577 = vst [vmem:[%s1987 + $0x50] sm:$0xf] %v4576
          %v4578 = vld [vmem:[%s1987 + $0x54] sm:$0x1]
          %v4579 = vsel %vm4529, %v4432, %v4578
          %4580 = vst [vmem:[%s1987 + $0x54] sm:$0x1] %v4579
          %v4581 = vld [vmem:[%s1987 + $0x58] sm:$0xf]
          %v4582 = vsel %vm4523, %v4439, %v4581
          %4583 = vst [vmem:[%s1987 + $0x58] sm:$0xf] %v4582
          %v4584 = vld [vmem:[%s1987 + $0x5c] sm:$0x1]
          %v4585 = vsel %vm4529, %v4440, %v4584
          %4586 = vst [vmem:[%s1987 + $0x5c] sm:$0x1] %v4585
          %v4587 = vld [vmem:[%s1987 + $0x60] sm:$0xf]
          %v4588 = vsel %vm4523, %v4447, %v4587
          %4589 = vst [vmem:[%s1987 + $0x60] sm:$0xf] %v4588
          %v4590 = vld [vmem:[%s1987 + $0x64] sm:$0x1]
          %v4591 = vsel %vm4529, %v4448, %v4590
          %4592 = vst [vmem:[%s1987 + $0x64] sm:$0x1] %v4591
          %v4593 = vld [vmem:[%s1987 + $0x68] sm:$0xf]
          %v4594 = vsel %vm4523, %v4455, %v4593
          %4595 = vst [vmem:[%s1987 + $0x68] sm:$0xf] %v4594
          %v4596 = vld [vmem:[%s1987 + $0x6c] sm:$0x1]
          %v4597 = vsel %vm4529, %v4456, %v4596
          %4598 = vst [vmem:[%s1987 + $0x6c] sm:$0x1] %v4597
          %v4599 = vld [vmem:[%s1987 + $0x70] sm:$0xf]
          %v4600 = vsel %vm4523, %v4463, %v4599
          %4601 = vst [vmem:[%s1987 + $0x70] sm:$0xf] %v4600
          %v4602 = vld [vmem:[%s1987 + $0x74] sm:$0x1]
          %v4603 = vsel %vm4529, %v4464, %v4602
          %4604 = vst [vmem:[%s1987 + $0x74] sm:$0x1] %v4603
          %v4605 = vld [vmem:[%s1987 + $0x78] sm:$0xf]
          %v4606 = vsel %vm4523, %v4471, %v4605
          %4607 = vst [vmem:[%s1987 + $0x78] sm:$0xf] %v4606
          %v4608 = vld [vmem:[%s1987 + $0x7c] sm:$0x1]
          %v4609 = vsel %vm4529, %v4472, %v4608
          %4610 = vst [vmem:[%s1987 + $0x7c] sm:$0x1] %v4609
          %v4611 = vld [vmem:[%s1987 + $0x80] sm:$0xf]
          %v4612 = vsel %vm4523, %v4479, %v4611
          %4613 = vst [vmem:[%s1987 + $0x80] sm:$0xf] %v4612
          %v4614 = vld [vmem:[%s1987 + $0x84] sm:$0x1]
          %v4615 = vsel %vm4529, %v4480, %v4614
          %4616 = vst [vmem:[%s1987 + $0x84] sm:$0x1] %v4615
          %v4617 = vld [vmem:[%s1987 + $0x88] sm:$0xf]
          %v4618 = vsel %vm4523, %v4487, %v4617
          %4619 = vst [vmem:[%s1987 + $0x88] sm:$0xf] %v4618
          %v4620 = vld [vmem:[%s1987 + $0x8c] sm:$0x1]
          %v4621 = vsel %vm4529, %v4488, %v4620
          %4622 = vst [vmem:[%s1987 + $0x8c] sm:$0x1] %v4621
        $region72: #{tpu_custom_call.1} parent=43 // pred_fallthru
          _
        %p4623 = scmp.eq.s32.totalorder %s30, 4
        // Predicated region
        $region73: #{tpu_custom_call.1} parent=43 // pred_check
          %p4624 = pneg %p4623
        $region74: #{tpu_custom_call.1} parent=43 // pred_check_branch
          %4626 = sbr.rel (%p4624) target = $region76
        $region75: #{tpu_custom_call.1} parent=43 // pred_region
          %v4627 = vlaneseq
          %v4628 = vand.u32 %v4627, 127
          %vm4629 = vcmp.ge.s32.totalorder %v4628, 4
          %vm4630 = vcmp.lt.s32.totalorder %v4628, 8
          %vm4631 = vmand %vm4629, %vm4630
          %s4632 = sld [smem:[#allocation3]]
          %v4633 = vstv %s4632
          %v4634 = vmul.f32 %v4056, %v4633
          %v4635 = vmul.f32 %v4057, %v4633
          %v4636 = vmul.f32 %v4058, %v4633
          %v4637 = vmul.f32 %v4059, %v4633
          %v4638 = vmul.f32 %v4060, %v4633
          %v4639 = vmul.f32 %v4061, %v4633
          %v4640 = vmul.f32 %v4062, %v4633
          %v4641 = vmul.f32 %v4063, %v4633
          %v4642 = vmul.f32 %v4064, %v4633
          %v4643 = vmul.f32 %v4065, %v4633
          %v4644 = vmul.f32 %v4066, %v4633
          %v4645 = vmul.f32 %v4067, %v4633
          %v4646 = vmul.f32 %v4068, %v4633
          %v4647 = vmul.f32 %v4069, %v4633
          %v4648 = vmul.f32 %v4070, %v4633
          %v4649 = vmul.f32 %v4071, %v4633
          %v4650 = vmax.f32 %v4634, 0.0
          %v4651 = vmax.f32 %v4635, 0.0
          %v4652 = vmax.f32 %v4636, 0.0
          %v4653 = vmax.f32 %v4637, 0.0
          %v4654 = vmax.f32 %v4638, 0.0
          %v4655 = vmax.f32 %v4639, 0.0
          %v4656 = vmax.f32 %v4640, 0.0
          %v4657 = vmax.f32 %v4641, 0.0
          %v4658 = vmax.f32 %v4642, 0.0
          %v4659 = vmax.f32 %v4643, 0.0
          %v4660 = vmax.f32 %v4644, 0.0
          %v4661 = vmax.f32 %v4645, 0.0
          %v4662 = vmax.f32 %v4646, 0.0
          %v4663 = vmax.f32 %v4647, 0.0
          %v4664 = vmax.f32 %v4648, 0.0
          %v4665 = vmax.f32 %v4649, 0.0
          %v4666 = vsel %vm4631, %v4650, %v4056
          %v4667 = vsel %vm4631, %v4651, %v4057
          %v4668 = vsel %vm4631, %v4652, %v4058
          %v4669 = vsel %vm4631, %v4653, %v4059
          %v4670 = vsel %vm4631, %v4654, %v4060
          %v4671 = vsel %vm4631, %v4655, %v4061
          %v4672 = vsel %vm4631, %v4656, %v4062
          %v4673 = vsel %vm4631, %v4657, %v4063
          %v4674 = vsel %vm4631, %v4658, %v4064
          %v4675 = vsel %vm4631, %v4659, %v4065
          %v4676 = vsel %vm4631, %v4660, %v4066
          %v4677 = vsel %vm4631, %v4661, %v4067
          %v4678 = vsel %vm4631, %v4662, %v4068
          %v4679 = vsel %vm4631, %v4663, %v4069
          %v4680 = vsel %vm4631, %v4664, %v4070
          %v4681 = vsel %vm4631, %v4665, %v4071
          %4682 = vxpose.xlu0.b32.start [1/16] %v4666, 128
          %4683 = vxpose.xlu0.b32.cont [2/16] %v4667, 128
          %4684 = vxpose.xlu0.b32.cont [3/16] %v4668, 128
          %4685 = vxpose.xlu0.b32.cont [4/16] %v4669, 128
          %4686 = vxpose.xlu0.b32.cont [5/16] %v4670, 128
          %4687 = vxpose.xlu0.b32.cont [6/16] %v4671, 128
          %4688 = vxpose.xlu0.b32.cont [7/16] %v4672, 128
          %4689 = vxpose.xlu0.b32.cont [8/16] %v4673, 128
          %4690 = vxpose.xlu0.b32.cont [9/16] 0.0, 128
          %4691 = vxpose.xlu0.b32.cont [10/16] 0.0, 128
          %4692 = vxpose.xlu0.b32.cont [11/16] 0.0, 128
          %4693 = vxpose.xlu0.b32.cont [12/16] 0.0, 128
          %4694 = vxpose.xlu0.b32.cont [13/16] 0.0, 128
          %4695 = vxpose.xlu0.b32.cont [14/16] 0.0, 128
          %4696 = vxpose.xlu0.b32.cont [15/16] 0.0, 128
          %4697 = vxpose.xlu0.b32.end [16/16] 0.0, 128
          %v4698 = vpop.trf.xlu0
          %v4699 = vpop.trf.xlu0
          %v4700 = vpop.trf.xlu0
          %v4701 = vpop.trf.xlu0
          %v4702 = vpop.trf.xlu0
          %v4703 = vpop.trf.xlu0
          %v4704 = vpop.trf.xlu0
          %v4705 = vpop.trf.xlu0
          %v4706 = vpop.trf.xlu0
          %v4707 = vpop.trf.xlu0
          %v4708 = vpop.trf.xlu0
          %v4709 = vpop.trf.xlu0
          %v4710 = vpop.trf.xlu0
          %v4711 = vpop.trf.xlu0
          %v4712 = vpop.trf.xlu0
          %v4713 = vpop.trf.xlu0
          %vm4714 = vcmask 523264
          %4715 = vst.msk [vmem:[%s407] sm:$0xff] %vm4714, %v4698
          %vm4716 = vcmask 516096
          %4717 = vst.msk [vmem:[%s407 + $0x8] sm:$0x1] %vm4716, %v4699
          %4718 = vxpose.xlu0.b32.start [1/16] %v4674, 128
          %4719 = vxpose.xlu0.b32.cont [2/16] %v4675, 128
          %4720 = vxpose.xlu0.b32.cont [3/16] %v4676, 128
          %4721 = vxpose.xlu0.b32.cont [4/16] %v4677, 128
          %4722 = vxpose.xlu0.b32.cont [5/16] %v4678, 128
          %4723 = vxpose.xlu0.b32.cont [6/16] %v4679, 128
          %4724 = vxpose.xlu0.b32.cont [7/16] %v4680, 128
          %4725 = vxpose.xlu0.b32.cont [8/16] %v4681, 128
          %4726 = vxpose.xlu0.b32.cont [9/16] 0.0, 128
          %4727 = vxpose.xlu0.b32.cont [10/16] 0.0, 128
          %4728 = vxpose.xlu0.b32.cont [11/16] 0.0, 128
          %4729 = vxpose.xlu0.b32.cont [12/16] 0.0, 128
          %4730 = vxpose.xlu0.b32.cont [13/16] 0.0, 128
          %4731 = vxpose.xlu0.b32.cont [14/16] 0.0, 128
          %4732 = vxpose.xlu0.b32.cont [15/16] 0.0, 128
          %4733 = vxpose.xlu0.b32.end [16/16] 0.0, 128
          %v4734 = vpop.trf.xlu0
          %v4735 = vpop.trf.xlu0
          %v4736 = vpop.trf.xlu0
          %v4737 = vpop.trf.xlu0
          %v4738 = vpop.trf.xlu0
          %v4739 = vpop.trf.xlu0
          %v4740 = vpop.trf.xlu0
          %v4741 = vpop.trf.xlu0
          %v4742 = vpop.trf.xlu0
          %v4743 = vpop.trf.xlu0
          %v4744 = vpop.trf.xlu0
          %v4745 = vpop.trf.xlu0
          %v4746 = vpop.trf.xlu0
          %v4747 = vpop.trf.xlu0
          %v4748 = vpop.trf.xlu0
          %v4749 = vpop.trf.xlu0
          %s4750 = scalar_lea.vmem %s407, 16
          %4751 = vst.msk [vmem:[%s4750] sm:$0xff] %vm4714, %v4734
          %4752 = vst.msk [vmem:[%s4750 + $0x8] sm:$0x1] %vm4716, %v4735
        $region76: #{tpu_custom_call.1} parent=43 // pred_fallthru
          _
        %s4753 = smul.u32 2, %s29
        %p4754 = scmp.lt.s32.totalorder %s4753, 1
        %s4755 = scalar_select %p4754, %s4753, 1
        %s4756 = smul.addr %s4755, 2
        %s4757 = smul.addr %s4756, 8
        %s4758 = scalar_lea.vmem %s6, %s4757
        // Predicated region
        $region77: #{tpu_custom_call.1} parent=43 // pred_check
          %p4759 = pneg %p206
        $region78: #{tpu_custom_call.1} parent=43 // pred_check_branch
          %4761 = sbr.rel (%p4759) target = $region80
        $region79: #{tpu_custom_call.1} parent=43 // pred_region
          %s4762 = smul.u32 2, %s29
        $region80: #{tpu_custom_call.1} parent=43 // pred_fallthru
          _
        // Predicated region
        $region81: #{tpu_custom_call.1} parent=43 // pred_check
          %p4763 = pneg %p206
        $region82: #{tpu_custom_call.1} parent=43 // pred_check_branch
          %4765 = sbr.rel (%p4763) target = $region84
        $region83: #{tpu_custom_call.1} parent=43 // pred_region
          %s4766 = smul.u32 2, %s29
          %p4767 = scmp.lt.s32.totalorder %s4766, 1
          %s4768 = scalar_select %p4767, %s4766, 1
          %s4769 = smul.addr %s4768, 2
          %s4770 = smul.addr %s4769, 8
          %s4771 = scalar_lea.vmem %s6, %s4770
        $region84: #{tpu_custom_call.1} parent=43 // pred_fallthru
          _
      $region44: #{tpu_custom_call.1} parent=5 // pred_fallthru
        _
      %p4772 = scmp.le.s32.totalorder 2, %s20
      // Predicated region
      $region85: #{tpu_custom_call.1} parent=5 // pred_check
        %p4773 = pneg %p4772
      $region86: #{tpu_custom_call.1} parent=5 // pred_check_branch
        %4775 = sbr.rel (%p4773) target = $region88
      $region87: #{tpu_custom_call.1} parent=5 // pred_region
        %s4776 = ssub.s32 %s20, 2
      $region88: #{tpu_custom_call.1} parent=5 // pred_fallthru
        _
    $region6: #{tpu_custom_call.1} parent=1 // loop_footer
      %s24 = sadd.s32 1, %s20
    $region7: #{tpu_custom_call.1} parent=1 // loop_footer_branch
      %19 = sbr.rel target = $region3
    $region8: #{tpu_custom_call.1} parent=1 // loop_exit
      _
    %4777 = vsyncpa [#allocation5], 1
    %s4778 = scalar_lea.sflag [#allocation5], 1
    %4779 = vsyncpa %s4778, 1
    %4780 = vsyncpa [#allocation7], 1
    %s4781 = scalar_lea.sflag [#allocation7], 1
    %4782 = vsyncpa %s4781, 1
    %4783 = vsyncpa [#allocation10], 1
    %s4784 = scalar_lea.sflag [#allocation10], 1
    %4785 = vsyncpa %s4784, 1

</llo_original>
